<compile_context>
chip_gen: v7x
topology: tpu7x:2x2x1
jax: 0.10.0
libtpu: 0.0.40
codegen_flags: <defaults>
</compile_context>

<pallas_src>
import jax
import jax.numpy as jnp
import numpy as np
from jax import lax
from jax.experimental import pallas as pl
from jax.experimental.pallas import tpu as pltpu

K = 3            # conv kernel size; padding = K // 2 = 1 ("SAME")
PAD = K // 2


def _zero_border(scr, H, W):
    """Zero only the halo border (and sublane-alignment columns) of a
    (H+2, Wp, C) padded scratch.  The interior [1:H+1, 1:W+1, :] is fully
    rewritten every grid step, so it never needs clearing."""
    Wp, C = scr.shape[1], scr.shape[2]
    scr[0:1, :, :] = jnp.zeros((1, Wp, C), scr.dtype)            # top row
    scr[H + 1:H + 2, :, :] = jnp.zeros((1, Wp, C), scr.dtype)    # bottom row
    scr[1:H + 1, 0:1, :] = jnp.zeros((H, 1, C), scr.dtype)       # left col
    scr[1:H + 1, W + 1:Wp, :] = jnp.zeros((H, Wp - W - 1, C), scr.dtype)


def _conv3x3(padded, w_rows, H, W):
    """3x3 SAME conv as 3 fused MXU matmuls (one per kernel row).

    padded: (H+2, Wp, Cin) bf16 value with a zero halo border.
    w_rows: (3, 3*Cin, Cout) bf16 value; rows ordered (kx, cin) within a row.
    Returns (H*W, Cout) float32.
    """
    Cin = padded.shape[-1]
    Cout = w_rows.shape[-1]
    acc = jnp.zeros((H * W, Cout), jnp.float32)
    for ky in range(K):
        # im2col row-slab: kx-shifted windows concatenated on the lane axis.
        slab = jnp.concatenate(
            [padded[ky:ky + H, kx:kx + W, :] for kx in range(K)], axis=-1)
        acc = acc + jnp.dot(slab.reshape(H * W, K * Cin), w_rows[ky],
                            preferred_element_type=jnp.float32)
    return acc


def convgru_kernel(hx_ref, c_ref, wzrq_ref, wqh_ref, b_ref, out_ref,
                   hxpad_scr, rhpad_scr):
    H, W, Cd = out_ref.shape[1], out_ref.shape[2], out_ref.shape[3]

    # Halo borders must be zero before the shifted reads below.
    _zero_border(hxpad_scr, H, W)
    _zero_border(rhpad_scr, H, W)

    hx = hx_ref[0]                                            # (H, W, Cd+Cx) bf16
    hxpad_scr[1:H + 1, 1:W + 1, :] = hx
    h = hx[:, :, :Cd].astype(jnp.float32).reshape(H * W, Cd)

    c = c_ref[0].astype(jnp.float32).reshape(H * W, 3 * Cd)   # [cz | cr | cq]
    bias = b_ref[...].astype(jnp.float32)                     # (1, 3*Cd)

    # Fused pre-activations for [z | r | q(x-part only)]: 3*Cd output lanes.
    pre = _conv3x3(hxpad_scr[...], wzrq_ref[...], H, W) + bias + c

    z = jax.nn.sigmoid(pre[:, :Cd])
    r = jax.nn.sigmoid(pre[:, Cd:2 * Cd])

    # q gate: the h-part of its conv runs on (r * h).
    rh = (r * h).astype(rhpad_scr.dtype)
    rhpad_scr[1:H + 1, 1:W + 1, :] = rh.reshape(H, W, Cd)
    q_pre = pre[:, 2 * Cd:] + _conv3x3(rhpad_scr[...], wqh_ref[...], H, W)
    q = jnp.tanh(q_pre)

    h_new = (1.0 - z) * h + z * q                             # (H*W, Cd) f32
    # NOTE: with hidden_dim >= 128 (real RAFT) this store is lane-dense; at
    # Cd=32 densifying would need an in-kernel relayout costing more than the
    # masked stores it removes.
    out_ref[0] = h_new.reshape(H, W, Cd).astype(out_ref.dtype)


def convgru_pallas(h_nchw, cz_nchw, cr_nchw, cq_nchw, x_list_nchw, params,
                   compute_dtype=jnp.bfloat16):
    """PyTorch-style NCHW in / NCHW out. bf16 MXU matmuls, f32 accumulation."""
    N, Cd, H, W = h_nchw.shape
    to_nhwc = lambda t: jnp.transpose(t, (0, 2, 3, 1))

    # One fused channel-concat per activation group; no spatial pre-padding
    # (the SAME-padding halo is built in VMEM inside the kernel).
    hx = jnp.concatenate([to_nhwc(h_nchw)] + [to_nhwc(t) for t in x_list_nchw],
                         axis=-1).astype(compute_dtype)        # (N,H,W,Cd+Cx)
    c = jnp.concatenate([to_nhwc(cz_nchw), to_nhwc(cr_nchw), to_nhwc(cq_nchw)],
                        axis=-1).astype(compute_dtype)         # (N,H,W,3*Cd)
    C = hx.shape[-1]

    # Weights: OIHW -> HWIO, gate-fused along Cout = [Wz | Wr | Wq(x-only)].
    hwio = lambda w: jnp.transpose(w, (2, 3, 1, 0))            # (3,3,Cin,Cout)
    wz, wr, wq = hwio(params["wz"]), hwio(params["wr"]), hwio(params["wq"])
    wq_xonly = jnp.concatenate(
        [jnp.zeros((K, K, Cd, Cd), wq.dtype), wq[:, :, Cd:, :]], axis=2)
    wzrq = jnp.concatenate([wz, wr, wq_xonly], axis=-1)        # (3,3,C,3*Cd)
    wzrq = wzrq.reshape(K, K * C, 3 * Cd).astype(compute_dtype)   # per-row slabs
    wqh = wq[:, :, :Cd, :].reshape(K, K * Cd, Cd).astype(compute_dtype)
    bias = jnp.concatenate(
        [params["bz"], params["br"], params["bq"]]
    ).reshape(1, 3 * Cd).astype(jnp.float32)

    Wp = ((W + 2 * PAD + 7) // 8) * 8      # sublane-aligned padded width

    # TODO(synk): for realistic RAFT resolutions add an H-row grid axis with a
    # 1-row halo so per-step blocks fit v7x's 64 MiB VMEM and overlap DMA.
    out_nhwc = pl.pallas_call(
        convgru_kernel,
        out_shape=jax.ShapeDtypeStruct((N, H, W, Cd), jnp.float32),
        grid_spec=pltpu.PrefetchScalarGridSpec(
            num_scalar_prefetch=0,
            grid=(N,),
            in_specs=[
                pl.BlockSpec((1, H, W, C), lambda n: (n, 0, 0, 0)),       # hx
                pl.BlockSpec((1, H, W, 3 * Cd), lambda n: (n, 0, 0, 0)),  # cz|cr|cq
                pl.BlockSpec((K, K * C, 3 * Cd), lambda n: (0, 0, 0)),    # W zrq
                pl.BlockSpec((K, K * Cd, Cd), lambda n: (0, 0, 0)),       # W q_h
                pl.BlockSpec((1, 3 * Cd), lambda n: (0, 0)),              # bias
            ],
            out_specs=pl.BlockSpec((1, H, W, Cd), lambda n: (n, 0, 0, 0)),
            scratch_shapes=[
                pltpu.VMEM((H + 2 * PAD, Wp, C), compute_dtype),   # padded [h,x]
                pltpu.VMEM((H + 2 * PAD, Wp, Cd), compute_dtype),  # padded r*h
            ],
        ),
        compiler_params=pltpu.CompilerParams(
            # Batch axis shards across TensorCores on v7x; no-op on v5e/v6e.
            dimension_semantics=("parallel",),
            # Above the 16/32 MiB scoped defaults, below v7x's 64 MiB physical.
            vmem_limit_bytes=48 * 1024 * 1024),
    )(hx, c, wzrq, wqh, bias)

    return jnp.transpose(out_nhwc, (0, 3, 1, 2))


def convgru_reference(h_nchw, cz_nchw, cr_nchw, cq_nchw, x_list_nchw, params):
    """Pure-JAX f32 reference matching the PyTorch forward (NCHW semantics)."""
    def conv(inp_nchw, w, b):
        out = lax.conv_general_dilated(
            inp_nchw, w, window_strides=(1, 1), padding="SAME",
            dimension_numbers=("NCHW", "OIHW", "NCHW"),
            precision=lax.Precision.HIGHEST)
        return out + b.reshape(1, -1, 1, 1)

    x = jnp.concatenate(list(x_list_nchw), axis=1)
    hx = jnp.concatenate([h_nchw, x], axis=1)
    z = jax.nn.sigmoid(conv(hx, params["wz"], params["bz"]) + cz_nchw)
    r = jax.nn.sigmoid(conv(hx, params["wr"], params["br"]) + cr_nchw)
    q = jnp.tanh(conv(jnp.concatenate([r * h_nchw, x], axis=1),
                      params["wq"], params["bq"]) + cq_nchw)
    return (1.0 - z) * h_nchw + z * q


if __name__ == "__main__":
    # Small, module-consistent shapes.
    N, H, W = 2, 16, 16
    hidden_dim = 32
    x_channels = (16, 16)            # *x_list -> input_dim = 32 after concat
    input_dim = sum(x_channels)
    cin = hidden_dim + input_dim

    key = jax.random.PRNGKey(0)
    keys = jax.random.split(key, 16)

    # Quantize everything to the bf16 grid once, so the bf16 Pallas kernel and
    # the f32 reference see numerically identical inputs (the only remaining
    # in-kernel rounding is the bf16 cast of r*h feeding the q-gate conv).
    q16 = lambda t: t.astype(jnp.bfloat16).astype(jnp.float32)

    params = {
        "wz": q16(0.05 * jax.random.normal(keys[0], (hidden_dim, cin, K, K), jnp.float32)),
        "wr": q16(0.05 * jax.random.normal(keys[1], (hidden_dim, cin, K, K), jnp.float32)),
        "wq": q16(0.05 * jax.random.normal(keys[2], (hidden_dim, cin, K, K), jnp.float32)),
        "bz": q16(0.05 * jax.random.normal(keys[3], (hidden_dim,), jnp.float32)),
        "br": q16(0.05 * jax.random.normal(keys[4], (hidden_dim,), jnp.float32)),
        "bq": q16(0.05 * jax.random.normal(keys[5], (hidden_dim,), jnp.float32)),
    }

    h0 = q16(jax.random.normal(keys[6], (N, hidden_dim, H, W), jnp.float32))
    cz = q16(jax.random.normal(keys[7], (N, hidden_dim, H, W), jnp.float32))
    cr = q16(jax.random.normal(keys[8], (N, hidden_dim, H, W), jnp.float32))
    cq = q16(jax.random.normal(keys[9], (N, hidden_dim, H, W), jnp.float32))
    x_list = [q16(jax.random.normal(keys[10 + i], (N, ch, H, W), jnp.float32))
              for i, ch in enumerate(x_channels)]

    out = jax.block_until_ready(convgru_pallas(h0, cz, cr, cq, x_list, params))
    ref = jax.block_until_ready(convgru_reference(h0, cz, cr, cq, x_list, params))

    # bf16 matmul inputs + f32 accumulation; tolerance covers the single
    # in-kernel bf16 round of (r*h).
    np.testing.assert_allclose(np.asarray(out), np.asarray(ref),
                               rtol=1e-2, atol=1e-2)
    print("KERNEL_OK")
</pallas_src>

<mosaic_0001>
module attributes {stable_mosaic.version = 11 : i64} {
  func.func @convgru_kernel(%arg0: i32, %arg1: memref<1x16x16x64xbf16, #tpu.memory_space<vmem>>, %arg2: memref<1x16x16x96xbf16, #tpu.memory_space<vmem>>, %arg3: memref<3x192x96xbf16, #tpu.memory_space<vmem>>, %arg4: memref<3x96x32xbf16, #tpu.memory_space<vmem>>, %arg5: memref<1x96xf32, #tpu.memory_space<vmem>>, %arg6: memref<1x16x16x32xf32, #tpu.memory_space<vmem>>, %arg7: memref<18x24x64xbf16, #tpu.memory_space<vmem>>, %arg8: memref<18x24x32xbf16, #tpu.memory_space<vmem>>) attributes {dimension_semantics = [#tpu.dimension_semantics<parallel>], iteration_bounds = array<i64: 2>, scalar_prefetch = 0 : i64, scratch_operands = 2 : i64, tpu.core_type = #tpu.core_type<tc>, window_params = [{transform_indices = @transform_0, window_bounds = array<i64: 1, 16, 16, 64>}, {transform_indices = @transform_1, window_bounds = array<i64: 1, 16, 16, 96>}, {pipeline_mode = #tpu.pipeline_mode<synchronous>, transform_indices = @transform_2, window_bounds = array<i64: 3, 192, 96>}, {pipeline_mode = #tpu.pipeline_mode<synchronous>, transform_indices = @transform_3, window_bounds = array<i64: 3, 96, 32>}, {pipeline_mode = #tpu.pipeline_mode<synchronous>, transform_indices = @transform_4, window_bounds = array<i64: 1, 96>}, {transform_indices = @transform_5, window_bounds = array<i64: 1, 16, 16, 32>}]} {
    %cst = arith.constant 0.000000e+00 : bf16
    %0 = vector.broadcast %cst : bf16 to vector<1x24x64xbf16>
    %c0 = arith.constant 0 : index
    %c0_0 = arith.constant 0 : index
    %c0_1 = arith.constant 0 : index
    %1 = vector.load %arg7[%c0, %c0_0, %c0_1] : memref<18x24x64xbf16, #tpu.memory_space<vmem>>, vector<1x24x64xbf16>
    tpu.vector_store %arg7[%c0, %c0_0, %c0_1], %0 {strides = array<i32>} : memref<18x24x64xbf16, #tpu.memory_space<vmem>>, vector<1x24x64xbf16>,
    %cst_2 = arith.constant 0.000000e+00 : bf16
    %2 = vector.broadcast %cst_2 : bf16 to vector<1x24x64xbf16>
    %c17 = arith.constant 17 : index
    %c0_3 = arith.constant 0 : index
    %c0_4 = arith.constant 0 : index
    %3 = vector.load %arg7[%c17, %c0_3, %c0_4] : memref<18x24x64xbf16, #tpu.memory_space<vmem>>, vector<1x24x64xbf16>
    tpu.vector_store %arg7[%c17, %c0_3, %c0_4], %2 {strides = array<i32>} : memref<18x24x64xbf16, #tpu.memory_space<vmem>>, vector<1x24x64xbf16>,
    %cst_5 = arith.constant 0.000000e+00 : bf16
    %4 = vector.broadcast %cst_5 : bf16 to vector<16x1x64xbf16>
    %c1 = arith.constant 1 : index
    %c0_6 = arith.constant 0 : index
    %c0_7 = arith.constant 0 : index
    %5 = vector.load %arg7[%c1, %c0_6, %c0_7] : memref<18x24x64xbf16, #tpu.memory_space<vmem>>, vector<16x1x64xbf16>
    tpu.vector_store %arg7[%c1, %c0_6, %c0_7], %4 {strides = array<i32>} : memref<18x24x64xbf16, #tpu.memory_space<vmem>>, vector<16x1x64xbf16>,
    %cst_8 = arith.constant 0.000000e+00 : bf16
    %6 = vector.broadcast %cst_8 : bf16 to vector<16x7x64xbf16>
    %c1_9 = arith.constant 1 : index
    %c17_10 = arith.constant 17 : index
    %c0_11 = arith.constant 0 : index
    %7 = vector.load %arg7[%c1_9, %c17_10, %c0_11] : memref<18x24x64xbf16, #tpu.memory_space<vmem>>, vector<16x7x64xbf16>
    tpu.vector_store %arg7[%c1_9, %c17_10, %c0_11], %6 {strides = array<i32>} : memref<18x24x64xbf16, #tpu.memory_space<vmem>>, vector<16x7x64xbf16>,
    %cst_12 = arith.constant 0.000000e+00 : bf16
    %8 = vector.broadcast %cst_12 : bf16 to vector<1x24x32xbf16>
    %c0_13 = arith.constant 0 : index
    %c0_14 = arith.constant 0 : index
    %c0_15 = arith.constant 0 : index
    %9 = vector.load %arg8[%c0_13, %c0_14, %c0_15] : memref<18x24x32xbf16, #tpu.memory_space<vmem>>, vector<1x24x32xbf16>
    tpu.vector_store %arg8[%c0_13, %c0_14, %c0_15], %8 {strides = array<i32>} : memref<18x24x32xbf16, #tpu.memory_space<vmem>>, vector<1x24x32xbf16>,
    %cst_16 = arith.constant 0.000000e+00 : bf16
    %10 = vector.broadcast %cst_16 : bf16 to vector<1x24x32xbf16>
    %c17_17 = arith.constant 17 : index
    %c0_18 = arith.constant 0 : index
    %c0_19 = arith.constant 0 : index
    %11 = vector.load %arg8[%c17_17, %c0_18, %c0_19] : memref<18x24x32xbf16, #tpu.memory_space<vmem>>, vector<1x24x32xbf16>
    tpu.vector_store %arg8[%c17_17, %c0_18, %c0_19], %10 {strides = array<i32>} : memref<18x24x32xbf16, #tpu.memory_space<vmem>>, vector<1x24x32xbf16>,
    %cst_20 = arith.constant 0.000000e+00 : bf16
    %12 = vector.broadcast %cst_20 : bf16 to vector<16x1x32xbf16>
    %c1_21 = arith.constant 1 : index
    %c0_22 = arith.constant 0 : index
    %c0_23 = arith.constant 0 : index
    %13 = vector.load %arg8[%c1_21, %c0_22, %c0_23] : memref<18x24x32xbf16, #tpu.memory_space<vmem>>, vector<16x1x32xbf16>
    tpu.vector_store %arg8[%c1_21, %c0_22, %c0_23], %12 {strides = array<i32>} : memref<18x24x32xbf16, #tpu.memory_space<vmem>>, vector<16x1x32xbf16>,
    %cst_24 = arith.constant 0.000000e+00 : bf16
    %14 = vector.broadcast %cst_24 : bf16 to vector<16x7x32xbf16>
    %c1_25 = arith.constant 1 : index
    %c17_26 = arith.constant 17 : index
    %c0_27 = arith.constant 0 : index
    %15 = vector.load %arg8[%c1_25, %c17_26, %c0_27] : memref<18x24x32xbf16, #tpu.memory_space<vmem>>, vector<16x7x32xbf16>
    tpu.vector_store %arg8[%c1_25, %c17_26, %c0_27], %14 {strides = array<i32>} : memref<18x24x32xbf16, #tpu.memory_space<vmem>>, vector<16x7x32xbf16>,
    %c0_28 = arith.constant 0 : index
    %c0_29 = arith.constant 0 : index
    %c0_30 = arith.constant 0 : index
    %c0_31 = arith.constant 0 : index
    %16 = vector.load %arg1[%c0_28, %c0_29, %c0_30, %c0_31] : memref<1x16x16x64xbf16, #tpu.memory_space<vmem>>, vector<1x16x16x64xbf16>
    %17 = vector.shape_cast %16 : vector<1x16x16x64xbf16> to vector<16x16x64xbf16>
    %c1_32 = arith.constant 1 : index
    %c1_33 = arith.constant 1 : index
    %c0_34 = arith.constant 0 : index
    %18 = vector.load %arg7[%c1_32, %c1_33, %c0_34] : memref<18x24x64xbf16, #tpu.memory_space<vmem>>, vector<16x16x64xbf16>
    tpu.vector_store %arg7[%c1_32, %c1_33, %c0_34], %17 {strides = array<i32>} : memref<18x24x64xbf16, #tpu.memory_space<vmem>>, vector<16x16x64xbf16>,
    %19 = vector.extract_strided_slice %17 {offsets = [0, 0, 0], sizes = [16, 16, 32], strides = [1, 1, 1]} : vector<16x16x64xbf16> to vector<16x16x32xbf16>
    %20 = arith.extf %19 : vector<16x16x32xbf16> to vector<16x16x32xf32>
    %21 = vector.shape_cast %20 : vector<16x16x32xf32> to vector<256x32xf32>
    %c0_35 = arith.constant 0 : index
    %c0_36 = arith.constant 0 : index
    %c0_37 = arith.constant 0 : index
    %c0_38 = arith.constant 0 : index
    %22 = vector.load %arg2[%c0_35, %c0_36, %c0_37, %c0_38] : memref<1x16x16x96xbf16, #tpu.memory_space<vmem>>, vector<1x16x16x96xbf16>
    %23 = vector.shape_cast %22 : vector<1x16x16x96xbf16> to vector<16x16x96xbf16>
    %24 = arith.extf %23 : vector<16x16x96xbf16> to vector<16x16x96xf32>
    %25 = vector.shape_cast %24 : vector<16x16x96xf32> to vector<256x96xf32>
    %c0_39 = arith.constant 0 : index
    %c0_40 = arith.constant 0 : index
    %26 = vector.load %arg5[%c0_39, %c0_40] : memref<1x96xf32, #tpu.memory_space<vmem>>, vector<1x96xf32>
    %c0_41 = arith.constant 0 : index
    %c0_42 = arith.constant 0 : index
    %c0_43 = arith.constant 0 : index
    %27 = vector.load %arg7[%c0_41, %c0_42, %c0_43] : memref<18x24x64xbf16, #tpu.memory_space<vmem>>, vector<18x24x64xbf16>
    %c0_44 = arith.constant 0 : index
    %c0_45 = arith.constant 0 : index
    %c0_46 = arith.constant 0 : index
    %28 = vector.load %arg3[%c0_44, %c0_45, %c0_46] : memref<3x192x96xbf16, #tpu.memory_space<vmem>>, vector<3x192x96xbf16>
    %cst_47 = arith.constant 0.000000e+00 : f32
    %29 = vector.broadcast %cst_47 : f32 to vector<256x96xf32>
    %30 = vector.extract_strided_slice %27 {offsets = [0, 0, 0], sizes = [16, 16, 64], strides = [1, 1, 1]} : vector<18x24x64xbf16> to vector<16x16x64xbf16>
    %31 = vector.extract_strided_slice %27 {offsets = [0, 1, 0], sizes = [16, 16, 64], strides = [1, 1, 1]} : vector<18x24x64xbf16> to vector<16x16x64xbf16>
    %32 = vector.extract_strided_slice %27 {offsets = [0, 2, 0], sizes = [16, 16, 64], strides = [1, 1, 1]} : vector<18x24x64xbf16> to vector<16x16x64xbf16>
    %33 = tpu.concatenate %30, %31, %32 in 2 : vector<16x16x64xbf16>, vector<16x16x64xbf16>, vector<16x16x64xbf16> -> vector<16x16x192xbf16>
    %34 = vector.shape_cast %33 : vector<16x16x192xbf16> to vector<256x192xbf16>
    %35 = vector.extract_strided_slice %28 {offsets = [0, 0, 0], sizes = [1, 192, 96], strides = [1, 1, 1]} : vector<3x192x96xbf16> to vector<1x192x96xbf16>
    %36 = vector.shape_cast %35 : vector<1x192x96xbf16> to vector<192x96xbf16>
    %cst_48 = arith.constant dense<0.000000e+00> : vector<256x96xf32>
    %37 = tpu.matmul %34, %36, %cst_48 {dimension_numbers = #tpu.dot_dimension_numbers<[1], [0], [0], [1], [0, 0, 1, 1], [], []>} : vector<256x192xbf16>, vector<192x96xbf16>, vector<256x96xf32> -> vector<256x96xf32>
    %38 = arith.addf %29, %37 : vector<256x96xf32>
    %39 = vector.extract_strided_slice %27 {offsets = [1, 0, 0], sizes = [16, 16, 64], strides = [1, 1, 1]} : vector<18x24x64xbf16> to vector<16x16x64xbf16>
    %40 = vector.extract_strided_slice %27 {offsets = [1, 1, 0], sizes = [16, 16, 64], strides = [1, 1, 1]} : vector<18x24x64xbf16> to vector<16x16x64xbf16>
    %41 = vector.extract_strided_slice %27 {offsets = [1, 2, 0], sizes = [16, 16, 64], strides = [1, 1, 1]} : vector<18x24x64xbf16> to vector<16x16x64xbf16>
    %42 = tpu.concatenate %39, %40, %41 in 2 : vector<16x16x64xbf16>, vector<16x16x64xbf16>, vector<16x16x64xbf16> -> vector<16x16x192xbf16>
    %43 = vector.shape_cast %42 : vector<16x16x192xbf16> to vector<256x192xbf16>
    %44 = vector.extract_strided_slice %28 {offsets = [1, 0, 0], sizes = [1, 192, 96], strides = [1, 1, 1]} : vector<3x192x96xbf16> to vector<1x192x96xbf16>
    %45 = vector.shape_cast %44 : vector<1x192x96xbf16> to vector<192x96xbf16>
    %cst_49 = arith.constant dense<0.000000e+00> : vector<256x96xf32>
    %46 = tpu.matmul %43, %45, %cst_49 {dimension_numbers = #tpu.dot_dimension_numbers<[1], [0], [0], [1], [0, 0, 1, 1], [], []>} : vector<256x192xbf16>, vector<192x96xbf16>, vector<256x96xf32> -> vector<256x96xf32>
    %47 = arith.addf %38, %46 : vector<256x96xf32>
    %48 = vector.extract_strided_slice %27 {offsets = [2, 0, 0], sizes = [16, 16, 64], strides = [1, 1, 1]} : vector<18x24x64xbf16> to vector<16x16x64xbf16>
    %49 = vector.extract_strided_slice %27 {offsets = [2, 1, 0], sizes = [16, 16, 64], strides = [1, 1, 1]} : vector<18x24x64xbf16> to vector<16x16x64xbf16>
    %50 = vector.extract_strided_slice %27 {offsets = [2, 2, 0], sizes = [16, 16, 64], strides = [1, 1, 1]} : vector<18x24x64xbf16> to vector<16x16x64xbf16>
    %51 = tpu.concatenate %48, %49, %50 in 2 : vector<16x16x64xbf16>, vector<16x16x64xbf16>, vector<16x16x64xbf16> -> vector<16x16x192xbf16>
    %52 = vector.shape_cast %51 : vector<16x16x192xbf16> to vector<256x192xbf16>
    %53 = vector.extract_strided_slice %28 {offsets = [2, 0, 0], sizes = [1, 192, 96], strides = [1, 1, 1]} : vector<3x192x96xbf16> to vector<1x192x96xbf16>
    %54 = vector.shape_cast %53 : vector<1x192x96xbf16> to vector<192x96xbf16>
    %cst_50 = arith.constant dense<0.000000e+00> : vector<256x96xf32>
    %55 = tpu.matmul %52, %54, %cst_50 {dimension_numbers = #tpu.dot_dimension_numbers<[1], [0], [0], [1], [0, 0, 1, 1], [], []>} : vector<256x192xbf16>, vector<192x96xbf16>, vector<256x96xf32> -> vector<256x96xf32>
    %56 = arith.addf %47, %55 : vector<256x96xf32>
    %57 = vector.broadcast %26 : vector<1x96xf32> to vector<256x96xf32>
    %58 = arith.addf %56, %57 : vector<256x96xf32>
    %59 = arith.addf %58, %25 : vector<256x96xf32>
    %60 = vector.extract_strided_slice %59 {offsets = [0, 0], sizes = [256, 32], strides = [1, 1]} : vector<256x96xf32> to vector<256x32xf32>
    %61 = arith.negf %60 : vector<256x32xf32>
    %62 = math.exp %61 : vector<256x32xf32>
    %cst_51 = arith.constant 1.000000e+00 : f32
    %63 = vector.broadcast %cst_51 : f32 to vector<256x32xf32>
    %64 = arith.addf %63, %62 : vector<256x32xf32>
    %65 = arith.divf %63, %64 : vector<256x32xf32>
    %66 = vector.extract_strided_slice %59 {offsets = [0, 32], sizes = [256, 32], strides = [1, 1]} : vector<256x96xf32> to vector<256x32xf32>
    %67 = arith.negf %66 : vector<256x32xf32>
    %68 = math.exp %67 : vector<256x32xf32>
    %cst_52 = arith.constant 1.000000e+00 : f32
    %69 = vector.broadcast %cst_52 : f32 to vector<256x32xf32>
    %70 = arith.addf %69, %68 : vector<256x32xf32>
    %71 = arith.divf %69, %70 : vector<256x32xf32>
    %72 = arith.mulf %71, %21 : vector<256x32xf32>
    %73 = arith.truncf %72 : vector<256x32xf32> to vector<256x32xbf16>
    %74 = vector.shape_cast %73 : vector<256x32xbf16> to vector<16x16x32xbf16>
    %c1_53 = arith.constant 1 : index
    %c1_54 = arith.constant 1 : index
    %c0_55 = arith.constant 0 : index
    %75 = vector.load %arg8[%c1_53, %c1_54, %c0_55] : memref<18x24x32xbf16, #tpu.memory_space<vmem>>, vector<16x16x32xbf16>
    tpu.vector_store %arg8[%c1_53, %c1_54, %c0_55], %74 {strides = array<i32>} : memref<18x24x32xbf16, #tpu.memory_space<vmem>>, vector<16x16x32xbf16>,
    %76 = vector.extract_strided_slice %59 {offsets = [0, 64], sizes = [256, 32], strides = [1, 1]} : vector<256x96xf32> to vector<256x32xf32>
    %c0_56 = arith.constant 0 : index
    %c0_57 = arith.constant 0 : index
    %c0_58 = arith.constant 0 : index
    %77 = vector.load %arg8[%c0_56, %c0_57, %c0_58] : memref<18x24x32xbf16, #tpu.memory_space<vmem>>, vector<18x24x32xbf16>
    %c0_59 = arith.constant 0 : index
    %c0_60 = arith.constant 0 : index
    %c0_61 = arith.constant 0 : index
    %78 = vector.load %arg4[%c0_59, %c0_60, %c0_61] : memref<3x96x32xbf16, #tpu.memory_space<vmem>>, vector<3x96x32xbf16>
    %cst_62 = arith.constant 0.000000e+00 : f32
    %79 = vector.broadcast %cst_62 : f32 to vector<256x32xf32>
    %80 = vector.extract_strided_slice %77 {offsets = [0, 0, 0], sizes = [16, 16, 32], strides = [1, 1, 1]} : vector<18x24x32xbf16> to vector<16x16x32xbf16>
    %81 = vector.extract_strided_slice %77 {offsets = [0, 1, 0], sizes = [16, 16, 32], strides = [1, 1, 1]} : vector<18x24x32xbf16> to vector<16x16x32xbf16>
    %82 = vector.extract_strided_slice %77 {offsets = [0, 2, 0], sizes = [16, 16, 32], strides = [1, 1, 1]} : vector<18x24x32xbf16> to vector<16x16x32xbf16>
    %83 = tpu.concatenate %80, %81, %82 in 2 : vector<16x16x32xbf16>, vector<16x16x32xbf16>, vector<16x16x32xbf16> -> vector<16x16x96xbf16>
    %84 = vector.shape_cast %83 : vector<16x16x96xbf16> to vector<256x96xbf16>
    %85 = vector.extract_strided_slice %78 {offsets = [0, 0, 0], sizes = [1, 96, 32], strides = [1, 1, 1]} : vector<3x96x32xbf16> to vector<1x96x32xbf16>
    %86 = vector.shape_cast %85 : vector<1x96x32xbf16> to vector<96x32xbf16>
    %cst_63 = arith.constant dense<0.000000e+00> : vector<256x32xf32>
    %87 = tpu.matmul %84, %86, %cst_63 {dimension_numbers = #tpu.dot_dimension_numbers<[1], [0], [0], [1], [0, 0, 1, 1], [], []>} : vector<256x96xbf16>, vector<96x32xbf16>, vector<256x32xf32> -> vector<256x32xf32>
    %88 = arith.addf %79, %87 : vector<256x32xf32>
    %89 = vector.extract_strided_slice %77 {offsets = [1, 0, 0], sizes = [16, 16, 32], strides = [1, 1, 1]} : vector<18x24x32xbf16> to vector<16x16x32xbf16>
    %90 = vector.extract_strided_slice %77 {offsets = [1, 1, 0], sizes = [16, 16, 32], strides = [1, 1, 1]} : vector<18x24x32xbf16> to vector<16x16x32xbf16>
    %91 = vector.extract_strided_slice %77 {offsets = [1, 2, 0], sizes = [16, 16, 32], strides = [1, 1, 1]} : vector<18x24x32xbf16> to vector<16x16x32xbf16>
    %92 = tpu.concatenate %89, %90, %91 in 2 : vector<16x16x32xbf16>, vector<16x16x32xbf16>, vector<16x16x32xbf16> -> vector<16x16x96xbf16>
    %93 = vector.shape_cast %92 : vector<16x16x96xbf16> to vector<256x96xbf16>
    %94 = vector.extract_strided_slice %78 {offsets = [1, 0, 0], sizes = [1, 96, 32], strides = [1, 1, 1]} : vector<3x96x32xbf16> to vector<1x96x32xbf16>
    %95 = vector.shape_cast %94 : vector<1x96x32xbf16> to vector<96x32xbf16>
    %cst_64 = arith.constant dense<0.000000e+00> : vector<256x32xf32>
    %96 = tpu.matmul %93, %95, %cst_64 {dimension_numbers = #tpu.dot_dimension_numbers<[1], [0], [0], [1], [0, 0, 1, 1], [], []>} : vector<256x96xbf16>, vector<96x32xbf16>, vector<256x32xf32> -> vector<256x32xf32>
    %97 = arith.addf %88, %96 : vector<256x32xf32>
    %98 = vector.extract_strided_slice %77 {offsets = [2, 0, 0], sizes = [16, 16, 32], strides = [1, 1, 1]} : vector<18x24x32xbf16> to vector<16x16x32xbf16>
    %99 = vector.extract_strided_slice %77 {offsets = [2, 1, 0], sizes = [16, 16, 32], strides = [1, 1, 1]} : vector<18x24x32xbf16> to vector<16x16x32xbf16>
    %100 = vector.extract_strided_slice %77 {offsets = [2, 2, 0], sizes = [16, 16, 32], strides = [1, 1, 1]} : vector<18x24x32xbf16> to vector<16x16x32xbf16>
    %101 = tpu.concatenate %98, %99, %100 in 2 : vector<16x16x32xbf16>, vector<16x16x32xbf16>, vector<16x16x32xbf16> -> vector<16x16x96xbf16>
    %102 = vector.shape_cast %101 : vector<16x16x96xbf16> to vector<256x96xbf16>
    %103 = vector.extract_strided_slice %78 {offsets = [2, 0, 0], sizes = [1, 96, 32], strides = [1, 1, 1]} : vector<3x96x32xbf16> to vector<1x96x32xbf16>
    %104 = vector.shape_cast %103 : vector<1x96x32xbf16> to vector<96x32xbf16>
    %cst_65 = arith.constant dense<0.000000e+00> : vector<256x32xf32>
    %105 = tpu.matmul %102, %104, %cst_65 {dimension_numbers = #tpu.dot_dimension_numbers<[1], [0], [0], [1], [0, 0, 1, 1], [], []>} : vector<256x96xbf16>, vector<96x32xbf16>, vector<256x32xf32> -> vector<256x32xf32>
    %106 = arith.addf %97, %105 : vector<256x32xf32>
    %107 = arith.addf %76, %106 : vector<256x32xf32>
    %108 = math.tanh %107 : vector<256x32xf32>
    %cst_66 = arith.constant 1.000000e+00 : f32
    %109 = vector.broadcast %cst_66 : f32 to vector<256x32xf32>
    %110 = arith.subf %109, %65 : vector<256x32xf32>
    %111 = arith.mulf %110, %21 : vector<256x32xf32>
    %112 = arith.mulf %65, %108 : vector<256x32xf32>
    %113 = arith.addf %111, %112 : vector<256x32xf32>
    %114 = vector.shape_cast %113 : vector<256x32xf32> to vector<16x16x32xf32>
    %c0_67 = arith.constant 0 : index
    %c0_68 = arith.constant 0 : index
    %c0_69 = arith.constant 0 : index
    %c0_70 = arith.constant 0 : index
    %115 = vector.load %arg6[%c0_67, %c0_68, %c0_69, %c0_70] : memref<1x16x16x32xf32, #tpu.memory_space<vmem>>, vector<1x16x16x32xf32>
    %116 = vector.shape_cast %115 : vector<1x16x16x32xf32> to vector<16x16x32xf32>
    %117 = vector.shape_cast %114 : vector<16x16x32xf32> to vector<1x16x16x32xf32>
    tpu.vector_store %arg6[%c0_67, %c0_68, %c0_69, %c0_70], %117 {strides = array<i32>} : memref<1x16x16x32xf32, #tpu.memory_space<vmem>>, vector<1x16x16x32xf32>,
    return
  }
  func.func @transform_0(%arg0: i32) -> (i32, i32, i32, i32) {
    %c0_i32 = arith.constant 0 : i32
    %c0_i32_0 = arith.constant 0 : i32
    %c0_i32_1 = arith.constant 0 : i32
    %c0_i32_2 = arith.constant 0 : i32
    return %arg0, %c0_i32, %c0_i32_0, %c0_i32_1 : i32, i32, i32, i32
  }
  func.func @transform_1(%arg0: i32) -> (i32, i32, i32, i32) {
    %c0_i32 = arith.constant 0 : i32
    %c0_i32_0 = arith.constant 0 : i32
    %c0_i32_1 = arith.constant 0 : i32
    %c0_i32_2 = arith.constant 0 : i32
    return %arg0, %c0_i32, %c0_i32_0, %c0_i32_1 : i32, i32, i32, i32
  }
  func.func @transform_2(%arg0: i32) -> (i32, i32, i32) {
    %c0_i32 = arith.constant 0 : i32
    %c0_i32_0 = arith.constant 0 : i32
    %c0_i32_1 = arith.constant 0 : i32
    %c0_i32_2 = arith.constant 0 : i32
    return %c0_i32, %c0_i32_0, %c0_i32_1 : i32, i32, i32
  }
  func.func @transform_3(%arg0: i32) -> (i32, i32, i32) {
    %c0_i32 = arith.constant 0 : i32
    %c0_i32_0 = arith.constant 0 : i32
    %c0_i32_1 = arith.constant 0 : i32
    %c0_i32_2 = arith.constant 0 : i32
    return %c0_i32, %c0_i32_0, %c0_i32_1 : i32, i32, i32
  }
  func.func @transform_4(%arg0: i32) -> (i32, i32) {
    %c0_i32 = arith.constant 0 : i32
    %c0_i32_0 = arith.constant 0 : i32
    %c0_i32_1 = arith.constant 0 : i32
    return %c0_i32, %c0_i32_0 : i32, i32
  }
  func.func @transform_5(%arg0: i32) -> (i32, i32, i32, i32) {
    %c0_i32 = arith.constant 0 : i32
    %c0_i32_0 = arith.constant 0 : i32
    %c0_i32_1 = arith.constant 0 : i32
    %c0_i32_2 = arith.constant 0 : i32
    return %arg0, %c0_i32, %c0_i32_0, %c0_i32_1 : i32, i32, i32, i32
  }
}

</mosaic_0001>

<llo_original>
// kernel: tpu_custom_call.1
$region0: #{tpu_custom_call.1}
  #allocation0 [shape = 'u32[]', space=smem, size = 0x4, offset = 0x4, fixed_abs, tag = 'smem constant byte address 0x4 - core index']
  #allocation1 [shape = 'u32[144,128]{1,0:T(1,128)}', space=vmem, size = 0x12000, scoped, tag = 'internal scratch']
  #allocation2 [shape = 'bf16[18,24,64]{2,1,0:T(8,128)(2,1)}', space=vmem, size = 0x1b000, scoped, tag = 'scratch operand']
  #allocation3 [shape = 'bf16[18,24,32]{2,1,0:T(8,128)(2,1)}', space=vmem, size = 0x1b000, scoped, tag = 'scratch operand']
  %s0 = inlined_call_operand.hbm [shape: bf16[2,16,16,64], index: 0, kind: input, shape index: {}]
  %s1 = inlined_call_operand.hbm [shape: bf16[2,16,16,96], index: 1, kind: input, shape index: {}]
  %s2 = inlined_call_operand.hbm [shape: bf16[3,192,96], index: 2, kind: input, shape index: {}]
  %s3 = inlined_call_operand.vmem [shape: bf16[3,96,32], index: 3, kind: input, shape index: {}]
  %s4 = inlined_call_operand.vmem [shape: f32[1,96], index: 4, kind: input, shape index: {}]
  %s5 = inlined_call_operand.hbm [shape: f32[2,16,16,32], index: 5, kind: output, shape index: {}]
  %s6 = sld [smem:[#allocation0]]
  $region65: #{tpu_custom_call.1} parent=0
    _
  %s8 = ssub.s32 1, %s6
  %s9 = scalar_select 0, %s8, %s6
  $region1: #{tpu_custom_call.1} parent=0
    #allocation4 [shape = 'u8[131072]{0}', space=vmem, size = 0x20000, scoped, tag = 'input window, operand 0']
    #allocation5 [shape = 's32[2]{0}', space=sflag, size = 0x8, scoped, tag = 'scoped memory for tpu_custom_call.1']
    #allocation6 [shape = 's32[2]{0}', space=sflag, size = 0x8, scoped, tag = 'scoped memory for tpu_custom_call.1']
    #allocation7 [shape = 'u8[131072]{0}', space=vmem, size = 0x20000, scoped, tag = 'input window, operand 1']
    #allocation8 [shape = 's32[2]{0}', space=sflag, size = 0x8, scoped, tag = 'scoped memory for tpu_custom_call.1']
    #allocation9 [shape = 'u8[147456]{0}', space=vmem, size = 0x24000, scoped, tag = 'input window, operand 2, single buffered']
    #allocation10 [shape = 'u8[262144]{0}', space=vmem, size = 0x40000, scoped, tag = 'output window, operand 0']
    %10 = vsyncpa [#allocation5], 0
    %s11 = scalar_lea.sflag [#allocation5], 1
    %12 = vsyncpa %s11, 0
    %13 = vsyncpa [#allocation8], 0
    %s14 = scalar_lea.sflag [#allocation8], 1
    %15 = vsyncpa %s14, 0
    %16 = vsyncpa [#allocation6], 0
    %s17 = scalar_lea.sflag [#allocation6], 1
    %18 = vsyncpa %s17, 0
    loop: start=0, step=1, limit=4
    $region2: #{tpu_custom_call.1} parent=1 // loop_pre_header
      _
    $region3: #{tpu_custom_call.1} parent=1 // loop_header
      %s20 = sphi 0, %s24
      %p21 = scmp.ge.s32.totalorder %s20, 4
      %s30 = sphi 0, %s32
      %s33 = sphi 0, %s30
      %s34 = sphi 0, %s33
      %s50 = sphi 0, %s34
      %s56 = sphi 0, %s58
      %s59 = sphi 0, %s56
      %s60 = sphi 0, %s59
      %s76 = sphi 0, %s60
      %s80 = sphi 0, %s80
      %s82 = sphi 0, %s80
      %s83 = sphi 0, %s82
      %s97 = sphi 0, %s83
      %s101 = sphi 0, %s101
      %s103 = sphi 0, %s101
      %s104 = sphi 0, %s103
      %s118 = sphi 0, %s104
      %s122 = sphi 0, %s122
      %s124 = sphi 0, %s122
      %s125 = sphi 0, %s124
      %s139 = sphi 0, %s125
      %s145 = sphi 0, %s147
      %s148 = sphi 0, %s145
      %s149 = sphi 0, %s148
      %s165 = sphi 0, %s149
    $region4: #{tpu_custom_call.1} parent=1 // loop_header_branch
      %23 = sbr.rel (%p21) target = $region8
    $region5: #{tpu_custom_call.1} parent=1 // loop_body
      %s25 = ssub.s32 %s20, 1
      %s26 = ssub.s32 %s20, 2
      %s27 = sadd.s32 %s20, 1
      %s28 = ssub.s32 %s20, %s27
      %p29 = scmp.eq.s32.totalorder %s28, 0
      %s31 = sadd.s32 %s30, 1
      %s32 = scalar_select %p29, %s30, %s31
      %p35 = pneg %p29
      %p36 = scmp.eq.s32.totalorder %s20, 1
      %p37 = por %p35, %p36
      %p38 = scmp.ne.s32.totalorder %s30, %s33
      %p39 = scmp.eq.s32.totalorder %s20, 0
      %p40 = por %p38, %p39
      %p41 = scmp.ne.s32.totalorder %s30, %s33
      %p42 = scmp.eq.s32.totalorder %s25, 1
      %p43 = por %p41, %p42
      %p44 = scmp.ne.s32.totalorder %s33, %s34
      %p45 = scmp.eq.s32.totalorder %s25, 0
      %p46 = por %p44, %p45
      %p47 = scmp.ne.s32.totalorder %s33, %s34
      %p48 = scmp.eq.s32.totalorder %s26, 1
      %p49 = por %p47, %p48
      %p51 = scmp.ne.s32.totalorder %s34, %s50
      %p52 = scmp.eq.s32.totalorder %s26, 0
      %p53 = por %p51, %p52
      %s54 = ssub.s32 %s20, %s27
      %p55 = scmp.eq.s32.totalorder %s54, 0
      %s57 = sadd.s32 %s56, 1
      %s58 = scalar_select %p55, %s56, %s57
      %p61 = pneg %p55
      %p62 = scmp.eq.s32.totalorder %s20, 1
      %p63 = por %p61, %p62
      %p64 = scmp.ne.s32.totalorder %s56, %s59
      %p65 = scmp.eq.s32.totalorder %s20, 0
      %p66 = por %p64, %p65
      %p67 = scmp.ne.s32.totalorder %s56, %s59
      %p68 = scmp.eq.s32.totalorder %s25, 1
      %p69 = por %p67, %p68
      %p70 = scmp.ne.s32.totalorder %s59, %s60
      %p71 = scmp.eq.s32.totalorder %s25, 0
      %p72 = por %p70, %p71
      %p73 = scmp.ne.s32.totalorder %s59, %s60
      %p74 = scmp.eq.s32.totalorder %s26, 1
      %p75 = por %p73, %p74
      %p77 = scmp.ne.s32.totalorder %s60, %s76
      %p78 = scmp.eq.s32.totalorder %s26, 0
      %p79 = por %p77, %p78
      %s81 = sadd.s32 %s80, 1
      %p84 = scmp.eq.s32.totalorder %s20, 1
      %p85 = scmp.ne.s32.totalorder %s80, %s82
      %p86 = scmp.eq.s32.totalorder %s20, 0
      %p87 = por %p85, %p86
      %p88 = scmp.ne.s32.totalorder %s80, %s82
      %p89 = scmp.eq.s32.totalorder %s25, 1
      %p90 = por %p88, %p89
      %p91 = scmp.ne.s32.totalorder %s82, %s83
      %p92 = scmp.eq.s32.totalorder %s25, 0
      %p93 = por %p91, %p92
      %p94 = scmp.ne.s32.totalorder %s82, %s83
      %p95 = scmp.eq.s32.totalorder %s26, 1
      %p96 = por %p94, %p95
      %p98 = scmp.ne.s32.totalorder %s83, %s97
      %p99 = scmp.eq.s32.totalorder %s26, 0
      %p100 = por %p98, %p99
      %s102 = sadd.s32 %s101, 1
      %p105 = scmp.eq.s32.totalorder %s20, 1
      %p106 = scmp.ne.s32.totalorder %s101, %s103
      %p107 = scmp.eq.s32.totalorder %s20, 0
      %p108 = por %p106, %p107
      %p109 = scmp.ne.s32.totalorder %s101, %s103
      %p110 = scmp.eq.s32.totalorder %s25, 1
      %p111 = por %p109, %p110
      %p112 = scmp.ne.s32.totalorder %s103, %s104
      %p113 = scmp.eq.s32.totalorder %s25, 0
      %p114 = por %p112, %p113
      %p115 = scmp.ne.s32.totalorder %s103, %s104
      %p116 = scmp.eq.s32.totalorder %s26, 1
      %p117 = por %p115, %p116
      %p119 = scmp.ne.s32.totalorder %s104, %s118
      %p120 = scmp.eq.s32.totalorder %s26, 0
      %p121 = por %p119, %p120
      %s123 = sadd.s32 %s122, 1
      %p126 = scmp.eq.s32.totalorder %s20, 1
      %p127 = scmp.ne.s32.totalorder %s122, %s124
      %p128 = scmp.eq.s32.totalorder %s20, 0
      %p129 = por %p127, %p128
      %p130 = scmp.ne.s32.totalorder %s122, %s124
      %p131 = scmp.eq.s32.totalorder %s25, 1
      %p132 = por %p130, %p131
      %p133 = scmp.ne.s32.totalorder %s124, %s125
      %p134 = scmp.eq.s32.totalorder %s25, 0
      %p135 = por %p133, %p134
      %p136 = scmp.ne.s32.totalorder %s124, %s125
      %p137 = scmp.eq.s32.totalorder %s26, 1
      %p138 = por %p136, %p137
      %p140 = scmp.ne.s32.totalorder %s125, %s139
      %p141 = scmp.eq.s32.totalorder %s26, 0
      %p142 = por %p140, %p141
      %s143 = ssub.s32 %s20, %s27
      %p144 = scmp.eq.s32.totalorder %s143, 0
      %s146 = sadd.s32 %s145, 1
      %s147 = scalar_select %p144, %s145, %s146
      %p150 = pneg %p144
      %p151 = scmp.eq.s32.totalorder %s20, 1
      %p152 = por %p150, %p151
      %p153 = scmp.ne.s32.totalorder %s145, %s148
      %p154 = scmp.eq.s32.totalorder %s20, 0
      %p155 = por %p153, %p154
      %p156 = scmp.ne.s32.totalorder %s145, %s148
      %p157 = scmp.eq.s32.totalorder %s25, 1
      %p158 = por %p156, %p157
      %p159 = scmp.ne.s32.totalorder %s148, %s149
      %p160 = scmp.eq.s32.totalorder %s25, 0
      %p161 = por %p159, %p160
      %p162 = scmp.ne.s32.totalorder %s148, %s149
      %p163 = scmp.eq.s32.totalorder %s26, 1
      %p164 = por %p162, %p163
      %p166 = scmp.ne.s32.totalorder %s149, %s165
      %p167 = scmp.eq.s32.totalorder %s26, 0
      %p168 = por %p166, %p167
      %p169 = scmp.le.s32.totalorder 1, %s20
      %p170 = scmp.lt.s32.totalorder %s20, 3
      %p171 = pnand %p169, %p170
      %p172 = pneg %p171
      // Predicated region
      $region9: #{tpu_custom_call.1} parent=5 // pred_check
        _
      $region10: #{tpu_custom_call.1} parent=5 // pred_check_branch
        %174 = sbr.rel (%p171) target = $region12
      $region11: #{tpu_custom_call.1} parent=5 // pred_region
        %s175 = ssub.s32 %s20, 1
        // Predicated region
        $region13: #{tpu_custom_call.1} parent=11 // pred_check
          %p176 = pneg %p93
        $region14: #{tpu_custom_call.1} parent=11 // pred_check_branch
          %178 = sbr.rel (%p176) target = $region16
        $region15: #{tpu_custom_call.1} parent=11 // pred_region
          %s180 = ssub.s32 4608, 4608
          %181 = vsyncadd [#allocation8], %s180
          %s182 = sshll.u32 [#allocation9], 4
          %s183 = int_to_ptr.vmem [resolvable:$true] %s182
          %188 = dma.hbm_to_vmem [thread:$0]  %s2, 4608, %s183, [#allocation8], 64, 64, 4
        $region16: #{tpu_custom_call.1} parent=11 // pred_fallthru
          _
        // Predicated region
        $region17: #{tpu_custom_call.1} parent=11 // pred_check
          %p189 = pneg %p114
        $region18: #{tpu_custom_call.1} parent=11 // pred_check_branch
          %191 = sbr.rel (%p189) target = $region20
        $region19: #{tpu_custom_call.1} parent=11 // pred_region
          _
        $region20: #{tpu_custom_call.1} parent=11 // pred_fallthru
          _
        // Predicated region
        $region21: #{tpu_custom_call.1} parent=11 // pred_check
          %p192 = pneg %p135
        $region22: #{tpu_custom_call.1} parent=11 // pred_check_branch
          %194 = sbr.rel (%p192) target = $region24
        $region23: #{tpu_custom_call.1} parent=11 // pred_region
          _
        $region24: #{tpu_custom_call.1} parent=11 // pred_fallthru
          _
      $region12: #{tpu_custom_call.1} parent=5 // pred_fallthru
        _
      %p195 = scmp.lt.s32.totalorder %s20, 2
      // Predicated region
      $region25: #{tpu_custom_call.1} parent=5 // pred_check
        %p196 = pneg %p195
      $region26: #{tpu_custom_call.1} parent=5 // pred_check_branch
        %198 = sbr.rel (%p196) target = $region28
      $region27: #{tpu_custom_call.1} parent=5 // pred_region
        // Predicated region
        $region29: #{tpu_custom_call.1} parent=27 // pred_check
          %p199 = pneg %p40
        $region30: #{tpu_custom_call.1} parent=27 // pred_check_branch
          %201 = sbr.rel (%p199) target = $region32
        $region31: #{tpu_custom_call.1} parent=27 // pred_region
          %s202 = sand.u32 %s30, 1
          %s203 = scalar_lea.sflag [#allocation5], %s202
          %s204 = sand.u32 %s30, 1
          %s205 = smul.addr %s204, 128
          %s206 = scalar_lea.vmem [#allocation4], %s205
          %s208 = ssub.s32 2048, 2048
          %209 = vsyncadd %s203, %s208
          %s210 = smul.addr %s20, 32
          %s211 = smul.addr %s210, 64
          %s212 = scalar_lea.hbm %s0, %s211
          %s213 = sshll.u32 %s206, 4
          %s214 = int_to_ptr.vmem [resolvable:$true] %s213
          %219 = dma.hbm_to_vmem [thread:$0]  %s212, 2048, %s214, %s203, 64, 64, 4
        $region32: #{tpu_custom_call.1} parent=27 // pred_fallthru
          _
        // Predicated region
        $region33: #{tpu_custom_call.1} parent=27 // pred_check
          %p220 = pneg %p66
        $region34: #{tpu_custom_call.1} parent=27 // pred_check_branch
          %222 = sbr.rel (%p220) target = $region36
        $region35: #{tpu_custom_call.1} parent=27 // pred_region
          %s223 = sand.u32 %s20, 1
          %s224 = scalar_lea.sflag [#allocation8], %s223
          %s225 = sand.u32 %s56, 1
          %s226 = smul.addr %s225, 128
          %s227 = scalar_lea.vmem [#allocation7], %s226
          %s229 = ssub.s32 2048, 2048
          %230 = vsyncadd %s224, %s229
          %s231 = smul.addr %s20, 32
          %s232 = smul.addr %s231, 64
          %s233 = scalar_lea.hbm %s1, %s232
          %s234 = sshll.u32 %s227, 4
          %s235 = int_to_ptr.vmem [resolvable:$true] %s234
          %240 = dma.hbm_to_vmem [thread:$0]  %s233, 2048, %s235, %s224, 64, 64, 4
        $region36: #{tpu_custom_call.1} parent=27 // pred_fallthru
          _
      $region28: #{tpu_custom_call.1} parent=5 // pred_fallthru
        _
      %p241 = scmp.le.s32.totalorder 1, %s20
      %p242 = scmp.lt.s32.totalorder %s20, 3
      %p243 = pnand %p241, %p242
      %p244 = pneg %p243
      // Predicated region
      $region37: #{tpu_custom_call.1} parent=5 // pred_check
        _
      $region38: #{tpu_custom_call.1} parent=5 // pred_check_branch
        %246 = sbr.rel (%p243) target = $region40
      $region39: #{tpu_custom_call.1} parent=5 // pred_region
        %s247 = ssub.s32 %s20, 1
        %s248 = sand.u32 %s33, 1
        %s249 = scalar_lea.sflag [#allocation5], %s248
        %s250 = sand.u32 %s33, 1
        %s251 = smul.addr %s250, 128
        %s252 = scalar_lea.vmem [#allocation4], %s251
        // Predicated region
        $region41: #{tpu_custom_call.1} parent=39 // pred_check
          %p253 = pneg %p46
        $region42: #{tpu_custom_call.1} parent=39 // pred_check_branch
          %255 = sbr.rel (%p253) target = $region44
        $region43: #{tpu_custom_call.1} parent=39 // pred_region
          %256 = dma.done %s249, 2048
        $region44: #{tpu_custom_call.1} parent=39 // pred_fallthru
          _
        %s257 = sand.u32 %s25, 1
        %s258 = scalar_lea.sflag [#allocation8], %s257
        %s259 = sand.u32 %s59, 1
        %s260 = smul.addr %s259, 128
        %s261 = scalar_lea.vmem [#allocation7], %s260
        // Predicated region
        $region45: #{tpu_custom_call.1} parent=39 // pred_check
          %p262 = pneg %p72
        $region46: #{tpu_custom_call.1} parent=39 // pred_check_branch
          %264 = sbr.rel (%p262) target = $region48
        $region47: #{tpu_custom_call.1} parent=39 // pred_region
          %265 = dma.done %s258, 2048
        $region48: #{tpu_custom_call.1} parent=39 // pred_fallthru
          _
        // Predicated region
        $region49: #{tpu_custom_call.1} parent=39 // pred_check
          %p266 = pneg %p93
        $region50: #{tpu_custom_call.1} parent=39 // pred_check_branch
          %268 = sbr.rel (%p266) target = $region52
        $region51: #{tpu_custom_call.1} parent=39 // pred_region
          %269 = dma.done [#allocation8], 4608
        $region52: #{tpu_custom_call.1} parent=39 // pred_fallthru
          _
        %s270 = sand.u32 %s33, 1
        %s271 = scalar_lea.sflag [#allocation5], %s270
        %s272 = sand.u32 %s33, 1
        %s273 = smul.addr %s272, 128
        %s274 = scalar_lea.vmem [#allocation4], %s273
        %p275 = pneg %p46
        %p276 = pneg %p43
        %s277 = sand.u32 %s25, 1
        %s278 = scalar_lea.sflag [#allocation8], %s277
        %s279 = sand.u32 %s59, 1
        %s280 = smul.addr %s279, 128
        %s281 = scalar_lea.vmem [#allocation7], %s280
        %p282 = pneg %p72
        %p283 = pneg %p69
        %p284 = pneg %p93
        %p285 = pneg %p90
        %p286 = pneg %p114
        %p287 = pneg %p111
        %p288 = pneg %p135
        %p289 = pneg %p132
        %p290 = pneg %p161
        %p291 = pneg %p158
        %s292 = sand.u32 %s148, 1
        %s293 = scalar_lea.sflag [#allocation6], %s292
        %s294 = sand.u32 %s148, 1
        %s295 = smul.addr %s294, 256
        %s296 = scalar_lea.vmem [#allocation10], %s295
        %vm298 = vcmask 519168
        %299 = vst.msk [vmem:[#allocation2] sm:$0xf] %vm298, 0
        %300 = vst.msk [vmem:[#allocation2 + $0x4] sm:$0xf] %vm298, 0
        %301 = vst.msk [vmem:[#allocation2 + $0x8] sm:$0xf] %vm298, 0
        %s302 = scalar_lea.vmem [#allocation2], 204
        %303 = vst.msk [vmem:[%s302] sm:$0xf] %vm298, 0
        %304 = vst.msk [vmem:[%s302 + $0x4] sm:$0xf] %vm298, 0
        %305 = vst.msk [vmem:[%s302 + $0x8] sm:$0xf] %vm298, 0
        %s306 = scalar_lea.vmem [#allocation2], 12
        %vm307 = vcmask 516096
        %vm308 = vsmask.f32 256
        %vm309 = vmand %vm307, %vm308
        %v310 = vld [vmem:[%s306] sm:$0x1]
        %v311 = vsel %vm309, 0, %v310
        %312 = vst [vmem:[%s306] sm:$0x1] %v311
        %v313 = vld [vmem:[%s306 + $0xc] sm:$0x1]
        %v314 = vsel %vm309, 0, %v313
        %315 = vst [vmem:[%s306 + $0xc] sm:$0x1] %v314
        %v316 = vld [vmem:[%s306 + $0x18] sm:$0x1]
        %v317 = vsel %vm309, 0, %v316
        %318 = vst [vmem:[%s306 + $0x18] sm:$0x1] %v317
        %v319 = vld [vmem:[%s306 + $0x24] sm:$0x1]
        %v320 = vsel %vm309, 0, %v319
        %321 = vst [vmem:[%s306 + $0x24] sm:$0x1] %v320
        %v322 = vld [vmem:[%s306 + $0x30] sm:$0x1]
        %v323 = vsel %vm309, 0, %v322
        %324 = vst [vmem:[%s306 + $0x30] sm:$0x1] %v323
        %v325 = vld [vmem:[%s306 + $0x3c] sm:$0x1]
        %v326 = vsel %vm309, 0, %v325
        %327 = vst [vmem:[%s306 + $0x3c] sm:$0x1] %v326
        %v328 = vld [vmem:[%s306 + $0x48] sm:$0x1]
        %v329 = vsel %vm309, 0, %v328
        %330 = vst [vmem:[%s306 + $0x48] sm:$0x1] %v329
        %v331 = vld [vmem:[%s306 + $0x54] sm:$0x1]
        %v332 = vsel %vm309, 0, %v331
        %333 = vst [vmem:[%s306 + $0x54] sm:$0x1] %v332
        %v334 = vld [vmem:[%s306 + $0x60] sm:$0x1]
        %v335 = vsel %vm309, 0, %v334
        %336 = vst [vmem:[%s306 + $0x60] sm:$0x1] %v335
        %v337 = vld [vmem:[%s306 + $0x6c] sm:$0x1]
        %v338 = vsel %vm309, 0, %v337
        %339 = vst [vmem:[%s306 + $0x6c] sm:$0x1] %v338
        %v340 = vld [vmem:[%s306 + $0x78] sm:$0x1]
        %v341 = vsel %vm309, 0, %v340
        %342 = vst [vmem:[%s306 + $0x78] sm:$0x1] %v341
        %v343 = vld [vmem:[%s306 + $0x84] sm:$0x1]
        %v344 = vsel %vm309, 0, %v343
        %345 = vst [vmem:[%s306 + $0x84] sm:$0x1] %v344
        %v346 = vld [vmem:[%s306 + $0x90] sm:$0x1]
        %v347 = vsel %vm309, 0, %v346
        %348 = vst [vmem:[%s306 + $0x90] sm:$0x1] %v347
        %v349 = vld [vmem:[%s306 + $0x9c] sm:$0x1]
        %v350 = vsel %vm309, 0, %v349
        %351 = vst [vmem:[%s306 + $0x9c] sm:$0x1] %v350
        %v352 = vld [vmem:[%s306 + $0xa8] sm:$0x1]
        %v353 = vsel %vm309, 0, %v352
        %354 = vst [vmem:[%s306 + $0xa8] sm:$0x1] %v353
        %v355 = vld [vmem:[%s306 + $0xb4] sm:$0x1]
        %v356 = vsel %vm309, 0, %v355
        %357 = vst [vmem:[%s306 + $0xb4] sm:$0x1] %v356
        %vm358 = vcmask 519168
        %vm359 = vsmask.f32 7938
        %vm360 = vmand %vm358, %vm359
        %v361 = vld [vmem:[%s306 + $0x8] sm:$0xf]
        %v362 = vsel %vm360, 0, %v361
        %363 = vst [vmem:[%s306 + $0x8] sm:$0xf] %v362
        %v364 = vld [vmem:[%s306 + $0x14] sm:$0xf]
        %v365 = vsel %vm360, 0, %v364
        %366 = vst [vmem:[%s306 + $0x14] sm:$0xf] %v365
        %v367 = vld [vmem:[%s306 + $0x20] sm:$0xf]
        %v368 = vsel %vm360, 0, %v367
        %369 = vst [vmem:[%s306 + $0x20] sm:$0xf] %v368
        %v370 = vld [vmem:[%s306 + $0x2c] sm:$0xf]
        %v371 = vsel %vm360, 0, %v370
        %372 = vst [vmem:[%s306 + $0x2c] sm:$0xf] %v371
        %v373 = vld [vmem:[%s306 + $0x38] sm:$0xf]
        %v374 = vsel %vm360, 0, %v373
        %375 = vst [vmem:[%s306 + $0x38] sm:$0xf] %v374
        %v376 = vld [vmem:[%s306 + $0x44] sm:$0xf]
        %v377 = vsel %vm360, 0, %v376
        %378 = vst [vmem:[%s306 + $0x44] sm:$0xf] %v377
        %v379 = vld [vmem:[%s306 + $0x50] sm:$0xf]
        %v380 = vsel %vm360, 0, %v379
        %381 = vst [vmem:[%s306 + $0x50] sm:$0xf] %v380
        %v382 = vld [vmem:[%s306 + $0x5c] sm:$0xf]
        %v383 = vsel %vm360, 0, %v382
        %384 = vst [vmem:[%s306 + $0x5c] sm:$0xf] %v383
        %v385 = vld [vmem:[%s306 + $0x68] sm:$0xf]
        %v386 = vsel %vm360, 0, %v385
        %387 = vst [vmem:[%s306 + $0x68] sm:$0xf] %v386
        %v388 = vld [vmem:[%s306 + $0x74] sm:$0xf]
        %v389 = vsel %vm360, 0, %v388
        %390 = vst [vmem:[%s306 + $0x74] sm:$0xf] %v389
        %v391 = vld [vmem:[%s306 + $0x80] sm:$0xf]
        %v392 = vsel %vm360, 0, %v391
        %393 = vst [vmem:[%s306 + $0x80] sm:$0xf] %v392
        %v394 = vld [vmem:[%s306 + $0x8c] sm:$0xf]
        %v395 = vsel %vm360, 0, %v394
        %396 = vst [vmem:[%s306 + $0x8c] sm:$0xf] %v395
        %v397 = vld [vmem:[%s306 + $0x98] sm:$0xf]
        %v398 = vsel %vm360, 0, %v397
        %399 = vst [vmem:[%s306 + $0x98] sm:$0xf] %v398
        %v400 = vld [vmem:[%s306 + $0xa4] sm:$0xf]
        %v401 = vsel %vm360, 0, %v400
        %402 = vst [vmem:[%s306 + $0xa4] sm:$0xf] %v401
        %v403 = vld [vmem:[%s306 + $0xb0] sm:$0xf]
        %v404 = vsel %vm360, 0, %v403
        %405 = vst [vmem:[%s306 + $0xb0] sm:$0xf] %v404
        %v406 = vld [vmem:[%s306 + $0xbc] sm:$0xf]
        %v407 = vsel %vm360, 0, %v406
        %408 = vst [vmem:[%s306 + $0xbc] sm:$0xf] %v407
        %vm409 = vcmask 257024
        %410 = vst.msk [vmem:[#allocation3] sm:$0xf] %vm409, 0
        %411 = vst.msk [vmem:[#allocation3 + $0x4] sm:$0xf] %vm409, 0
        %412 = vst.msk [vmem:[#allocation3 + $0x8] sm:$0xf] %vm409, 0
        %s413 = scalar_lea.vmem [#allocation3], 204
        %414 = vst.msk [vmem:[%s413] sm:$0xf] %vm409, 0
        %415 = vst.msk [vmem:[%s413 + $0x4] sm:$0xf] %vm409, 0
        %416 = vst.msk [vmem:[%s413 + $0x8] sm:$0xf] %vm409, 0
        %s417 = scalar_lea.vmem [#allocation3], 12
        %vm418 = vcmask 253952
        %vm419 = vmand %vm418, %vm308
        %v420 = vld [vmem:[%s417] sm:$0x1]
        %v421 = vsel %vm419, 0, %v420
        %422 = vst [vmem:[%s417] sm:$0x1] %v421
        %v423 = vld [vmem:[%s417 + $0xc] sm:$0x1]
        %v424 = vsel %vm419, 0, %v423
        %425 = vst [vmem:[%s417 + $0xc] sm:$0x1] %v424
        %v426 = vld [vmem:[%s417 + $0x18] sm:$0x1]
        %v427 = vsel %vm419, 0, %v426
        %428 = vst [vmem:[%s417 + $0x18] sm:$0x1] %v427
        %v429 = vld [vmem:[%s417 + $0x24] sm:$0x1]
        %v430 = vsel %vm419, 0, %v429
        %431 = vst [vmem:[%s417 + $0x24] sm:$0x1] %v430
        %v432 = vld [vmem:[%s417 + $0x30] sm:$0x1]
        %v433 = vsel %vm419, 0, %v432
        %434 = vst [vmem:[%s417 + $0x30] sm:$0x1] %v433
        %v435 = vld [vmem:[%s417 + $0x3c] sm:$0x1]
        %v436 = vsel %vm419, 0, %v435
        %437 = vst [vmem:[%s417 + $0x3c] sm:$0x1] %v436
        %v438 = vld [vmem:[%s417 + $0x48] sm:$0x1]
        %v439 = vsel %vm419, 0, %v438
        %440 = vst [vmem:[%s417 + $0x48] sm:$0x1] %v439
        %v441 = vld [vmem:[%s417 + $0x54] sm:$0x1]
        %v442 = vsel %vm419, 0, %v441
        %443 = vst [vmem:[%s417 + $0x54] sm:$0x1] %v442
        %v444 = vld [vmem:[%s417 + $0x60] sm:$0x1]
        %v445 = vsel %vm419, 0, %v444
        %446 = vst [vmem:[%s417 + $0x60] sm:$0x1] %v445
        %v447 = vld [vmem:[%s417 + $0x6c] sm:$0x1]
        %v448 = vsel %vm419, 0, %v447
        %449 = vst [vmem:[%s417 + $0x6c] sm:$0x1] %v448
        %v450 = vld [vmem:[%s417 + $0x78] sm:$0x1]
        %v451 = vsel %vm419, 0, %v450
        %452 = vst [vmem:[%s417 + $0x78] sm:$0x1] %v451
        %v453 = vld [vmem:[%s417 + $0x84] sm:$0x1]
        %v454 = vsel %vm419, 0, %v453
        %455 = vst [vmem:[%s417 + $0x84] sm:$0x1] %v454
        %v456 = vld [vmem:[%s417 + $0x90] sm:$0x1]
        %v457 = vsel %vm419, 0, %v456
        %458 = vst [vmem:[%s417 + $0x90] sm:$0x1] %v457
        %v459 = vld [vmem:[%s417 + $0x9c] sm:$0x1]
        %v460 = vsel %vm419, 0, %v459
        %461 = vst [vmem:[%s417 + $0x9c] sm:$0x1] %v460
        %v462 = vld [vmem:[%s417 + $0xa8] sm:$0x1]
        %v463 = vsel %vm419, 0, %v462
        %464 = vst [vmem:[%s417 + $0xa8] sm:$0x1] %v463
        %v465 = vld [vmem:[%s417 + $0xb4] sm:$0x1]
        %v466 = vsel %vm419, 0, %v465
        %467 = vst [vmem:[%s417 + $0xb4] sm:$0x1] %v466
        %vm468 = vcmask 257024
        %vm469 = vmand %vm468, %vm359
        %v470 = vld [vmem:[%s417 + $0x8] sm:$0xf]
        %v471 = vsel %vm469, 0, %v470
        %472 = vst [vmem:[%s417 + $0x8] sm:$0xf] %v471
        %v473 = vld [vmem:[%s417 + $0x14] sm:$0xf]
        %v474 = vsel %vm469, 0, %v473
        %475 = vst [vmem:[%s417 + $0x14] sm:$0xf] %v474
        %v476 = vld [vmem:[%s417 + $0x20] sm:$0xf]
        %v477 = vsel %vm469, 0, %v476
        %478 = vst [vmem:[%s417 + $0x20] sm:$0xf] %v477
        %v479 = vld [vmem:[%s417 + $0x2c] sm:$0xf]
        %v480 = vsel %vm469, 0, %v479
        %481 = vst [vmem:[%s417 + $0x2c] sm:$0xf] %v480
        %v482 = vld [vmem:[%s417 + $0x38] sm:$0xf]
        %v483 = vsel %vm469, 0, %v482
        %484 = vst [vmem:[%s417 + $0x38] sm:$0xf] %v483
        %v485 = vld [vmem:[%s417 + $0x44] sm:$0xf]
        %v486 = vsel %vm469, 0, %v485
        %487 = vst [vmem:[%s417 + $0x44] sm:$0xf] %v486
        %v488 = vld [vmem:[%s417 + $0x50] sm:$0xf]
        %v489 = vsel %vm469, 0, %v488
        %490 = vst [vmem:[%s417 + $0x50] sm:$0xf] %v489
        %v491 = vld [vmem:[%s417 + $0x5c] sm:$0xf]
        %v492 = vsel %vm469, 0, %v491
        %493 = vst [vmem:[%s417 + $0x5c] sm:$0xf] %v492
        %v494 = vld [vmem:[%s417 + $0x68] sm:$0xf]
        %v495 = vsel %vm469, 0, %v494
        %496 = vst [vmem:[%s417 + $0x68] sm:$0xf] %v495
        %v497 = vld [vmem:[%s417 + $0x74] sm:$0xf]
        %v498 = vsel %vm469, 0, %v497
        %499 = vst [vmem:[%s417 + $0x74] sm:$0xf] %v498
        %v500 = vld [vmem:[%s417 + $0x80] sm:$0xf]
        %v501 = vsel %vm469, 0, %v500
        %502 = vst [vmem:[%s417 + $0x80] sm:$0xf] %v501
        %v503 = vld [vmem:[%s417 + $0x8c] sm:$0xf]
        %v504 = vsel %vm469, 0, %v503
        %505 = vst [vmem:[%s417 + $0x8c] sm:$0xf] %v504
        %v506 = vld [vmem:[%s417 + $0x98] sm:$0xf]
        %v507 = vsel %vm469, 0, %v506
        %508 = vst [vmem:[%s417 + $0x98] sm:$0xf] %v507
        %v509 = vld [vmem:[%s417 + $0xa4] sm:$0xf]
        %v510 = vsel %vm469, 0, %v509
        %511 = vst [vmem:[%s417 + $0xa4] sm:$0xf] %v510
        %v512 = vld [vmem:[%s417 + $0xb0] sm:$0xf]
        %v513 = vsel %vm469, 0, %v512
        %514 = vst [vmem:[%s417 + $0xb0] sm:$0xf] %v513
        %v515 = vld [vmem:[%s417 + $0xbc] sm:$0xf]
        %v516 = vsel %vm469, 0, %v515
        %517 = vst [vmem:[%s417 + $0xbc] sm:$0xf] %v516
        %v518 = vld [vmem:[%s252] sm:$0xf]
        %v519 = vld [vmem:[%s252 + $0x4] sm:$0xf]
        %v520 = vld [vmem:[%s252 + $0x8] sm:$0xf]
        %v521 = vld [vmem:[%s252 + $0xc] sm:$0xf]
        %v522 = vld [vmem:[%s252 + $0x10] sm:$0xf]
        %v523 = vld [vmem:[%s252 + $0x14] sm:$0xf]
        %v524 = vld [vmem:[%s252 + $0x18] sm:$0xf]
        %v525 = vld [vmem:[%s252 + $0x1c] sm:$0xf]
        %v526 = vld [vmem:[%s252 + $0x20] sm:$0xf]
        %v527 = vld [vmem:[%s252 + $0x24] sm:$0xf]
        %v528 = vld [vmem:[%s252 + $0x28] sm:$0xf]
        %v529 = vld [vmem:[%s252 + $0x2c] sm:$0xf]
        %v530 = vld [vmem:[%s252 + $0x30] sm:$0xf]
        %v531 = vld [vmem:[%s252 + $0x34] sm:$0xf]
        %v532 = vld [vmem:[%s252 + $0x38] sm:$0xf]
        %v533 = vld [vmem:[%s252 + $0x3c] sm:$0xf]
        %v534 = vld [vmem:[%s252 + $0x40] sm:$0xf]
        %v535 = vld [vmem:[%s252 + $0x44] sm:$0xf]
        %v536 = vld [vmem:[%s252 + $0x48] sm:$0xf]
        %v537 = vld [vmem:[%s252 + $0x4c] sm:$0xf]
        %v538 = vld [vmem:[%s252 + $0x50] sm:$0xf]
        %v539 = vld [vmem:[%s252 + $0x54] sm:$0xf]
        %v540 = vld [vmem:[%s252 + $0x58] sm:$0xf]
        %v541 = vld [vmem:[%s252 + $0x5c] sm:$0xf]
        %v542 = vld [vmem:[%s252 + $0x60] sm:$0xf]
        %v543 = vld [vmem:[%s252 + $0x64] sm:$0xf]
        %v544 = vld [vmem:[%s252 + $0x68] sm:$0xf]
        %v545 = vld [vmem:[%s252 + $0x6c] sm:$0xf]
        %v546 = vld [vmem:[%s252 + $0x70] sm:$0xf]
        %v547 = vld [vmem:[%s252 + $0x74] sm:$0xf]
        %v548 = vld [vmem:[%s252 + $0x78] sm:$0xf]
        %v549 = vld [vmem:[%s252 + $0x7c] sm:$0xf]
        %vm550 = vsmask.f32 4368
        %vm551 = vmor %vm308, %vm550
        %v553 = vshrl.u32 %v518, 16
        %v555 = vrot.slane %v553, 7
        %v556 = vshll.u32 %v518, 16
        %v558 = vor.u32 %v555, %v556
        %v559 = vrot.slane %v555, 4
        %v561 = vshrl.u32 %v519, 16
        %v563 = vrot.slane %v561, 7
        %v564 = vshll.u32 %v519, 16
        %v566 = vor.u32 %v563, %v564
        %v567 = vsel %vm551, %v559, %v566
        %v568 = vrot.slane %v563, 4
        %v570 = vshrl.u32 %v520, 16
        %v572 = vrot.slane %v570, 7
        %v573 = vshll.u32 %v520, 16
        %v575 = vor.u32 %v572, %v573
        %v576 = vrot.slane %v572, 4
        %v578 = vshrl.u32 %v521, 16
        %v580 = vrot.slane %v578, 7
        %v581 = vshll.u32 %v521, 16
        %v583 = vor.u32 %v580, %v581
        %v584 = vsel %vm551, %v576, %v583
        %v585 = vrot.slane %v580, 4
        %v587 = vshrl.u32 %v522, 16
        %v589 = vrot.slane %v587, 7
        %v590 = vshll.u32 %v522, 16
        %v592 = vor.u32 %v589, %v590
        %v593 = vrot.slane %v589, 4
        %v595 = vshrl.u32 %v523, 16
        %v597 = vrot.slane %v595, 7
        %v598 = vshll.u32 %v523, 16
        %v600 = vor.u32 %v597, %v598
        %v601 = vsel %vm551, %v593, %v600
        %v602 = vrot.slane %v597, 4
        %v604 = vshrl.u32 %v524, 16
        %v606 = vrot.slane %v604, 7
        %v607 = vshll.u32 %v524, 16
        %v609 = vor.u32 %v606, %v607
        %v610 = vrot.slane %v606, 4
        %v612 = vshrl.u32 %v525, 16
        %v614 = vrot.slane %v612, 7
        %v615 = vshll.u32 %v525, 16
        %v617 = vor.u32 %v614, %v615
        %v618 = vsel %vm551, %v610, %v617
        %v619 = vrot.slane %v614, 4
        %v621 = vshrl.u32 %v526, 16
        %v623 = vrot.slane %v621, 7
        %v624 = vshll.u32 %v526, 16
        %v626 = vor.u32 %v623, %v624
        %v627 = vrot.slane %v623, 4
        %v629 = vshrl.u32 %v527, 16
        %v631 = vrot.slane %v629, 7
        %v632 = vshll.u32 %v527, 16
        %v634 = vor.u32 %v631, %v632
        %v635 = vsel %vm551, %v627, %v634
        %v636 = vrot.slane %v631, 4
        %v638 = vshrl.u32 %v528, 16
        %v640 = vrot.slane %v638, 7
        %v641 = vshll.u32 %v528, 16
        %v643 = vor.u32 %v640, %v641
        %v644 = vrot.slane %v640, 4
        %v646 = vshrl.u32 %v529, 16
        %v648 = vrot.slane %v646, 7
        %v649 = vshll.u32 %v529, 16
        %v651 = vor.u32 %v648, %v649
        %v652 = vsel %vm551, %v644, %v651
        %v653 = vrot.slane %v648, 4
        %v655 = vshrl.u32 %v530, 16
        %v657 = vrot.slane %v655, 7
        %v658 = vshll.u32 %v530, 16
        %v660 = vor.u32 %v657, %v658
        %v661 = vrot.slane %v657, 4
        %v663 = vshrl.u32 %v531, 16
        %v665 = vrot.slane %v663, 7
        %v666 = vshll.u32 %v531, 16
        %v668 = vor.u32 %v665, %v666
        %v669 = vsel %vm551, %v661, %v668
        %v670 = vrot.slane %v665, 4
        %v672 = vshrl.u32 %v532, 16
        %v674 = vrot.slane %v672, 7
        %v675 = vshll.u32 %v532, 16
        %v677 = vor.u32 %v674, %v675
        %v678 = vrot.slane %v674, 4
        %v680 = vshrl.u32 %v533, 16
        %v682 = vrot.slane %v680, 7
        %v683 = vshll.u32 %v533, 16
        %v685 = vor.u32 %v682, %v683
        %v686 = vsel %vm551, %v678, %v685
        %v687 = vrot.slane %v682, 4
        %v689 = vshrl.u32 %v534, 16
        %v691 = vrot.slane %v689, 7
        %v692 = vshll.u32 %v534, 16
        %v694 = vor.u32 %v691, %v692
        %v695 = vrot.slane %v691, 4
        %v697 = vshrl.u32 %v535, 16
        %v699 = vrot.slane %v697, 7
        %v700 = vshll.u32 %v535, 16
        %v702 = vor.u32 %v699, %v700
        %v703 = vsel %vm551, %v695, %v702
        %v704 = vrot.slane %v699, 4
        %v706 = vshrl.u32 %v536, 16
        %v708 = vrot.slane %v706, 7
        %v709 = vshll.u32 %v536, 16
        %v711 = vor.u32 %v708, %v709
        %v712 = vrot.slane %v708, 4
        %v714 = vshrl.u32 %v537, 16
        %v716 = vrot.slane %v714, 7
        %v717 = vshll.u32 %v537, 16
        %v719 = vor.u32 %v716, %v717
        %v720 = vsel %vm551, %v712, %v719
        %v721 = vrot.slane %v716, 4
        %v723 = vshrl.u32 %v538, 16
        %v725 = vrot.slane %v723, 7
        %v726 = vshll.u32 %v538, 16
        %v728 = vor.u32 %v725, %v726
        %v729 = vrot.slane %v725, 4
        %v731 = vshrl.u32 %v539, 16
        %v733 = vrot.slane %v731, 7
        %v734 = vshll.u32 %v539, 16
        %v736 = vor.u32 %v733, %v734
        %v737 = vsel %vm551, %v729, %v736
        %v738 = vrot.slane %v733, 4
        %v740 = vshrl.u32 %v540, 16
        %v742 = vrot.slane %v740, 7
        %v743 = vshll.u32 %v540, 16
        %v745 = vor.u32 %v742, %v743
        %v746 = vrot.slane %v742, 4
        %v748 = vshrl.u32 %v541, 16
        %v750 = vrot.slane %v748, 7
        %v751 = vshll.u32 %v541, 16
        %v753 = vor.u32 %v750, %v751
        %v754 = vsel %vm551, %v746, %v753
        %v755 = vrot.slane %v750, 4
        %v757 = vshrl.u32 %v542, 16
        %v759 = vrot.slane %v757, 7
        %v760 = vshll.u32 %v542, 16
        %v762 = vor.u32 %v759, %v760
        %v763 = vrot.slane %v759, 4
        %v765 = vshrl.u32 %v543, 16
        %v767 = vrot.slane %v765, 7
        %v768 = vshll.u32 %v543, 16
        %v770 = vor.u32 %v767, %v768
        %v771 = vsel %vm551, %v763, %v770
        %v772 = vrot.slane %v767, 4
        %v774 = vshrl.u32 %v544, 16
        %v776 = vrot.slane %v774, 7
        %v777 = vshll.u32 %v544, 16
        %v779 = vor.u32 %v776, %v777
        %v780 = vrot.slane %v776, 4
        %v782 = vshrl.u32 %v545, 16
        %v784 = vrot.slane %v782, 7
        %v785 = vshll.u32 %v545, 16
        %v787 = vor.u32 %v784, %v785
        %v788 = vsel %vm551, %v780, %v787
        %v789 = vrot.slane %v784, 4
        %v791 = vshrl.u32 %v546, 16
        %v793 = vrot.slane %v791, 7
        %v794 = vshll.u32 %v546, 16
        %v796 = vor.u32 %v793, %v794
        %v797 = vrot.slane %v793, 4
        %v799 = vshrl.u32 %v547, 16
        %v801 = vrot.slane %v799, 7
        %v802 = vshll.u32 %v547, 16
        %v804 = vor.u32 %v801, %v802
        %v805 = vsel %vm551, %v797, %v804
        %v806 = vrot.slane %v801, 4
        %v808 = vshrl.u32 %v548, 16
        %v810 = vrot.slane %v808, 7
        %v811 = vshll.u32 %v548, 16
        %v813 = vor.u32 %v810, %v811
        %v814 = vrot.slane %v810, 4
        %v816 = vshrl.u32 %v549, 16
        %v818 = vrot.slane %v816, 7
        %v819 = vshll.u32 %v549, 16
        %v821 = vor.u32 %v818, %v819
        %v822 = vsel %vm551, %v814, %v821
        %v823 = vrot.slane %v818, 4
        %v872 = vld [vmem:[%s306] sm:$0xf]
        %v873 = vsel %vm360, %v558, %v872
        %874 = vst [vmem:[%s306] sm:$0xf] %v873
        %875 = vst.msk [vmem:[%s306 + $0x4] sm:$0xf] %vm298, %v567
        %v876 = vld [vmem:[%s306 + $0x8] sm:$0x1]
        %v877 = vsel %vm309, %v568, %v876
        %878 = vst [vmem:[%s306 + $0x8] sm:$0x1] %v877
        %v879 = vld [vmem:[%s306 + $0xc] sm:$0xf]
        %v880 = vsel %vm360, %v575, %v879
        %881 = vst [vmem:[%s306 + $0xc] sm:$0xf] %v880
        %882 = vst.msk [vmem:[%s306 + $0x10] sm:$0xf] %vm298, %v584
        %v883 = vld [vmem:[%s306 + $0x14] sm:$0x1]
        %v884 = vsel %vm309, %v585, %v883
        %885 = vst [vmem:[%s306 + $0x14] sm:$0x1] %v884
        %v886 = vld [vmem:[%s306 + $0x18] sm:$0xf]
        %v887 = vsel %vm360, %v592, %v886
        %888 = vst [vmem:[%s306 + $0x18] sm:$0xf] %v887
        %889 = vst.msk [vmem:[%s306 + $0x1c] sm:$0xf] %vm298, %v601
        %v890 = vld [vmem:[%s306 + $0x20] sm:$0x1]
        %v891 = vsel %vm309, %v602, %v890
        %892 = vst [vmem:[%s306 + $0x20] sm:$0x1] %v891
        %v893 = vld [vmem:[%s306 + $0x24] sm:$0xf]
        %v894 = vsel %vm360, %v609, %v893
        %895 = vst [vmem:[%s306 + $0x24] sm:$0xf] %v894
        %896 = vst.msk [vmem:[%s306 + $0x28] sm:$0xf] %vm298, %v618
        %v897 = vld [vmem:[%s306 + $0x2c] sm:$0x1]
        %v898 = vsel %vm309, %v619, %v897
        %899 = vst [vmem:[%s306 + $0x2c] sm:$0x1] %v898
        %v900 = vld [vmem:[%s306 + $0x30] sm:$0xf]
        %v901 = vsel %vm360, %v626, %v900
        %902 = vst [vmem:[%s306 + $0x30] sm:$0xf] %v901
        %903 = vst.msk [vmem:[%s306 + $0x34] sm:$0xf] %vm298, %v635
        %v904 = vld [vmem:[%s306 + $0x38] sm:$0x1]
        %v905 = vsel %vm309, %v636, %v904
        %906 = vst [vmem:[%s306 + $0x38] sm:$0x1] %v905
        %v907 = vld [vmem:[%s306 + $0x3c] sm:$0xf]
        %v908 = vsel %vm360, %v643, %v907
        %909 = vst [vmem:[%s306 + $0x3c] sm:$0xf] %v908
        %910 = vst.msk [vmem:[%s306 + $0x40] sm:$0xf] %vm298, %v652
        %v911 = vld [vmem:[%s306 + $0x44] sm:$0x1]
        %v912 = vsel %vm309, %v653, %v911
        %913 = vst [vmem:[%s306 + $0x44] sm:$0x1] %v912
        %v914 = vld [vmem:[%s306 + $0x48] sm:$0xf]
        %v915 = vsel %vm360, %v660, %v914
        %916 = vst [vmem:[%s306 + $0x48] sm:$0xf] %v915
        %917 = vst.msk [vmem:[%s306 + $0x4c] sm:$0xf] %vm298, %v669
        %v918 = vld [vmem:[%s306 + $0x50] sm:$0x1]
        %v919 = vsel %vm309, %v670, %v918
        %920 = vst [vmem:[%s306 + $0x50] sm:$0x1] %v919
        %v921 = vld [vmem:[%s306 + $0x54] sm:$0xf]
        %v922 = vsel %vm360, %v677, %v921
        %923 = vst [vmem:[%s306 + $0x54] sm:$0xf] %v922
        %924 = vst.msk [vmem:[%s306 + $0x58] sm:$0xf] %vm298, %v686
        %v925 = vld [vmem:[%s306 + $0x5c] sm:$0x1]
        %v926 = vsel %vm309, %v687, %v925
        %927 = vst [vmem:[%s306 + $0x5c] sm:$0x1] %v926
        %v928 = vld [vmem:[%s306 + $0x60] sm:$0xf]
        %v929 = vsel %vm360, %v694, %v928
        %930 = vst [vmem:[%s306 + $0x60] sm:$0xf] %v929
        %931 = vst.msk [vmem:[%s306 + $0x64] sm:$0xf] %vm298, %v703
        %v932 = vld [vmem:[%s306 + $0x68] sm:$0x1]
        %v933 = vsel %vm309, %v704, %v932
        %934 = vst [vmem:[%s306 + $0x68] sm:$0x1] %v933
        %v935 = vld [vmem:[%s306 + $0x6c] sm:$0xf]
        %v936 = vsel %vm360, %v711, %v935
        %937 = vst [vmem:[%s306 + $0x6c] sm:$0xf] %v936
        %938 = vst.msk [vmem:[%s306 + $0x70] sm:$0xf] %vm298, %v720
        %v939 = vld [vmem:[%s306 + $0x74] sm:$0x1]
        %v940 = vsel %vm309, %v721, %v939
        %941 = vst [vmem:[%s306 + $0x74] sm:$0x1] %v940
        %v942 = vld [vmem:[%s306 + $0x78] sm:$0xf]
        %v943 = vsel %vm360, %v728, %v942
        %944 = vst [vmem:[%s306 + $0x78] sm:$0xf] %v943
        %945 = vst.msk [vmem:[%s306 + $0x7c] sm:$0xf] %vm298, %v737
        %v946 = vld [vmem:[%s306 + $0x80] sm:$0x1]
        %v947 = vsel %vm309, %v738, %v946
        %948 = vst [vmem:[%s306 + $0x80] sm:$0x1] %v947
        %v949 = vld [vmem:[%s306 + $0x84] sm:$0xf]
        %v950 = vsel %vm360, %v745, %v949
        %951 = vst [vmem:[%s306 + $0x84] sm:$0xf] %v950
        %952 = vst.msk [vmem:[%s306 + $0x88] sm:$0xf] %vm298, %v754
        %v953 = vld [vmem:[%s306 + $0x8c] sm:$0x1]
        %v954 = vsel %vm309, %v755, %v953
        %955 = vst [vmem:[%s306 + $0x8c] sm:$0x1] %v954
        %v956 = vld [vmem:[%s306 + $0x90] sm:$0xf]
        %v957 = vsel %vm360, %v762, %v956
        %958 = vst [vmem:[%s306 + $0x90] sm:$0xf] %v957
        %959 = vst.msk [vmem:[%s306 + $0x94] sm:$0xf] %vm298, %v771
        %v960 = vld [vmem:[%s306 + $0x98] sm:$0x1]
        %v961 = vsel %vm309, %v772, %v960
        %962 = vst [vmem:[%s306 + $0x98] sm:$0x1] %v961
        %v963 = vld [vmem:[%s306 + $0x9c] sm:$0xf]
        %v964 = vsel %vm360, %v779, %v963
        %965 = vst [vmem:[%s306 + $0x9c] sm:$0xf] %v964
        %966 = vst.msk [vmem:[%s306 + $0xa0] sm:$0xf] %vm298, %v788
        %v967 = vld [vmem:[%s306 + $0xa4] sm:$0x1]
        %v968 = vsel %vm309, %v789, %v967
        %969 = vst [vmem:[%s306 + $0xa4] sm:$0x1] %v968
        %v970 = vld [vmem:[%s306 + $0xa8] sm:$0xf]
        %v971 = vsel %vm360, %v796, %v970
        %972 = vst [vmem:[%s306 + $0xa8] sm:$0xf] %v971
        %973 = vst.msk [vmem:[%s306 + $0xac] sm:$0xf] %vm298, %v805
        %v974 = vld [vmem:[%s306 + $0xb0] sm:$0x1]
        %v975 = vsel %vm309, %v806, %v974
        %976 = vst [vmem:[%s306 + $0xb0] sm:$0x1] %v975
        %v977 = vld [vmem:[%s306 + $0xb4] sm:$0xf]
        %v978 = vsel %vm360, %v813, %v977
        %979 = vst [vmem:[%s306 + $0xb4] sm:$0xf] %v978
        %980 = vst.msk [vmem:[%s306 + $0xb8] sm:$0xf] %vm298, %v822
        %v981 = vld [vmem:[%s306 + $0xbc] sm:$0x1]
        %v982 = vsel %vm309, %v823, %v981
        %983 = vst [vmem:[%s306 + $0xbc] sm:$0x1] %v982
        %v984 = vunpack.c.l.bf16 %v518
        %v985 = vunpack.c.l.bf16 %v519
        %v986 = vunpack.c.l.bf16 %v520
        %v987 = vunpack.c.l.bf16 %v521
        %v988 = vunpack.c.l.bf16 %v522
        %v989 = vunpack.c.l.bf16 %v523
        %v990 = vunpack.c.l.bf16 %v524
        %v991 = vunpack.c.l.bf16 %v525
        %v992 = vunpack.c.l.bf16 %v526
        %v993 = vunpack.c.l.bf16 %v527
        %v994 = vunpack.c.l.bf16 %v528
        %v995 = vunpack.c.l.bf16 %v529
        %v996 = vunpack.c.l.bf16 %v530
        %v997 = vunpack.c.l.bf16 %v531
        %v998 = vunpack.c.l.bf16 %v532
        %v999 = vunpack.c.l.bf16 %v533
        %v1000 = vunpack.c.l.bf16 %v534
        %v1001 = vunpack.c.l.bf16 %v535
        %v1002 = vunpack.c.l.bf16 %v536
        %v1003 = vunpack.c.l.bf16 %v537
        %v1004 = vunpack.c.l.bf16 %v538
        %v1005 = vunpack.c.l.bf16 %v539
        %v1006 = vunpack.c.l.bf16 %v540
        %v1007 = vunpack.c.l.bf16 %v541
        %v1008 = vunpack.c.l.bf16 %v542
        %v1009 = vunpack.c.l.bf16 %v543
        %v1010 = vunpack.c.l.bf16 %v544
        %v1011 = vunpack.c.l.bf16 %v545
        %v1012 = vunpack.c.l.bf16 %v546
        %v1013 = vunpack.c.l.bf16 %v547
        %v1014 = vunpack.c.l.bf16 %v548
        %v1015 = vunpack.c.l.bf16 %v549
        %v1016 = vld [vmem:[%s261] sm:$0xf]
        %v1017 = vld [vmem:[%s261 + $0x4] sm:$0xf]
        %v1018 = vld [vmem:[%s261 + $0x8] sm:$0xf]
        %v1019 = vld [vmem:[%s261 + $0xc] sm:$0xf]
        %v1020 = vld [vmem:[%s261 + $0x10] sm:$0xf]
        %v1021 = vld [vmem:[%s261 + $0x14] sm:$0xf]
        %v1022 = vld [vmem:[%s261 + $0x18] sm:$0xf]
        %v1023 = vld [vmem:[%s261 + $0x1c] sm:$0xf]
        %v1024 = vld [vmem:[%s261 + $0x20] sm:$0xf]
        %v1025 = vld [vmem:[%s261 + $0x24] sm:$0xf]
        %v1026 = vld [vmem:[%s261 + $0x28] sm:$0xf]
        %v1027 = vld [vmem:[%s261 + $0x2c] sm:$0xf]
        %v1028 = vld [vmem:[%s261 + $0x30] sm:$0xf]
        %v1029 = vld [vmem:[%s261 + $0x34] sm:$0xf]
        %v1030 = vld [vmem:[%s261 + $0x38] sm:$0xf]
        %v1031 = vld [vmem:[%s261 + $0x3c] sm:$0xf]
        %v1032 = vld [vmem:[%s261 + $0x40] sm:$0xf]
        %v1033 = vld [vmem:[%s261 + $0x44] sm:$0xf]
        %v1034 = vld [vmem:[%s261 + $0x48] sm:$0xf]
        %v1035 = vld [vmem:[%s261 + $0x4c] sm:$0xf]
        %v1036 = vld [vmem:[%s261 + $0x50] sm:$0xf]
        %v1037 = vld [vmem:[%s261 + $0x54] sm:$0xf]
        %v1038 = vld [vmem:[%s261 + $0x58] sm:$0xf]
        %v1039 = vld [vmem:[%s261 + $0x5c] sm:$0xf]
        %v1040 = vld [vmem:[%s261 + $0x60] sm:$0xf]
        %v1041 = vld [vmem:[%s261 + $0x64] sm:$0xf]
        %v1042 = vld [vmem:[%s261 + $0x68] sm:$0xf]
        %v1043 = vld [vmem:[%s261 + $0x6c] sm:$0xf]
        %v1044 = vld [vmem:[%s261 + $0x70] sm:$0xf]
        %v1045 = vld [vmem:[%s261 + $0x74] sm:$0xf]
        %v1046 = vld [vmem:[%s261 + $0x78] sm:$0xf]
        %v1047 = vld [vmem:[%s261 + $0x7c] sm:$0xf]
        %v1048 = vunpack.c.l.bf16 %v1016
        %v1049 = vunpack.c.l.bf16 %v1017
        %v1050 = vunpack.c.l.bf16 %v1018
        %v1051 = vunpack.c.l.bf16 %v1019
        %v1052 = vunpack.c.l.bf16 %v1020
        %v1053 = vunpack.c.l.bf16 %v1021
        %v1054 = vunpack.c.l.bf16 %v1022
        %v1055 = vunpack.c.l.bf16 %v1023
        %v1056 = vunpack.c.l.bf16 %v1024
        %v1057 = vunpack.c.l.bf16 %v1025
        %v1058 = vunpack.c.l.bf16 %v1026
        %v1059 = vunpack.c.l.bf16 %v1027
        %v1060 = vunpack.c.l.bf16 %v1028
        %v1061 = vunpack.c.l.bf16 %v1029
        %v1062 = vunpack.c.l.bf16 %v1030
        %v1063 = vunpack.c.l.bf16 %v1031
        %v1064 = vunpack.c.l.bf16 %v1032
        %v1065 = vunpack.c.l.bf16 %v1033
        %v1066 = vunpack.c.l.bf16 %v1034
        %v1067 = vunpack.c.l.bf16 %v1035
        %v1068 = vunpack.c.l.bf16 %v1036
        %v1069 = vunpack.c.l.bf16 %v1037
        %v1070 = vunpack.c.l.bf16 %v1038
        %v1071 = vunpack.c.l.bf16 %v1039
        %v1072 = vunpack.c.l.bf16 %v1040
        %v1073 = vunpack.c.l.bf16 %v1041
        %v1074 = vunpack.c.l.bf16 %v1042
        %v1075 = vunpack.c.l.bf16 %v1043
        %v1076 = vunpack.c.l.bf16 %v1044
        %v1077 = vunpack.c.l.bf16 %v1045
        %v1078 = vunpack.c.l.bf16 %v1046
        %v1079 = vunpack.c.l.bf16 %v1047
        %v1080 = vld [vmem:[%s4] sm:$0x1]
        %v1081 = vld [vmem:[#allocation2] sm:$0xf]
        %v1082 = vld [vmem:[#allocation2 + $0x4] sm:$0xf]
        %v1083 = vld [vmem:[#allocation2 + $0x8] sm:$0xf]
        %v1084 = vld [vmem:[#allocation2 + $0xc] sm:$0xf]
        %v1085 = vld [vmem:[#allocation2 + $0x10] sm:$0xf]
        %v1086 = vld [vmem:[#allocation2 + $0x14] sm:$0xf]
        %v1087 = vld [vmem:[#allocation2 + $0x18] sm:$0xf]
        %v1088 = vld [vmem:[#allocation2 + $0x1c] sm:$0xf]
        %v1089 = vld [vmem:[#allocation2 + $0x20] sm:$0xf]
        %v1090 = vld [vmem:[#allocation2 + $0x24] sm:$0xf]
        %v1091 = vld [vmem:[#allocation2 + $0x28] sm:$0xf]
        %v1092 = vld [vmem:[#allocation2 + $0x2c] sm:$0xf]
        %v1093 = vld [vmem:[#allocation2 + $0x30] sm:$0xf]
        %v1094 = vld [vmem:[#allocation2 + $0x34] sm:$0xf]
        %v1095 = vld [vmem:[#allocation2 + $0x38] sm:$0xf]
        %v1096 = vld [vmem:[#allocation2 + $0x3c] sm:$0xf]
        %v1097 = vld [vmem:[#allocation2 + $0x40] sm:$0xf]
        %v1098 = vld [vmem:[#allocation2 + $0x44] sm:$0xf]
        %v1099 = vld [vmem:[#allocation2 + $0x48] sm:$0xf]
        %v1100 = vld [vmem:[#allocation2 + $0x4c] sm:$0xf]
        %v1101 = vld [vmem:[#allocation2 + $0x50] sm:$0xf]
        %v1102 = vld [vmem:[#allocation2 + $0x54] sm:$0xf]
        %v1103 = vld [vmem:[#allocation2 + $0x58] sm:$0xf]
        %v1104 = vld [vmem:[#allocation2 + $0x5c] sm:$0xf]
        %v1105 = vld [vmem:[#allocation2 + $0x60] sm:$0xf]
        %v1106 = vld [vmem:[#allocation2 + $0x64] sm:$0xf]
        %v1107 = vld [vmem:[#allocation2 + $0x68] sm:$0xf]
        %v1108 = vld [vmem:[#allocation2 + $0x6c] sm:$0xf]
        %v1109 = vld [vmem:[#allocation2 + $0x70] sm:$0xf]
        %v1110 = vld [vmem:[#allocation2 + $0x74] sm:$0xf]
        %v1111 = vld [vmem:[#allocation2 + $0x78] sm:$0xf]
        %v1112 = vld [vmem:[#allocation2 + $0x7c] sm:$0xf]
        %v1113 = vld [vmem:[#allocation2 + $0x80] sm:$0xf]
        %v1114 = vld [vmem:[#allocation2 + $0x84] sm:$0xf]
        %v1115 = vld [vmem:[#allocation2 + $0x88] sm:$0xf]
        %v1116 = vld [vmem:[#allocation2 + $0x8c] sm:$0xf]
        %v1117 = vld [vmem:[#allocation2 + $0x90] sm:$0xf]
        %v1118 = vld [vmem:[#allocation2 + $0x94] sm:$0xf]
        %v1119 = vld [vmem:[#allocation2 + $0x98] sm:$0xf]
        %v1120 = vld [vmem:[#allocation2 + $0x9c] sm:$0xf]
        %v1121 = vld [vmem:[#allocation2 + $0xa0] sm:$0xf]
        %v1122 = vld [vmem:[#allocation2 + $0xa4] sm:$0xf]
        %v1123 = vld [vmem:[#allocation2 + $0xa8] sm:$0xf]
        %v1124 = vld [vmem:[#allocation2 + $0xac] sm:$0xf]
        %v1125 = vld [vmem:[#allocation2 + $0xb0] sm:$0xf]
        %v1126 = vld [vmem:[#allocation2 + $0xb4] sm:$0xf]
        %v1127 = vld [vmem:[#allocation2 + $0xb8] sm:$0xf]
        %v1128 = vld [vmem:[#allocation2 + $0xbc] sm:$0xf]
        %v1129 = vld [vmem:[#allocation2 + $0xc0] sm:$0xf]
        %v1130 = vld [vmem:[#allocation2 + $0xc4] sm:$0xf]
        %v1131 = vld [vmem:[#allocation2 + $0xc8] sm:$0xf]
        %v1132 = vld [vmem:[#allocation2 + $0xcc] sm:$0xf]
        %v1133 = vld [vmem:[#allocation2 + $0xd0] sm:$0xf]
        %v1134 = vld [vmem:[#allocation2 + $0xd4] sm:$0xf]
        %v1135 = vld [vmem:[#allocation9] sm:$0xf]
        %v1136 = vld [vmem:[#allocation9 + $0x4] sm:$0xf]
        %v1137 = vld [vmem:[#allocation9 + $0x8] sm:$0xf]
        %v1138 = vld [vmem:[#allocation9 + $0xc] sm:$0xf]
        %v1139 = vld [vmem:[#allocation9 + $0x10] sm:$0xf]
        %v1140 = vld [vmem:[#allocation9 + $0x14] sm:$0xf]
        %v1141 = vld [vmem:[#allocation9 + $0x18] sm:$0xf]
        %v1142 = vld [vmem:[#allocation9 + $0x1c] sm:$0xf]
        %v1143 = vld [vmem:[#allocation9 + $0x20] sm:$0xf]
        %v1144 = vld [vmem:[#allocation9 + $0x24] sm:$0xf]
        %v1145 = vld [vmem:[#allocation9 + $0x28] sm:$0xf]
        %v1146 = vld [vmem:[#allocation9 + $0x2c] sm:$0xf]
        %v1147 = vld [vmem:[#allocation9 + $0x30] sm:$0xf]
        %v1148 = vld [vmem:[#allocation9 + $0x34] sm:$0xf]
        %v1149 = vld [vmem:[#allocation9 + $0x38] sm:$0xf]
        %v1150 = vld [vmem:[#allocation9 + $0x3c] sm:$0xf]
        %v1151 = vld [vmem:[#allocation9 + $0x40] sm:$0xf]
        %v1152 = vld [vmem:[#allocation9 + $0x44] sm:$0xf]
        %v1153 = vld [vmem:[#allocation9 + $0x48] sm:$0xf]
        %v1154 = vld [vmem:[#allocation9 + $0x4c] sm:$0xf]
        %v1155 = vld [vmem:[#allocation9 + $0x50] sm:$0xf]
        %v1156 = vld [vmem:[#allocation9 + $0x54] sm:$0xf]
        %v1157 = vld [vmem:[#allocation9 + $0x58] sm:$0xf]
        %v1158 = vld [vmem:[#allocation9 + $0x5c] sm:$0xf]
        %v1159 = vld [vmem:[#allocation9 + $0x60] sm:$0xf]
        %v1160 = vld [vmem:[#allocation9 + $0x64] sm:$0xf]
        %v1161 = vld [vmem:[#allocation9 + $0x68] sm:$0xf]
        %v1162 = vld [vmem:[#allocation9 + $0x6c] sm:$0xf]
        %v1163 = vld [vmem:[#allocation9 + $0x70] sm:$0xf]
        %v1164 = vld [vmem:[#allocation9 + $0x74] sm:$0xf]
        %v1165 = vld [vmem:[#allocation9 + $0x78] sm:$0xf]
        %v1166 = vld [vmem:[#allocation9 + $0x7c] sm:$0xf]
        %v1167 = vld [vmem:[#allocation9 + $0x80] sm:$0xf]
        %v1168 = vld [vmem:[#allocation9 + $0x84] sm:$0xf]
        %v1169 = vld [vmem:[#allocation9 + $0x88] sm:$0xf]
        %v1170 = vld [vmem:[#allocation9 + $0x8c] sm:$0xf]
        %v1171 = vld [vmem:[#allocation9 + $0x90] sm:$0xf]
        %v1172 = vld [vmem:[#allocation9 + $0x94] sm:$0xf]
        %v1173 = vld [vmem:[#allocation9 + $0x98] sm:$0xf]
        %v1174 = vld [vmem:[#allocation9 + $0x9c] sm:$0xf]
        %v1175 = vld [vmem:[#allocation9 + $0xa0] sm:$0xf]
        %v1176 = vld [vmem:[#allocation9 + $0xa4] sm:$0xf]
        %v1177 = vld [vmem:[#allocation9 + $0xa8] sm:$0xf]
        %v1178 = vld [vmem:[#allocation9 + $0xac] sm:$0xf]
        %v1179 = vld [vmem:[#allocation9 + $0xb0] sm:$0xf]
        %v1180 = vld [vmem:[#allocation9 + $0xb4] sm:$0xf]
        %v1181 = vld [vmem:[#allocation9 + $0xb8] sm:$0xf]
        %v1182 = vld [vmem:[#allocation9 + $0xbc] sm:$0xf]
        %v1183 = vld [vmem:[#allocation9 + $0xc0] sm:$0xf]
        %v1184 = vld [vmem:[#allocation9 + $0xc4] sm:$0xf]
        %v1185 = vld [vmem:[#allocation9 + $0xc8] sm:$0xf]
        %v1186 = vld [vmem:[#allocation9 + $0xcc] sm:$0xf]
        %v1187 = vld [vmem:[#allocation9 + $0xd0] sm:$0xf]
        %v1188 = vld [vmem:[#allocation9 + $0xd4] sm:$0xf]
        %v1189 = vld [vmem:[#allocation9 + $0xd8] sm:$0xf]
        %v1190 = vld [vmem:[#allocation9 + $0xdc] sm:$0xf]
        %v1191 = vld [vmem:[#allocation9 + $0xe0] sm:$0xf]
        %v1192 = vld [vmem:[#allocation9 + $0xe4] sm:$0xf]
        %v1193 = vld [vmem:[#allocation9 + $0xe8] sm:$0xf]
        %v1194 = vld [vmem:[#allocation9 + $0xec] sm:$0xf]
        %v1195 = vld [vmem:[#allocation9 + $0xf0] sm:$0xf]
        %v1196 = vld [vmem:[#allocation9 + $0xf4] sm:$0xf]
        %v1197 = vld [vmem:[#allocation9 + $0xf8] sm:$0xf]
        %v1198 = vld [vmem:[#allocation9 + $0xfc] sm:$0xf]
        %v1199 = vld [vmem:[#allocation9 + $0x100] sm:$0xf]
        %v1200 = vld [vmem:[#allocation9 + $0x104] sm:$0xf]
        %v1201 = vld [vmem:[#allocation9 + $0x108] sm:$0xf]
        %v1202 = vld [vmem:[#allocation9 + $0x10c] sm:$0xf]
        %v1203 = vld [vmem:[#allocation9 + $0x110] sm:$0xf]
        %v1204 = vld [vmem:[#allocation9 + $0x114] sm:$0xf]
        %v1205 = vld [vmem:[#allocation9 + $0x118] sm:$0xf]
        %v1206 = vld [vmem:[#allocation9 + $0x11c] sm:$0xf]
        %v1239 = vunpack.c.l.b16 %v1081
        %v1240 = vunpack.c.l.b16 %v1082
        %v1241 = vunpack.c.l.b16 %v1084
        %v1242 = vunpack.c.l.b16 %v1085
        %v1243 = vunpack.c.l.b16 %v1087
        %v1244 = vunpack.c.l.b16 %v1088
        %v1245 = vunpack.c.l.b16 %v1090
        %v1246 = vunpack.c.l.b16 %v1091
        %v1247 = vunpack.c.l.b16 %v1093
        %v1248 = vunpack.c.l.b16 %v1094
        %v1249 = vunpack.c.l.b16 %v1096
        %v1250 = vunpack.c.l.b16 %v1097
        %v1251 = vunpack.c.l.b16 %v1099
        %v1252 = vunpack.c.l.b16 %v1100
        %v1253 = vunpack.c.l.b16 %v1102
        %v1254 = vunpack.c.l.b16 %v1103
        %v1255 = vunpack.c.l.b16 %v1105
        %v1256 = vunpack.c.l.b16 %v1106
        %v1257 = vunpack.c.l.b16 %v1108
        %v1258 = vunpack.c.l.b16 %v1109
        %v1259 = vunpack.c.l.b16 %v1111
        %v1260 = vunpack.c.l.b16 %v1112
        %v1261 = vunpack.c.l.b16 %v1114
        %v1262 = vunpack.c.l.b16 %v1115
        %v1263 = vunpack.c.l.b16 %v1117
        %v1264 = vunpack.c.l.b16 %v1118
        %v1265 = vunpack.c.l.b16 %v1120
        %v1266 = vunpack.c.l.b16 %v1121
        %v1267 = vunpack.c.l.b16 %v1123
        %v1268 = vunpack.c.l.b16 %v1124
        %v1269 = vunpack.c.l.b16 %v1126
        %v1270 = vunpack.c.l.b16 %v1127
        %v1271 = vpack.c.b16 %v1240, %v1239
        %v1272 = vpack.c.b16 %v1242, %v1241
        %v1273 = vpack.c.b16 %v1244, %v1243
        %v1274 = vpack.c.b16 %v1246, %v1245
        %v1275 = vpack.c.b16 %v1248, %v1247
        %v1276 = vpack.c.b16 %v1250, %v1249
        %v1277 = vpack.c.b16 %v1252, %v1251
        %v1278 = vpack.c.b16 %v1254, %v1253
        %v1279 = vpack.c.b16 %v1256, %v1255
        %v1280 = vpack.c.b16 %v1258, %v1257
        %v1281 = vpack.c.b16 %v1260, %v1259
        %v1282 = vpack.c.b16 %v1262, %v1261
        %v1283 = vpack.c.b16 %v1264, %v1263
        %v1284 = vpack.c.b16 %v1266, %v1265
        %v1285 = vpack.c.b16 %v1268, %v1267
        %v1286 = vpack.c.b16 %v1270, %v1269
        %v1303 = vunpack.c.l.b16 %v1083
        %v1304 = vunpack.c.l.b16 %v1086
        %v1305 = vunpack.c.l.b16 %v1089
        %v1306 = vunpack.c.l.b16 %v1092
        %v1307 = vunpack.c.l.b16 %v1095
        %v1308 = vunpack.c.l.b16 %v1098
        %v1309 = vunpack.c.l.b16 %v1101
        %v1310 = vunpack.c.l.b16 %v1104
        %v1311 = vunpack.c.l.b16 %v1107
        %v1312 = vunpack.c.l.b16 %v1110
        %v1313 = vunpack.c.l.b16 %v1113
        %v1314 = vunpack.c.l.b16 %v1116
        %v1315 = vunpack.c.l.b16 %v1119
        %v1316 = vunpack.c.l.b16 %v1122
        %v1317 = vunpack.c.l.b16 %v1125
        %v1318 = vunpack.c.l.b16 %v1128
        %v1319 = vpack.c.b16 %v1303, %v1303
        %v1320 = vpack.c.b16 %v1304, %v1304
        %v1321 = vpack.c.b16 %v1305, %v1305
        %v1322 = vpack.c.b16 %v1306, %v1306
        %v1323 = vpack.c.b16 %v1307, %v1307
        %v1324 = vpack.c.b16 %v1308, %v1308
        %v1325 = vpack.c.b16 %v1309, %v1309
        %v1326 = vpack.c.b16 %v1310, %v1310
        %v1327 = vpack.c.b16 %v1311, %v1311
        %v1328 = vpack.c.b16 %v1312, %v1312
        %v1329 = vpack.c.b16 %v1313, %v1313
        %v1330 = vpack.c.b16 %v1314, %v1314
        %v1331 = vpack.c.b16 %v1315, %v1315
        %v1332 = vpack.c.b16 %v1316, %v1316
        %v1333 = vpack.c.b16 %v1317, %v1317
        %v1334 = vpack.c.b16 %v1318, %v1318
        %vm1335 = vsmask.f32 7424
        %v1337 = vshrl.u32 %v1271, 16
        %v1339 = vshll.u32 %v1271, 16
        %v1341 = vrot.slane %v1339, 1
        %v1342 = vor.u32 %v1337, %v1341
        %v1344 = vshll.u32 %v1319, 16
        %v1346 = vrot.slane %v1344, 1
        %v1347 = vsel %vm1335, %v1342, %v1346
        %v1349 = vshrl.u32 %v1272, 16
        %v1351 = vshll.u32 %v1272, 16
        %v1353 = vrot.slane %v1351, 1
        %v1354 = vor.u32 %v1349, %v1353
        %v1356 = vshll.u32 %v1320, 16
        %v1358 = vrot.slane %v1356, 1
        %v1359 = vsel %vm1335, %v1354, %v1358
        %v1361 = vshrl.u32 %v1273, 16
        %v1363 = vshll.u32 %v1273, 16
        %v1365 = vrot.slane %v1363, 1
        %v1366 = vor.u32 %v1361, %v1365
        %v1368 = vshll.u32 %v1321, 16
        %v1370 = vrot.slane %v1368, 1
        %v1371 = vsel %vm1335, %v1366, %v1370
        %v1373 = vshrl.u32 %v1274, 16
        %v1375 = vshll.u32 %v1274, 16
        %v1377 = vrot.slane %v1375, 1
        %v1378 = vor.u32 %v1373, %v1377
        %v1380 = vshll.u32 %v1322, 16
        %v1382 = vrot.slane %v1380, 1
        %v1383 = vsel %vm1335, %v1378, %v1382
        %v1385 = vshrl.u32 %v1275, 16
        %v1387 = vshll.u32 %v1275, 16
        %v1389 = vrot.slane %v1387, 1
        %v1390 = vor.u32 %v1385, %v1389
        %v1392 = vshll.u32 %v1323, 16
        %v1394 = vrot.slane %v1392, 1
        %v1395 = vsel %vm1335, %v1390, %v1394
        %v1397 = vshrl.u32 %v1276, 16
        %v1399 = vshll.u32 %v1276, 16
        %v1401 = vrot.slane %v1399, 1
        %v1402 = vor.u32 %v1397, %v1401
        %v1404 = vshll.u32 %v1324, 16
        %v1406 = vrot.slane %v1404, 1
        %v1407 = vsel %vm1335, %v1402, %v1406
        %v1409 = vshrl.u32 %v1277, 16
        %v1411 = vshll.u32 %v1277, 16
        %v1413 = vrot.slane %v1411, 1
        %v1414 = vor.u32 %v1409, %v1413
        %v1416 = vshll.u32 %v1325, 16
        %v1418 = vrot.slane %v1416, 1
        %v1419 = vsel %vm1335, %v1414, %v1418
        %v1421 = vshrl.u32 %v1278, 16
        %v1423 = vshll.u32 %v1278, 16
        %v1425 = vrot.slane %v1423, 1
        %v1426 = vor.u32 %v1421, %v1425
        %v1428 = vshll.u32 %v1326, 16
        %v1430 = vrot.slane %v1428, 1
        %v1431 = vsel %vm1335, %v1426, %v1430
        %v1433 = vshrl.u32 %v1279, 16
        %v1435 = vshll.u32 %v1279, 16
        %v1437 = vrot.slane %v1435, 1
        %v1438 = vor.u32 %v1433, %v1437
        %v1440 = vshll.u32 %v1327, 16
        %v1442 = vrot.slane %v1440, 1
        %v1443 = vsel %vm1335, %v1438, %v1442
        %v1445 = vshrl.u32 %v1280, 16
        %v1447 = vshll.u32 %v1280, 16
        %v1449 = vrot.slane %v1447, 1
        %v1450 = vor.u32 %v1445, %v1449
        %v1452 = vshll.u32 %v1328, 16
        %v1454 = vrot.slane %v1452, 1
        %v1455 = vsel %vm1335, %v1450, %v1454
        %v1457 = vshrl.u32 %v1281, 16
        %v1459 = vshll.u32 %v1281, 16
        %v1461 = vrot.slane %v1459, 1
        %v1462 = vor.u32 %v1457, %v1461
        %v1464 = vshll.u32 %v1329, 16
        %v1466 = vrot.slane %v1464, 1
        %v1467 = vsel %vm1335, %v1462, %v1466
        %v1469 = vshrl.u32 %v1282, 16
        %v1471 = vshll.u32 %v1282, 16
        %v1473 = vrot.slane %v1471, 1
        %v1474 = vor.u32 %v1469, %v1473
        %v1476 = vshll.u32 %v1330, 16
        %v1478 = vrot.slane %v1476, 1
        %v1479 = vsel %vm1335, %v1474, %v1478
        %v1481 = vshrl.u32 %v1283, 16
        %v1483 = vshll.u32 %v1283, 16
        %v1485 = vrot.slane %v1483, 1
        %v1486 = vor.u32 %v1481, %v1485
        %v1488 = vshll.u32 %v1331, 16
        %v1490 = vrot.slane %v1488, 1
        %v1491 = vsel %vm1335, %v1486, %v1490
        %v1493 = vshrl.u32 %v1284, 16
        %v1495 = vshll.u32 %v1284, 16
        %v1497 = vrot.slane %v1495, 1
        %v1498 = vor.u32 %v1493, %v1497
        %v1500 = vshll.u32 %v1332, 16
        %v1502 = vrot.slane %v1500, 1
        %v1503 = vsel %vm1335, %v1498, %v1502
        %v1505 = vshrl.u32 %v1285, 16
        %v1507 = vshll.u32 %v1285, 16
        %v1509 = vrot.slane %v1507, 1
        %v1510 = vor.u32 %v1505, %v1509
        %v1512 = vshll.u32 %v1333, 16
        %v1514 = vrot.slane %v1512, 1
        %v1515 = vsel %vm1335, %v1510, %v1514
        %v1517 = vshrl.u32 %v1286, 16
        %v1519 = vshll.u32 %v1286, 16
        %v1521 = vrot.slane %v1519, 1
        %v1522 = vor.u32 %v1517, %v1521
        %v1524 = vshll.u32 %v1334, 16
        %v1526 = vrot.slane %v1524, 1
        %v1527 = vsel %vm1335, %v1522, %v1526
        %1528 = vrot.lane.b32.xlu0 %v1347, 64
        %v1529 = vpop.permute.xlu0 %1528
        %1530 = vrot.lane.b32.xlu0 %v1359, 64
        %v1531 = vpop.permute.xlu0 %1530
        %1532 = vrot.lane.b32.xlu0 %v1371, 64
        %v1533 = vpop.permute.xlu0 %1532
        %1534 = vrot.lane.b32.xlu0 %v1383, 64
        %v1535 = vpop.permute.xlu0 %1534
        %1536 = vrot.lane.b32.xlu0 %v1395, 64
        %v1537 = vpop.permute.xlu0 %1536
        %1538 = vrot.lane.b32.xlu0 %v1407, 64
        %v1539 = vpop.permute.xlu0 %1538
        %1540 = vrot.lane.b32.xlu0 %v1419, 64
        %v1541 = vpop.permute.xlu0 %1540
        %1542 = vrot.lane.b32.xlu0 %v1431, 64
        %v1543 = vpop.permute.xlu0 %1542
        %1544 = vrot.lane.b32.xlu0 %v1443, 64
        %v1545 = vpop.permute.xlu0 %1544
        %1546 = vrot.lane.b32.xlu0 %v1455, 64
        %v1547 = vpop.permute.xlu0 %1546
        %1548 = vrot.lane.b32.xlu0 %v1467, 64
        %v1549 = vpop.permute.xlu0 %1548
        %1550 = vrot.lane.b32.xlu0 %v1479, 64
        %v1551 = vpop.permute.xlu0 %1550
        %1552 = vrot.lane.b32.xlu0 %v1491, 64
        %v1553 = vpop.permute.xlu0 %1552
        %1554 = vrot.lane.b32.xlu0 %v1503, 64
        %v1555 = vpop.permute.xlu0 %1554
        %1556 = vrot.lane.b32.xlu0 %v1515, 64
        %v1557 = vpop.permute.xlu0 %1556
        %1558 = vrot.lane.b32.xlu0 %v1527, 64
        %v1559 = vpop.permute.xlu0 %1558
        %vm1560 = vcmask 1046528
        %v1561 = vrot.slane %v1271, 1
        %v1562 = vrot.slane %v1319, 1
        %v1563 = vsel %vm1560, %v1561, %v1562
        %v1564 = vrot.slane %v1272, 1
        %v1565 = vrot.slane %v1320, 1
        %v1566 = vsel %vm1560, %v1564, %v1565
        %v1567 = vrot.slane %v1273, 1
        %v1568 = vrot.slane %v1321, 1
        %v1569 = vsel %vm1560, %v1567, %v1568
        %v1570 = vrot.slane %v1274, 1
        %v1571 = vrot.slane %v1322, 1
        %v1572 = vsel %vm1560, %v1570, %v1571
        %v1573 = vrot.slane %v1275, 1
        %v1574 = vrot.slane %v1323, 1
        %v1575 = vsel %vm1560, %v1573, %v1574
        %v1576 = vrot.slane %v1276, 1
        %v1577 = vrot.slane %v1324, 1
        %v1578 = vsel %vm1560, %v1576, %v1577
        %v1579 = vrot.slane %v1277, 1
        %v1580 = vrot.slane %v1325, 1
        %v1581 = vsel %vm1560, %v1579, %v1580
        %v1582 = vrot.slane %v1278, 1
        %v1583 = vrot.slane %v1326, 1
        %v1584 = vsel %vm1560, %v1582, %v1583
        %v1585 = vrot.slane %v1279, 1
        %v1586 = vrot.slane %v1327, 1
        %v1587 = vsel %vm1560, %v1585, %v1586
        %v1588 = vrot.slane %v1280, 1
        %v1589 = vrot.slane %v1328, 1
        %v1590 = vsel %vm1560, %v1588, %v1589
        %v1591 = vrot.slane %v1281, 1
        %v1592 = vrot.slane %v1329, 1
        %v1593 = vsel %vm1560, %v1591, %v1592
        %v1594 = vrot.slane %v1282, 1
        %v1595 = vrot.slane %v1330, 1
        %v1596 = vsel %vm1560, %v1594, %v1595
        %v1597 = vrot.slane %v1283, 1
        %v1598 = vrot.slane %v1331, 1
        %v1599 = vsel %vm1560, %v1597, %v1598
        %v1600 = vrot.slane %v1284, 1
        %v1601 = vrot.slane %v1332, 1
        %v1602 = vsel %vm1560, %v1600, %v1601
        %v1603 = vrot.slane %v1285, 1
        %v1604 = vrot.slane %v1333, 1
        %v1605 = vsel %vm1560, %v1603, %v1604
        %v1606 = vrot.slane %v1286, 1
        %v1607 = vrot.slane %v1334, 1
        %v1608 = vsel %vm1560, %v1606, %v1607
        %vm1609 = vcmask 523264
        %v1611 = vsel %vm1609, %v1271, %v1529
        %v1614 = vsel %vm1609, %v1272, %v1531
        %v1617 = vsel %vm1609, %v1273, %v1533
        %v1620 = vsel %vm1609, %v1274, %v1535
        %v1623 = vsel %vm1609, %v1275, %v1537
        %v1626 = vsel %vm1609, %v1276, %v1539
        %v1629 = vsel %vm1609, %v1277, %v1541
        %v1632 = vsel %vm1609, %v1278, %v1543
        %v1635 = vsel %vm1609, %v1279, %v1545
        %v1638 = vsel %vm1609, %v1280, %v1547
        %v1641 = vsel %vm1609, %v1281, %v1549
        %v1644 = vsel %vm1609, %v1282, %v1551
        %v1647 = vsel %vm1609, %v1283, %v1553
        %v1650 = vsel %vm1609, %v1284, %v1555
        %v1653 = vsel %vm1609, %v1285, %v1557
        %v1656 = vsel %vm1609, %v1286, %v1559
        %v1660 = vunpack.c.l.b16 %v1129
        %v1661 = vunpack.c.l.b16 %v1130
        %v1662 = vpack.c.b16 %v1661, %v1660
        %v1664 = vunpack.c.l.b16 %v1131
        %v1665 = vpack.c.b16 %v1664, %v1664
        %v1667 = vshrl.u32 %v1662, 16
        %v1669 = vshll.u32 %v1662, 16
        %v1671 = vrot.slane %v1669, 1
        %v1672 = vor.u32 %v1667, %v1671
        %v1674 = vshll.u32 %v1665, 16
        %v1676 = vrot.slane %v1674, 1
        %v1677 = vsel %vm1335, %v1672, %v1676
        %1678 = vrot.lane.b32.xlu0 %v1677, 64
        %v1679 = vpop.permute.xlu0 %1678
        %v1680 = vrot.slane %v1662, 1
        %v1681 = vrot.slane %v1665, 1
        %v1682 = vsel %vm1560, %v1680, %v1681
        %v1684 = vsel %vm1609, %v1662, %v1679
        %v1710 = vunpack.c.l.b16 %v1159
        %v1711 = vunpack.c.l.b16 %v1160
        %v1712 = vunpack.c.l.b16 %v1161
        %v1713 = vunpack.c.l.b16 %v1162
        %v1714 = vunpack.c.l.b16 %v1163
        %v1715 = vunpack.c.l.b16 %v1164
        %v1716 = vunpack.c.l.b16 %v1165
        %v1717 = vunpack.c.l.b16 %v1166
        %v1718 = vunpack.c.l.b16 %v1167
        %v1719 = vunpack.c.l.b16 %v1168
        %v1720 = vunpack.c.l.b16 %v1169
        %v1721 = vunpack.c.l.b16 %v1170
        %v1722 = vunpack.c.l.b16 %v1171
        %v1723 = vunpack.c.l.b16 %v1172
        %v1724 = vunpack.c.l.b16 %v1173
        %v1725 = vunpack.c.l.b16 %v1174
        %v1726 = vunpack.c.l.b16 %v1175
        %v1727 = vunpack.c.l.b16 %v1176
        %v1728 = vunpack.c.l.b16 %v1177
        %v1729 = vunpack.c.l.b16 %v1178
        %v1730 = vunpack.c.l.b16 %v1179
        %v1731 = vunpack.c.l.b16 %v1180
        %v1732 = vunpack.c.l.b16 %v1181
        %v1733 = vunpack.c.l.b16 %v1182
        %v1734 = vpack.c.b16 %v1711, %v1710
        %v1735 = vpack.c.b16 %v1713, %v1712
        %v1736 = vpack.c.b16 %v1715, %v1714
        %v1737 = vpack.c.b16 %v1717, %v1716
        %v1738 = vpack.c.b16 %v1719, %v1718
        %v1739 = vpack.c.b16 %v1721, %v1720
        %v1740 = vpack.c.b16 %v1723, %v1722
        %v1741 = vpack.c.b16 %v1725, %v1724
        %v1742 = vpack.c.b16 %v1727, %v1726
        %v1743 = vpack.c.b16 %v1729, %v1728
        %v1744 = vpack.c.b16 %v1731, %v1730
        %v1745 = vpack.c.b16 %v1733, %v1732
        %v1759 = vsel %vm1609, %v1566, 0
        %v1762 = vsel %vm1609, %v1569, 0
        %v1765 = vsel %vm1609, %v1572, 0
        %v1768 = vsel %vm1609, %v1575, 0
        %v1771 = vsel %vm1609, %v1578, 0
        %v1774 = vsel %vm1609, %v1581, 0
        %v1777 = vsel %vm1609, %v1584, 0
        %v1780 = vsel %vm1609, %v1587, 0
        %v1783 = vsel %vm1609, %v1590, 0
        %v1786 = vsel %vm1609, %v1593, 0
        %v1789 = vsel %vm1609, %v1596, 0
        %v1792 = vsel %vm1609, %v1599, 0
        %v1795 = vsel %vm1609, %v1602, 0
        %v1798 = vsel %vm1609, %v1605, 0
        %v1801 = vsel %vm1609, %v1608, 0
        %v1804 = vsel %vm1609, %v1682, 0
        %1806 = vmatprep.subr.bf16.mxu0 0
        %1807 = vmatpush1.bf16.msra.mxu0 %v1734
        %1808 = vmatprep.subr.bf16.mxu0 0
        %1809 = vmatpush1.bf16.msra.mxu0 %v1735
        %1810 = vmatprep.subr.bf16.mxu0 0
        %1811 = vmatpush1.bf16.msra.mxu0 %v1736
        %1812 = vmatprep.subr.bf16.mxu0 0
        %1813 = vmatpush1.bf16.msra.mxu0 %v1737
        %1814 = vmatprep.subr.bf16.mxu0 0
        %1815 = vmatpush1.bf16.msra.mxu0 %v1738
        %1816 = vmatprep.subr.bf16.mxu0 0
        %1817 = vmatpush1.bf16.msra.mxu0 %v1739
        %1818 = vmatprep.subr.bf16.mxu0 0
        %1819 = vmatpush1.bf16.msra.mxu0 %v1740
        %1820 = vmatprep.subr.bf16.mxu0 0
        %1821 = vmatpush1.bf16.msra.mxu0 %v1741
        %1822 = vmatprep.subr.bf16.mxu0 0
        %1823 = vmatpush1.bf16.msra.mxu0 %v1742
        %1824 = vmatprep.subr.bf16.mxu0 0
        %1825 = vmatpush1.bf16.msra.mxu0 %v1743
        %1826 = vmatprep.subr.bf16.mxu0 0
        %1827 = vmatpush1.bf16.msra.mxu0 %v1744
        %1828 = vmatprep.subr.bf16.mxu0 0
        %1829 = vmatpush1.bf16.msra.mxu0 %v1745
        %1830 = vmatprep.subr.bf16.mxu0 0
        %1831 = vmatpush1.bf16.msra.mxu0 0
        %1832 = vmatprep.subr.bf16.mxu0 0
        %1833 = vmatpush1.bf16.msra.mxu0 0
        %1834 = vmatprep.subr.bf16.mxu0 0
        %1835 = vmatpush1.bf16.msra.mxu0 0
        %1836 = vmatprep.subr.bf16.mxu0 0
        %1837 = vmatpush1.bf16.msra.mxu0 0
        %1838 = vmatprep.mubr.bf16.mxu0 %v1759
        %1839 = vmatmul.mubr.bf16.gmra.mrb[0].mxu0 %v1614
        %v1840 = vpop.f32.mrb[0].mxu0
        %v1841 = vadd.f32 0.0, %v1840
        %v1842 = vpop.f32.mrb[0].mxu0
        %v1843 = vpop.f32.mrb[0].mxu0
        %v1844 = vadd.f32 0.0, %v1843
        %v1845 = vpop.f32.mrb[0].mxu0
        %1846 = vmatprep.mubr.bf16.mxu0 %v1762
        %1847 = vmatmul.mubr.bf16.gmra.mrb[0].mxu0 %v1617
        %v1848 = vpop.f32.mrb[0].mxu0
        %v1849 = vadd.f32 0.0, %v1848
        %v1850 = vpop.f32.mrb[0].mxu0
        %v1851 = vpop.f32.mrb[0].mxu0
        %v1852 = vadd.f32 0.0, %v1851
        %v1853 = vpop.f32.mrb[0].mxu0
        %1854 = vmatprep.mubr.bf16.mxu0 %v1765
        %1855 = vmatmul.mubr.bf16.gmra.mrb[0].mxu0 %v1620
        %v1856 = vpop.f32.mrb[0].mxu0
        %v1857 = vadd.f32 0.0, %v1856
        %v1858 = vpop.f32.mrb[0].mxu0
        %v1859 = vpop.f32.mrb[0].mxu0
        %v1860 = vadd.f32 0.0, %v1859
        %v1861 = vpop.f32.mrb[0].mxu0
        %1862 = vmatprep.mubr.bf16.mxu0 %v1768
        %1863 = vmatmul.mubr.bf16.gmra.mrb[0].mxu0 %v1623
        %v1864 = vpop.f32.mrb[0].mxu0
        %v1865 = vadd.f32 0.0, %v1864
        %v1866 = vpop.f32.mrb[0].mxu0
        %v1867 = vpop.f32.mrb[0].mxu0
        %v1868 = vadd.f32 0.0, %v1867
        %v1869 = vpop.f32.mrb[0].mxu0
        %1870 = vmatprep.mubr.bf16.mxu0 %v1771
        %1871 = vmatmul.mubr.bf16.gmra.mrb[0].mxu0 %v1626
        %v1872 = vpop.f32.mrb[0].mxu0
        %v1873 = vadd.f32 0.0, %v1872
        %v1874 = vpop.f32.mrb[0].mxu0
        %v1875 = vpop.f32.mrb[0].mxu0
        %v1876 = vadd.f32 0.0, %v1875
        %v1877 = vpop.f32.mrb[0].mxu0
        %1878 = vmatprep.mubr.bf16.mxu0 %v1774
        %1879 = vmatmul.mubr.bf16.gmra.mrb[0].mxu0 %v1629
        %v1880 = vpop.f32.mrb[0].mxu0
        %v1881 = vadd.f32 0.0, %v1880
        %v1882 = vpop.f32.mrb[0].mxu0
        %v1883 = vpop.f32.mrb[0].mxu0
        %v1884 = vadd.f32 0.0, %v1883
        %v1885 = vpop.f32.mrb[0].mxu0
        %1886 = vmatprep.mubr.bf16.mxu0 %v1777
        %1887 = vmatmul.mubr.bf16.gmra.mrb[0].mxu0 %v1632
        %v1888 = vpop.f32.mrb[0].mxu0
        %v1889 = vadd.f32 0.0, %v1888
        %v1890 = vpop.f32.mrb[0].mxu0
        %v1891 = vpop.f32.mrb[0].mxu0
        %v1892 = vadd.f32 0.0, %v1891
        %v1893 = vpop.f32.mrb[0].mxu0
        %1894 = vmatprep.mubr.bf16.mxu0 %v1780
        %1895 = vmatmul.mubr.bf16.gmra.mrb[0].mxu0 %v1635
        %v1896 = vpop.f32.mrb[0].mxu0
        %v1897 = vadd.f32 0.0, %v1896
        %v1898 = vpop.f32.mrb[0].mxu0
        %v1899 = vpop.f32.mrb[0].mxu0
        %v1900 = vadd.f32 0.0, %v1899
        %v1901 = vpop.f32.mrb[0].mxu0
        %1902 = vmatprep.mubr.bf16.mxu0 %v1783
        %1903 = vmatmul.mubr.bf16.gmra.mrb[0].mxu0 %v1638
        %v1904 = vpop.f32.mrb[0].mxu0
        %v1905 = vadd.f32 0.0, %v1904
        %v1906 = vpop.f32.mrb[0].mxu0
        %v1907 = vpop.f32.mrb[0].mxu0
        %v1908 = vadd.f32 0.0, %v1907
        %v1909 = vpop.f32.mrb[0].mxu0
        %1910 = vmatprep.mubr.bf16.mxu0 %v1786
        %1911 = vmatmul.mubr.bf16.gmra.mrb[0].mxu0 %v1641
        %v1912 = vpop.f32.mrb[0].mxu0
        %v1913 = vadd.f32 0.0, %v1912
        %v1914 = vpop.f32.mrb[0].mxu0
        %v1915 = vpop.f32.mrb[0].mxu0
        %v1916 = vadd.f32 0.0, %v1915
        %v1917 = vpop.f32.mrb[0].mxu0
        %1918 = vmatprep.mubr.bf16.mxu0 %v1789
        %1919 = vmatmul.mubr.bf16.gmra.mrb[0].mxu0 %v1644
        %v1920 = vpop.f32.mrb[0].mxu0
        %v1921 = vadd.f32 0.0, %v1920
        %v1922 = vpop.f32.mrb[0].mxu0
        %v1923 = vpop.f32.mrb[0].mxu0
        %v1924 = vadd.f32 0.0, %v1923
        %v1925 = vpop.f32.mrb[0].mxu0
        %1926 = vmatprep.mubr.bf16.mxu0 %v1792
        %1927 = vmatmul.mubr.bf16.gmra.mrb[0].mxu0 %v1647
        %v1928 = vpop.f32.mrb[0].mxu0
        %v1929 = vadd.f32 0.0, %v1928
        %v1930 = vpop.f32.mrb[0].mxu0
        %v1931 = vpop.f32.mrb[0].mxu0
        %v1932 = vadd.f32 0.0, %v1931
        %v1933 = vpop.f32.mrb[0].mxu0
        %1934 = vmatprep.mubr.bf16.mxu0 %v1795
        %1935 = vmatmul.mubr.bf16.gmra.mrb[0].mxu0 %v1650
        %v1936 = vpop.f32.mrb[0].mxu0
        %v1937 = vadd.f32 0.0, %v1936
        %v1938 = vpop.f32.mrb[0].mxu0
        %v1939 = vpop.f32.mrb[0].mxu0
        %v1940 = vadd.f32 0.0, %v1939
        %v1941 = vpop.f32.mrb[0].mxu0
        %1942 = vmatprep.mubr.bf16.mxu0 %v1798
        %1943 = vmatmul.mubr.bf16.gmra.mrb[0].mxu0 %v1653
        %v1944 = vpop.f32.mrb[0].mxu0
        %v1945 = vadd.f32 0.0, %v1944
        %v1946 = vpop.f32.mrb[0].mxu0
        %v1947 = vpop.f32.mrb[0].mxu0
        %v1948 = vadd.f32 0.0, %v1947
        %v1949 = vpop.f32.mrb[0].mxu0
        %1950 = vmatprep.mubr.bf16.mxu0 %v1801
        %1951 = vmatmul.mubr.bf16.gmra.mrb[0].mxu0 %v1656
        %v1952 = vpop.f32.mrb[0].mxu0
        %v1953 = vadd.f32 0.0, %v1952
        %v1954 = vpop.f32.mrb[0].mxu0
        %v1955 = vpop.f32.mrb[0].mxu0
        %v1956 = vadd.f32 0.0, %v1955
        %v1957 = vpop.f32.mrb[0].mxu0
        %1958 = vmatprep.mubr.bf16.mxu0 %v1804
        %1959 = vmatmul.mubr.bf16.gmra.mrb[0].mxu0 %v1684
        %v1960 = vpop.f32.mrb[0].mxu0
        %v1961 = vadd.f32 0.0, %v1960
        %v1962 = vpop.f32.mrb[0].mxu0
        %v1963 = vpop.f32.mrb[0].mxu0
        %v1964 = vadd.f32 0.0, %v1963
        %v1965 = vpop.f32.mrb[0].mxu0
        %1966 = vdwg.mxu0
        %v1991 = vunpack.c.l.b16 %v1135
        %v1992 = vunpack.c.l.b16 %v1136
        %v1993 = vunpack.c.l.b16 %v1137
        %v1994 = vunpack.c.l.b16 %v1138
        %v1995 = vunpack.c.l.b16 %v1139
        %v1996 = vunpack.c.l.b16 %v1140
        %v1997 = vunpack.c.l.b16 %v1141
        %v1998 = vunpack.c.l.b16 %v1142
        %v1999 = vunpack.c.l.b16 %v1143
        %v2000 = vunpack.c.l.b16 %v1144
        %v2001 = vunpack.c.l.b16 %v1145
        %v2002 = vunpack.c.l.b16 %v1146
        %v2003 = vunpack.c.l.b16 %v1147
        %v2004 = vunpack.c.l.b16 %v1148
        %v2005 = vunpack.c.l.b16 %v1149
        %v2006 = vunpack.c.l.b16 %v1150
        %v2007 = vunpack.c.l.b16 %v1151
        %v2008 = vunpack.c.l.b16 %v1152
        %v2009 = vunpack.c.l.b16 %v1153
        %v2010 = vunpack.c.l.b16 %v1154
        %v2011 = vunpack.c.l.b16 %v1155
        %v2012 = vunpack.c.l.b16 %v1156
        %v2013 = vunpack.c.l.b16 %v1157
        %v2014 = vunpack.c.l.b16 %v1158
        %v2015 = vpack.c.b16 %v1992, %v1991
        %v2016 = vpack.c.b16 %v1994, %v1993
        %v2017 = vpack.c.b16 %v1996, %v1995
        %v2018 = vpack.c.b16 %v1998, %v1997
        %v2019 = vpack.c.b16 %v2000, %v1999
        %v2020 = vpack.c.b16 %v2002, %v2001
        %v2021 = vpack.c.b16 %v2004, %v2003
        %v2022 = vpack.c.b16 %v2006, %v2005
        %v2023 = vpack.c.b16 %v2008, %v2007
        %v2024 = vpack.c.b16 %v2010, %v2009
        %v2025 = vpack.c.b16 %v2012, %v2011
        %v2026 = vpack.c.b16 %v2014, %v2013
        %v2040 = vsel %vm1609, %v1563, 0
        %2042 = vmatprep.subr.bf16.mxu0 0
        %2043 = vmatpush1.bf16.msra.mxu0 %v2015
        %2044 = vmatprep.subr.bf16.mxu0 0
        %2045 = vmatpush1.bf16.msra.mxu0 %v2016
        %2046 = vmatprep.subr.bf16.mxu0 0
        %2047 = vmatpush1.bf16.msra.mxu0 %v2017
        %2048 = vmatprep.subr.bf16.mxu0 0
        %2049 = vmatpush1.bf16.msra.mxu0 %v2018
        %2050 = vmatprep.subr.bf16.mxu0 0
        %2051 = vmatpush1.bf16.msra.mxu0 %v2019
        %2052 = vmatprep.subr.bf16.mxu0 0
        %2053 = vmatpush1.bf16.msra.mxu0 %v2020
        %2054 = vmatprep.subr.bf16.mxu0 0
        %2055 = vmatpush1.bf16.msra.mxu0 %v2021
        %2056 = vmatprep.subr.bf16.mxu0 0
        %2057 = vmatpush1.bf16.msra.mxu0 %v2022
        %2058 = vmatprep.subr.bf16.mxu0 0
        %2059 = vmatpush1.bf16.msra.mxu0 %v2023
        %2060 = vmatprep.subr.bf16.mxu0 0
        %2061 = vmatpush1.bf16.msra.mxu0 %v2024
        %2062 = vmatprep.subr.bf16.mxu0 0
        %2063 = vmatpush1.bf16.msra.mxu0 %v2025
        %2064 = vmatprep.subr.bf16.mxu0 0
        %2065 = vmatpush1.bf16.msra.mxu0 %v2026
        %2066 = vmatprep.subr.bf16.mxu0 0
        %2067 = vmatpush1.bf16.msra.mxu0 0
        %2068 = vmatprep.subr.bf16.mxu0 0
        %2069 = vmatpush1.bf16.msra.mxu0 0
        %2070 = vmatprep.subr.bf16.mxu0 0
        %2071 = vmatpush1.bf16.msra.mxu0 0
        %2072 = vmatprep.subr.bf16.mxu0 0
        %2073 = vmatpush1.bf16.msra.mxu0 0
        %2074 = vmatprep.mubr.bf16.mxu0 %v2040
        %2075 = vmatmul.mubr.bf16.gmra.mrb[0].mxu0 %v1611
        %v2076 = vpop.f32.mrb[0].mxu0
        %v2077 = vadd.f32 %v1841, %v2076
        %v2078 = vpop.f32.mrb[0].mxu0
        %v2079 = vpop.f32.mrb[0].mxu0
        %v2080 = vadd.f32 %v1844, %v2079
        %v2081 = vpop.f32.mrb[0].mxu0
        %2082 = vmatprep.mubr.bf16.mxu0 %v1759
        %2083 = vmatmul.mubr.bf16.gmra.mrb[0].mxu0 %v1614
        %v2084 = vpop.f32.mrb[0].mxu0
        %v2085 = vadd.f32 %v1849, %v2084
        %v2086 = vpop.f32.mrb[0].mxu0
        %v2087 = vpop.f32.mrb[0].mxu0
        %v2088 = vadd.f32 %v1852, %v2087
        %v2089 = vpop.f32.mrb[0].mxu0
        %2090 = vmatprep.mubr.bf16.mxu0 %v1762
        %2091 = vmatmul.mubr.bf16.gmra.mrb[0].mxu0 %v1617
        %v2092 = vpop.f32.mrb[0].mxu0
        %v2093 = vadd.f32 %v1857, %v2092
        %v2094 = vpop.f32.mrb[0].mxu0
        %v2095 = vpop.f32.mrb[0].mxu0
        %v2096 = vadd.f32 %v1860, %v2095
        %v2097 = vpop.f32.mrb[0].mxu0
        %2098 = vmatprep.mubr.bf16.mxu0 %v1765
        %2099 = vmatmul.mubr.bf16.gmra.mrb[0].mxu0 %v1620
        %v2100 = vpop.f32.mrb[0].mxu0
        %v2101 = vadd.f32 %v1865, %v2100
        %v2102 = vpop.f32.mrb[0].mxu0
        %v2103 = vpop.f32.mrb[0].mxu0
        %v2104 = vadd.f32 %v1868, %v2103
        %v2105 = vpop.f32.mrb[0].mxu0
        %2106 = vmatprep.mubr.bf16.mxu0 %v1768
        %2107 = vmatmul.mubr.bf16.gmra.mrb[0].mxu0 %v1623
        %v2108 = vpop.f32.mrb[0].mxu0
        %v2109 = vadd.f32 %v1873, %v2108
        %v2110 = vpop.f32.mrb[0].mxu0
        %v2111 = vpop.f32.mrb[0].mxu0
        %v2112 = vadd.f32 %v1876, %v2111
        %v2113 = vpop.f32.mrb[0].mxu0
        %2114 = vmatprep.mubr.bf16.mxu0 %v1771
        %2115 = vmatmul.mubr.bf16.gmra.mrb[0].mxu0 %v1626
        %v2116 = vpop.f32.mrb[0].mxu0
        %v2117 = vadd.f32 %v1881, %v2116
        %v2118 = vpop.f32.mrb[0].mxu0
        %v2119 = vpop.f32.mrb[0].mxu0
        %v2120 = vadd.f32 %v1884, %v2119
        %v2121 = vpop.f32.mrb[0].mxu0
        %2122 = vmatprep.mubr.bf16.mxu0 %v1774
        %2123 = vmatmul.mubr.bf16.gmra.mrb[0].mxu0 %v1629
        %v2124 = vpop.f32.mrb[0].mxu0
        %v2125 = vadd.f32 %v1889, %v2124
        %v2126 = vpop.f32.mrb[0].mxu0
        %v2127 = vpop.f32.mrb[0].mxu0
        %v2128 = vadd.f32 %v1892, %v2127
        %v2129 = vpop.f32.mrb[0].mxu0
        %2130 = vmatprep.mubr.bf16.mxu0 %v1777
        %2131 = vmatmul.mubr.bf16.gmra.mrb[0].mxu0 %v1632
        %v2132 = vpop.f32.mrb[0].mxu0
        %v2133 = vadd.f32 %v1897, %v2132
        %v2134 = vpop.f32.mrb[0].mxu0
        %v2135 = vpop.f32.mrb[0].mxu0
        %v2136 = vadd.f32 %v1900, %v2135
        %v2137 = vpop.f32.mrb[0].mxu0
        %2138 = vmatprep.mubr.bf16.mxu0 %v1780
        %2139 = vmatmul.mubr.bf16.gmra.mrb[0].mxu0 %v1635
        %v2140 = vpop.f32.mrb[0].mxu0
        %v2141 = vadd.f32 %v1905, %v2140
        %v2142 = vpop.f32.mrb[0].mxu0
        %v2143 = vpop.f32.mrb[0].mxu0
        %v2144 = vadd.f32 %v1908, %v2143
        %v2145 = vpop.f32.mrb[0].mxu0
        %2146 = vmatprep.mubr.bf16.mxu0 %v1783
        %2147 = vmatmul.mubr.bf16.gmra.mrb[0].mxu0 %v1638
        %v2148 = vpop.f32.mrb[0].mxu0
        %v2149 = vadd.f32 %v1913, %v2148
        %v2150 = vpop.f32.mrb[0].mxu0
        %v2151 = vpop.f32.mrb[0].mxu0
        %v2152 = vadd.f32 %v1916, %v2151
        %v2153 = vpop.f32.mrb[0].mxu0
        %2154 = vmatprep.mubr.bf16.mxu0 %v1786
        %2155 = vmatmul.mubr.bf16.gmra.mrb[0].mxu0 %v1641
        %v2156 = vpop.f32.mrb[0].mxu0
        %v2157 = vadd.f32 %v1921, %v2156
        %v2158 = vpop.f32.mrb[0].mxu0
        %v2159 = vpop.f32.mrb[0].mxu0
        %v2160 = vadd.f32 %v1924, %v2159
        %v2161 = vpop.f32.mrb[0].mxu0
        %2162 = vmatprep.mubr.bf16.mxu0 %v1789
        %2163 = vmatmul.mubr.bf16.gmra.mrb[0].mxu0 %v1644
        %v2164 = vpop.f32.mrb[0].mxu0
        %v2165 = vadd.f32 %v1929, %v2164
        %v2166 = vpop.f32.mrb[0].mxu0
        %v2167 = vpop.f32.mrb[0].mxu0
        %v2168 = vadd.f32 %v1932, %v2167
        %v2169 = vpop.f32.mrb[0].mxu0
        %2170 = vmatprep.mubr.bf16.mxu0 %v1792
        %2171 = vmatmul.mubr.bf16.gmra.mrb[0].mxu0 %v1647
        %v2172 = vpop.f32.mrb[0].mxu0
        %v2173 = vadd.f32 %v1937, %v2172
        %v2174 = vpop.f32.mrb[0].mxu0
        %v2175 = vpop.f32.mrb[0].mxu0
        %v2176 = vadd.f32 %v1940, %v2175
        %v2177 = vpop.f32.mrb[0].mxu0
        %2178 = vmatprep.mubr.bf16.mxu0 %v1795
        %2179 = vmatmul.mubr.bf16.gmra.mrb[0].mxu0 %v1650
        %v2180 = vpop.f32.mrb[0].mxu0
        %v2181 = vadd.f32 %v1945, %v2180
        %v2182 = vpop.f32.mrb[0].mxu0
        %v2183 = vpop.f32.mrb[0].mxu0
        %v2184 = vadd.f32 %v1948, %v2183
        %v2185 = vpop.f32.mrb[0].mxu0
        %2186 = vmatprep.mubr.bf16.mxu0 %v1798
        %2187 = vmatmul.mubr.bf16.gmra.mrb[0].mxu0 %v1653
        %v2188 = vpop.f32.mrb[0].mxu0
        %v2189 = vadd.f32 %v1953, %v2188
        %v2190 = vpop.f32.mrb[0].mxu0
        %v2191 = vpop.f32.mrb[0].mxu0
        %v2192 = vadd.f32 %v1956, %v2191
        %v2193 = vpop.f32.mrb[0].mxu0
        %2194 = vmatprep.mubr.bf16.mxu0 %v1801
        %2195 = vmatmul.mubr.bf16.gmra.mrb[0].mxu0 %v1656
        %v2196 = vpop.f32.mrb[0].mxu0
        %v2197 = vadd.f32 %v1961, %v2196
        %v2198 = vpop.f32.mrb[0].mxu0
        %v2199 = vpop.f32.mrb[0].mxu0
        %v2200 = vadd.f32 %v1964, %v2199
        %v2201 = vpop.f32.mrb[0].mxu0
        %2202 = vdwg.mxu0
        %v2205 = vunpack.c.l.b16 %v1132
        %v2206 = vunpack.c.l.b16 %v1133
        %v2207 = vpack.c.b16 %v2206, %v2205
        %v2209 = vunpack.c.l.b16 %v1134
        %v2210 = vpack.c.b16 %v2209, %v2209
        %v2212 = vshrl.u32 %v2207, 16
        %v2214 = vshll.u32 %v2207, 16
        %v2216 = vrot.slane %v2214, 1
        %v2217 = vor.u32 %v2212, %v2216
        %v2219 = vshll.u32 %v2210, 16
        %v2221 = vrot.slane %v2219, 1
        %v2222 = vsel %vm1335, %v2217, %v2221
        %2223 = vrot.lane.b32.xlu0 %v2222, 64
        %v2224 = vpop.permute.xlu0 %2223
        %v2225 = vrot.slane %v2207, 1
        %v2226 = vrot.slane %v2210, 1
        %v2227 = vsel %vm1560, %v2225, %v2226
        %v2229 = vsel %vm1609, %v2207, %v2224
        %v2255 = vunpack.c.l.b16 %v1183
        %v2256 = vunpack.c.l.b16 %v1184
        %v2257 = vunpack.c.l.b16 %v1185
        %v2258 = vunpack.c.l.b16 %v1186
        %v2259 = vunpack.c.l.b16 %v1187
        %v2260 = vunpack.c.l.b16 %v1188
        %v2261 = vunpack.c.l.b16 %v1189
        %v2262 = vunpack.c.l.b16 %v1190
        %v2263 = vunpack.c.l.b16 %v1191
        %v2264 = vunpack.c.l.b16 %v1192
        %v2265 = vunpack.c.l.b16 %v1193
        %v2266 = vunpack.c.l.b16 %v1194
        %v2267 = vunpack.c.l.b16 %v1195
        %v2268 = vunpack.c.l.b16 %v1196
        %v2269 = vunpack.c.l.b16 %v1197
        %v2270 = vunpack.c.l.b16 %v1198
        %v2271 = vunpack.c.l.b16 %v1199
        %v2272 = vunpack.c.l.b16 %v1200
        %v2273 = vunpack.c.l.b16 %v1201
        %v2274 = vunpack.c.l.b16 %v1202
        %v2275 = vunpack.c.l.b16 %v1203
        %v2276 = vunpack.c.l.b16 %v1204
        %v2277 = vunpack.c.l.b16 %v1205
        %v2278 = vunpack.c.l.b16 %v1206
        %v2279 = vpack.c.b16 %v2256, %v2255
        %v2280 = vpack.c.b16 %v2258, %v2257
        %v2281 = vpack.c.b16 %v2260, %v2259
        %v2282 = vpack.c.b16 %v2262, %v2261
        %v2283 = vpack.c.b16 %v2264, %v2263
        %v2284 = vpack.c.b16 %v2266, %v2265
        %v2285 = vpack.c.b16 %v2268, %v2267
        %v2286 = vpack.c.b16 %v2270, %v2269
        %v2287 = vpack.c.b16 %v2272, %v2271
        %v2288 = vpack.c.b16 %v2274, %v2273
        %v2289 = vpack.c.b16 %v2276, %v2275
        %v2290 = vpack.c.b16 %v2278, %v2277
        %v2304 = vsel %vm1609, %v2227, 0
        %2306 = vmatprep.subr.bf16.mxu0 0
        %2307 = vmatpush1.bf16.msra.mxu0 %v2279
        %2308 = vmatprep.subr.bf16.mxu0 0
        %2309 = vmatpush1.bf16.msra.mxu0 %v2280
        %2310 = vmatprep.subr.bf16.mxu0 0
        %2311 = vmatpush1.bf16.msra.mxu0 %v2281
        %2312 = vmatprep.subr.bf16.mxu0 0
        %2313 = vmatpush1.bf16.msra.mxu0 %v2282
        %2314 = vmatprep.subr.bf16.mxu0 0
        %2315 = vmatpush1.bf16.msra.mxu0 %v2283
        %2316 = vmatprep.subr.bf16.mxu0 0
        %2317 = vmatpush1.bf16.msra.mxu0 %v2284
        %2318 = vmatprep.subr.bf16.mxu0 0
        %2319 = vmatpush1.bf16.msra.mxu0 %v2285
        %2320 = vmatprep.subr.bf16.mxu0 0
        %2321 = vmatpush1.bf16.msra.mxu0 %v2286
        %2322 = vmatprep.subr.bf16.mxu0 0
        %2323 = vmatpush1.bf16.msra.mxu0 %v2287
        %2324 = vmatprep.subr.bf16.mxu0 0
        %2325 = vmatpush1.bf16.msra.mxu0 %v2288
        %2326 = vmatprep.subr.bf16.mxu0 0
        %2327 = vmatpush1.bf16.msra.mxu0 %v2289
        %2328 = vmatprep.subr.bf16.mxu0 0
        %2329 = vmatpush1.bf16.msra.mxu0 %v2290
        %2330 = vmatprep.subr.bf16.mxu0 0
        %2331 = vmatpush1.bf16.msra.mxu0 0
        %2332 = vmatprep.subr.bf16.mxu0 0
        %2333 = vmatpush1.bf16.msra.mxu0 0
        %2334 = vmatprep.subr.bf16.mxu0 0
        %2335 = vmatpush1.bf16.msra.mxu0 0
        %2336 = vmatprep.subr.bf16.mxu0 0
        %2337 = vmatpush1.bf16.msra.mxu0 0
        %2338 = vmatprep.mubr.bf16.mxu0 %v1762
        %2339 = vmatmul.mubr.bf16.gmra.mrb[0].mxu0 %v1617
        %v2340 = vpop.f32.mrb[0].mxu0
        %v2341 = vadd.f32 0.0, %v2340
        %v2342 = vpop.f32.mrb[0].mxu0
        %v2343 = vpop.f32.mrb[0].mxu0
        %v2344 = vadd.f32 0.0, %v2343
        %v2345 = vpop.f32.mrb[0].mxu0
        %2346 = vmatprep.mubr.bf16.mxu0 %v1765
        %2347 = vmatmul.mubr.bf16.gmra.mrb[0].mxu0 %v1620
        %v2348 = vpop.f32.mrb[0].mxu0
        %v2349 = vadd.f32 0.0, %v2348
        %v2350 = vpop.f32.mrb[0].mxu0
        %v2351 = vpop.f32.mrb[0].mxu0
        %v2352 = vadd.f32 0.0, %v2351
        %v2353 = vpop.f32.mrb[0].mxu0
        %2354 = vmatprep.mubr.bf16.mxu0 %v1768
        %2355 = vmatmul.mubr.bf16.gmra.mrb[0].mxu0 %v1623
        %v2356 = vpop.f32.mrb[0].mxu0
        %v2357 = vadd.f32 0.0, %v2356
        %v2358 = vpop.f32.mrb[0].mxu0
        %v2359 = vpop.f32.mrb[0].mxu0
        %v2360 = vadd.f32 0.0, %v2359
        %v2361 = vpop.f32.mrb[0].mxu0
        %2362 = vmatprep.mubr.bf16.mxu0 %v1771
        %2363 = vmatmul.mubr.bf16.gmra.mrb[0].mxu0 %v1626
        %v2364 = vpop.f32.mrb[0].mxu0
        %v2365 = vadd.f32 0.0, %v2364
        %v2366 = vpop.f32.mrb[0].mxu0
        %v2367 = vpop.f32.mrb[0].mxu0
        %v2368 = vadd.f32 0.0, %v2367
        %v2369 = vpop.f32.mrb[0].mxu0
        %2370 = vmatprep.mubr.bf16.mxu0 %v1774
        %2371 = vmatmul.mubr.bf16.gmra.mrb[0].mxu0 %v1629
        %v2372 = vpop.f32.mrb[0].mxu0
        %v2373 = vadd.f32 0.0, %v2372
        %v2374 = vpop.f32.mrb[0].mxu0
        %v2375 = vpop.f32.mrb[0].mxu0
        %v2376 = vadd.f32 0.0, %v2375
        %v2377 = vpop.f32.mrb[0].mxu0
        %2378 = vmatprep.mubr.bf16.mxu0 %v1777
        %2379 = vmatmul.mubr.bf16.gmra.mrb[0].mxu0 %v1632
        %v2380 = vpop.f32.mrb[0].mxu0
        %v2381 = vadd.f32 0.0, %v2380
        %v2382 = vpop.f32.mrb[0].mxu0
        %v2383 = vpop.f32.mrb[0].mxu0
        %v2384 = vadd.f32 0.0, %v2383
        %v2385 = vpop.f32.mrb[0].mxu0
        %2386 = vmatprep.mubr.bf16.mxu0 %v1780
        %2387 = vmatmul.mubr.bf16.gmra.mrb[0].mxu0 %v1635
        %v2388 = vpop.f32.mrb[0].mxu0
        %v2389 = vadd.f32 0.0, %v2388
        %v2390 = vpop.f32.mrb[0].mxu0
        %v2391 = vpop.f32.mrb[0].mxu0
        %v2392 = vadd.f32 0.0, %v2391
        %v2393 = vpop.f32.mrb[0].mxu0
        %2394 = vmatprep.mubr.bf16.mxu0 %v1783
        %2395 = vmatmul.mubr.bf16.gmra.mrb[0].mxu0 %v1638
        %v2396 = vpop.f32.mrb[0].mxu0
        %v2397 = vadd.f32 0.0, %v2396
        %v2398 = vpop.f32.mrb[0].mxu0
        %v2399 = vpop.f32.mrb[0].mxu0
        %v2400 = vadd.f32 0.0, %v2399
        %v2401 = vpop.f32.mrb[0].mxu0
        %2402 = vmatprep.mubr.bf16.mxu0 %v1786
        %2403 = vmatmul.mubr.bf16.gmra.mrb[0].mxu0 %v1641
        %v2404 = vpop.f32.mrb[0].mxu0
        %v2405 = vadd.f32 0.0, %v2404
        %v2406 = vpop.f32.mrb[0].mxu0
        %v2407 = vpop.f32.mrb[0].mxu0
        %v2408 = vadd.f32 0.0, %v2407
        %v2409 = vpop.f32.mrb[0].mxu0
        %2410 = vmatprep.mubr.bf16.mxu0 %v1789
        %2411 = vmatmul.mubr.bf16.gmra.mrb[0].mxu0 %v1644
        %v2412 = vpop.f32.mrb[0].mxu0
        %v2413 = vadd.f32 0.0, %v2412
        %v2414 = vpop.f32.mrb[0].mxu0
        %v2415 = vpop.f32.mrb[0].mxu0
        %v2416 = vadd.f32 0.0, %v2415
        %v2417 = vpop.f32.mrb[0].mxu0
        %2418 = vmatprep.mubr.bf16.mxu0 %v1792
        %2419 = vmatmul.mubr.bf16.gmra.mrb[0].mxu0 %v1647
        %v2420 = vpop.f32.mrb[0].mxu0
        %v2421 = vadd.f32 0.0, %v2420
        %v2422 = vpop.f32.mrb[0].mxu0
        %v2423 = vpop.f32.mrb[0].mxu0
        %v2424 = vadd.f32 0.0, %v2423
        %v2425 = vpop.f32.mrb[0].mxu0
        %2426 = vmatprep.mubr.bf16.mxu0 %v1795
        %2427 = vmatmul.mubr.bf16.gmra.mrb[0].mxu0 %v1650
        %v2428 = vpop.f32.mrb[0].mxu0
        %v2429 = vadd.f32 0.0, %v2428
        %v2430 = vpop.f32.mrb[0].mxu0
        %v2431 = vpop.f32.mrb[0].mxu0
        %v2432 = vadd.f32 0.0, %v2431
        %v2433 = vpop.f32.mrb[0].mxu0
        %2434 = vmatprep.mubr.bf16.mxu0 %v1798
        %2435 = vmatmul.mubr.bf16.gmra.mrb[0].mxu0 %v1653
        %v2436 = vpop.f32.mrb[0].mxu0
        %v2437 = vadd.f32 0.0, %v2436
        %v2438 = vpop.f32.mrb[0].mxu0
        %v2439 = vpop.f32.mrb[0].mxu0
        %v2440 = vadd.f32 0.0, %v2439
        %v2441 = vpop.f32.mrb[0].mxu0
        %2442 = vmatprep.mubr.bf16.mxu0 %v1801
        %2443 = vmatmul.mubr.bf16.gmra.mrb[0].mxu0 %v1656
        %v2444 = vpop.f32.mrb[0].mxu0
        %v2445 = vadd.f32 0.0, %v2444
        %v2446 = vpop.f32.mrb[0].mxu0
        %v2447 = vpop.f32.mrb[0].mxu0
        %v2448 = vadd.f32 0.0, %v2447
        %v2449 = vpop.f32.mrb[0].mxu0
        %2450 = vmatprep.mubr.bf16.mxu0 %v1804
        %2451 = vmatmul.mubr.bf16.gmra.mrb[0].mxu0 %v1684
        %v2452 = vpop.f32.mrb[0].mxu0
        %v2453 = vadd.f32 0.0, %v2452
        %v2454 = vpop.f32.mrb[0].mxu0
        %v2455 = vpop.f32.mrb[0].mxu0
        %v2456 = vadd.f32 0.0, %v2455
        %v2457 = vpop.f32.mrb[0].mxu0
        %2458 = vmatprep.mubr.bf16.mxu0 %v2304
        %2459 = vmatmul.mubr.bf16.gmra.mrb[0].mxu0 %v2229
        %v2460 = vpop.f32.mrb[0].mxu0
        %v2461 = vadd.f32 0.0, %v2460
        %v2462 = vpop.f32.mrb[0].mxu0
        %v2463 = vpop.f32.mrb[0].mxu0
        %v2464 = vadd.f32 0.0, %v2463
        %v2465 = vpop.f32.mrb[0].mxu0
        %2466 = vdwg.mxu0
        %v2467 = vadd.f32 %v2077, %v2341
        %v2468 = vadd.f32 %v2080, %v2344
        %v2469 = vadd.f32 %v2085, %v2349
        %v2470 = vadd.f32 %v2088, %v2352
        %v2471 = vadd.f32 %v2093, %v2357
        %v2472 = vadd.f32 %v2096, %v2360
        %v2473 = vadd.f32 %v2101, %v2365
        %v2474 = vadd.f32 %v2104, %v2368
        %v2475 = vadd.f32 %v2109, %v2373
        %v2476 = vadd.f32 %v2112, %v2376
        %v2477 = vadd.f32 %v2117, %v2381
        %v2478 = vadd.f32 %v2120, %v2384
        %v2479 = vadd.f32 %v2125, %v2389
        %v2480 = vadd.f32 %v2128, %v2392
        %v2481 = vadd.f32 %v2133, %v2397
        %v2482 = vadd.f32 %v2136, %v2400
        %v2483 = vadd.f32 %v2141, %v2405
        %v2484 = vadd.f32 %v2144, %v2408
        %v2485 = vadd.f32 %v2149, %v2413
        %v2486 = vadd.f32 %v2152, %v2416
        %v2487 = vadd.f32 %v2157, %v2421
        %v2488 = vadd.f32 %v2160, %v2424
        %v2489 = vadd.f32 %v2165, %v2429
        %v2490 = vadd.f32 %v2168, %v2432
        %v2491 = vadd.f32 %v2173, %v2437
        %v2492 = vadd.f32 %v2176, %v2440
        %v2493 = vadd.f32 %v2181, %v2445
        %v2494 = vadd.f32 %v2184, %v2448
        %v2495 = vadd.f32 %v2189, %v2453
        %v2496 = vadd.f32 %v2192, %v2456
        %v2497 = vadd.f32 %v2197, %v2461
        %v2498 = vadd.f32 %v2200, %v2464
        %v2500 = vlaneseq
        %v2501 = vshrl.u32 %v2500, 7
        %v2502 = vsub.s32 0, %v2501
        %v2503 = vrot.slane %v1080, %v2502
        %v2505 = vadd.f32 %v2467, %v2503
        %v2506 = vadd.f32 %v2468, %v2503
        %v2507 = vadd.f32 %v2469, %v2503
        %v2508 = vadd.f32 %v2470, %v2503
        %v2509 = vadd.f32 %v2471, %v2503
        %v2510 = vadd.f32 %v2472, %v2503
        %v2511 = vadd.f32 %v2473, %v2503
        %v2512 = vadd.f32 %v2474, %v2503
        %v2513 = vadd.f32 %v2475, %v2503
        %v2514 = vadd.f32 %v2476, %v2503
        %v2515 = vadd.f32 %v2477, %v2503
        %v2516 = vadd.f32 %v2478, %v2503
        %v2517 = vadd.f32 %v2479, %v2503
        %v2518 = vadd.f32 %v2480, %v2503
        %v2519 = vadd.f32 %v2481, %v2503
        %v2520 = vadd.f32 %v2482, %v2503
        %v2521 = vadd.f32 %v2483, %v2503
        %v2522 = vadd.f32 %v2484, %v2503
        %v2523 = vadd.f32 %v2485, %v2503
        %v2524 = vadd.f32 %v2486, %v2503
        %v2525 = vadd.f32 %v2487, %v2503
        %v2526 = vadd.f32 %v2488, %v2503
        %v2527 = vadd.f32 %v2489, %v2503
        %v2528 = vadd.f32 %v2490, %v2503
        %v2529 = vadd.f32 %v2491, %v2503
        %v2530 = vadd.f32 %v2492, %v2503
        %v2531 = vadd.f32 %v2493, %v2503
        %v2532 = vadd.f32 %v2494, %v2503
        %v2533 = vadd.f32 %v2495, %v2503
        %v2534 = vadd.f32 %v2496, %v2503
        %v2535 = vadd.f32 %v2497, %v2503
        %v2536 = vadd.f32 %v2498, %v2503
        %v2537 = vadd.f32 %v2505, %v1048
        %v2538 = vadd.f32 %v2506, %v1049
        %v2539 = vadd.f32 %v2507, %v1050
        %v2540 = vadd.f32 %v2508, %v1051
        %v2541 = vadd.f32 %v2509, %v1052
        %v2542 = vadd.f32 %v2510, %v1053
        %v2543 = vadd.f32 %v2511, %v1054
        %v2544 = vadd.f32 %v2512, %v1055
        %v2545 = vadd.f32 %v2513, %v1056
        %v2546 = vadd.f32 %v2514, %v1057
        %v2547 = vadd.f32 %v2515, %v1058
        %v2548 = vadd.f32 %v2516, %v1059
        %v2549 = vadd.f32 %v2517, %v1060
        %v2550 = vadd.f32 %v2518, %v1061
        %v2551 = vadd.f32 %v2519, %v1062
        %v2552 = vadd.f32 %v2520, %v1063
        %v2553 = vadd.f32 %v2521, %v1064
        %v2554 = vadd.f32 %v2522, %v1065
        %v2555 = vadd.f32 %v2523, %v1066
        %v2556 = vadd.f32 %v2524, %v1067
        %v2557 = vadd.f32 %v2525, %v1068
        %v2558 = vadd.f32 %v2526, %v1069
        %v2559 = vadd.f32 %v2527, %v1070
        %v2560 = vadd.f32 %v2528, %v1071
        %v2561 = vadd.f32 %v2529, %v1072
        %v2562 = vadd.f32 %v2530, %v1073
        %v2563 = vadd.f32 %v2531, %v1074
        %v2564 = vadd.f32 %v2532, %v1075
        %v2565 = vadd.f32 %v2533, %v1076
        %v2566 = vadd.f32 %v2534, %v1077
        %v2567 = vadd.f32 %v2535, %v1078
        %v2568 = vadd.f32 %v2536, %v1079
        %v2569 = vxor.u32 %v2537, 2147483648
        %v2570 = vxor.u32 %v2538, 2147483648
        %v2571 = vxor.u32 %v2539, 2147483648
        %v2572 = vxor.u32 %v2540, 2147483648
        %v2573 = vxor.u32 %v2541, 2147483648
        %v2574 = vxor.u32 %v2542, 2147483648
        %v2575 = vxor.u32 %v2543, 2147483648
        %v2576 = vxor.u32 %v2544, 2147483648
        %v2577 = vxor.u32 %v2545, 2147483648
        %v2578 = vxor.u32 %v2546, 2147483648
        %v2579 = vxor.u32 %v2547, 2147483648
        %v2580 = vxor.u32 %v2548, 2147483648
        %v2581 = vxor.u32 %v2549, 2147483648
        %v2582 = vxor.u32 %v2550, 2147483648
        %v2583 = vxor.u32 %v2551, 2147483648
        %v2584 = vxor.u32 %v2552, 2147483648
        %v2585 = vxor.u32 %v2553, 2147483648
        %v2586 = vxor.u32 %v2554, 2147483648
        %v2587 = vxor.u32 %v2555, 2147483648
        %v2588 = vxor.u32 %v2556, 2147483648
        %v2589 = vxor.u32 %v2557, 2147483648
        %v2590 = vxor.u32 %v2558, 2147483648
        %v2591 = vxor.u32 %v2559, 2147483648
        %v2592 = vxor.u32 %v2560, 2147483648
        %v2593 = vxor.u32 %v2561, 2147483648
        %v2594 = vxor.u32 %v2562, 2147483648
        %v2595 = vxor.u32 %v2563, 2147483648
        %v2596 = vxor.u32 %v2564, 2147483648
        %v2597 = vxor.u32 %v2565, 2147483648
        %v2598 = vxor.u32 %v2566, 2147483648
        %v2599 = vxor.u32 %v2567, 2147483648
        %v2600 = vxor.u32 %v2568, 2147483648
        %v2601 = vmul.f32 %v2569, 1.442695
        %v2602 = vpow.pop %v2601
        %v2603 = vmul.f32 %v2570, 1.442695
        %v2604 = vpow.pop %v2603
        %v2605 = vmul.f32 %v2571, 1.442695
        %v2606 = vpow.pop %v2605
        %v2607 = vmul.f32 %v2572, 1.442695
        %v2608 = vpow.pop %v2607
        %v2609 = vmul.f32 %v2573, 1.442695
        %v2610 = vpow.pop %v2609
        %v2611 = vmul.f32 %v2574, 1.442695
        %v2612 = vpow.pop %v2611
        %v2613 = vmul.f32 %v2575, 1.442695
        %v2614 = vpow.pop %v2613
        %v2615 = vmul.f32 %v2576, 1.442695
        %v2616 = vpow.pop %v2615
        %v2617 = vmul.f32 %v2577, 1.442695
        %v2618 = vpow.pop %v2617
        %v2619 = vmul.f32 %v2578, 1.442695
        %v2620 = vpow.pop %v2619
        %v2621 = vmul.f32 %v2579, 1.442695
        %v2622 = vpow.pop %v2621
        %v2623 = vmul.f32 %v2580, 1.442695
        %v2624 = vpow.pop %v2623
        %v2625 = vmul.f32 %v2581, 1.442695
        %v2626 = vpow.pop %v2625
        %v2627 = vmul.f32 %v2582, 1.442695
        %v2628 = vpow.pop %v2627
        %v2629 = vmul.f32 %v2583, 1.442695
        %v2630 = vpow.pop %v2629
        %v2631 = vmul.f32 %v2584, 1.442695
        %v2632 = vpow.pop %v2631
        %v2633 = vmul.f32 %v2585, 1.442695
        %v2634 = vpow.pop %v2633
        %v2635 = vmul.f32 %v2586, 1.442695
        %v2636 = vpow.pop %v2635
        %v2637 = vmul.f32 %v2587, 1.442695
        %v2638 = vpow.pop %v2637
        %v2639 = vmul.f32 %v2588, 1.442695
        %v2640 = vpow.pop %v2639
        %v2641 = vmul.f32 %v2589, 1.442695
        %v2642 = vpow.pop %v2641
        %v2643 = vmul.f32 %v2590, 1.442695
        %v2644 = vpow.pop %v2643
        %v2645 = vmul.f32 %v2591, 1.442695
        %v2646 = vpow.pop %v2645
        %v2647 = vmul.f32 %v2592, 1.442695
        %v2648 = vpow.pop %v2647
        %v2649 = vmul.f32 %v2593, 1.442695
        %v2650 = vpow.pop %v2649
        %v2651 = vmul.f32 %v2594, 1.442695
        %v2652 = vpow.pop %v2651
        %v2653 = vmul.f32 %v2595, 1.442695
        %v2654 = vpow.pop %v2653
        %v2655 = vmul.f32 %v2596, 1.442695
        %v2656 = vpow.pop %v2655
        %v2657 = vmul.f32 %v2597, 1.442695
        %v2658 = vpow.pop %v2657
        %v2659 = vmul.f32 %v2598, 1.442695
        %v2660 = vpow.pop %v2659
        %v2661 = vmul.f32 %v2599, 1.442695
        %v2662 = vpow.pop %v2661
        %v2663 = vmul.f32 %v2600, 1.442695
        %v2664 = vpow.pop %v2663
        %v2665 = vadd.f32 %v2602, 1.0
        %v2666 = vadd.f32 %v2604, 1.0
        %v2667 = vadd.f32 %v2606, 1.0
        %v2668 = vadd.f32 %v2608, 1.0
        %v2669 = vadd.f32 %v2610, 1.0
        %v2670 = vadd.f32 %v2612, 1.0
        %v2671 = vadd.f32 %v2614, 1.0
        %v2672 = vadd.f32 %v2616, 1.0
        %v2673 = vadd.f32 %v2618, 1.0
        %v2674 = vadd.f32 %v2620, 1.0
        %v2675 = vadd.f32 %v2622, 1.0
        %v2676 = vadd.f32 %v2624, 1.0
        %v2677 = vadd.f32 %v2626, 1.0
        %v2678 = vadd.f32 %v2628, 1.0
        %v2679 = vadd.f32 %v2630, 1.0
        %v2680 = vadd.f32 %v2632, 1.0
        %v2681 = vadd.f32 %v2634, 1.0
        %v2682 = vadd.f32 %v2636, 1.0
        %v2683 = vadd.f32 %v2638, 1.0
        %v2684 = vadd.f32 %v2640, 1.0
        %v2685 = vadd.f32 %v2642, 1.0
        %v2686 = vadd.f32 %v2644, 1.0
        %v2687 = vadd.f32 %v2646, 1.0
        %v2688 = vadd.f32 %v2648, 1.0
        %v2689 = vadd.f32 %v2650, 1.0
        %v2690 = vadd.f32 %v2652, 1.0
        %v2691 = vadd.f32 %v2654, 1.0
        %v2692 = vadd.f32 %v2656, 1.0
        %v2693 = vadd.f32 %v2658, 1.0
        %v2694 = vadd.f32 %v2660, 1.0
        %v2695 = vadd.f32 %v2662, 1.0
        %v2696 = vadd.f32 %v2664, 1.0
        %v2697 = vrcp.pop %v2665
        %v2698 = vmul.f32 1.0, %v2697
        %v2699 = vrcp.pop %v2666
        %v2700 = vmul.f32 1.0, %v2699
        %v2701 = vrcp.pop %v2667
        %v2702 = vmul.f32 1.0, %v2701
        %v2703 = vrcp.pop %v2668
        %v2704 = vmul.f32 1.0, %v2703
        %v2705 = vrcp.pop %v2669
        %v2706 = vmul.f32 1.0, %v2705
        %v2707 = vrcp.pop %v2670
        %v2708 = vmul.f32 1.0, %v2707
        %v2709 = vrcp.pop %v2671
        %v2710 = vmul.f32 1.0, %v2709
        %v2711 = vrcp.pop %v2672
        %v2712 = vmul.f32 1.0, %v2711
        %v2713 = vrcp.pop %v2673
        %v2714 = vmul.f32 1.0, %v2713
        %v2715 = vrcp.pop %v2674
        %v2716 = vmul.f32 1.0, %v2715
        %v2717 = vrcp.pop %v2675
        %v2718 = vmul.f32 1.0, %v2717
        %v2719 = vrcp.pop %v2676
        %v2720 = vmul.f32 1.0, %v2719
        %v2721 = vrcp.pop %v2677
        %v2722 = vmul.f32 1.0, %v2721
        %v2723 = vrcp.pop %v2678
        %v2724 = vmul.f32 1.0, %v2723
        %v2725 = vrcp.pop %v2679
        %v2726 = vmul.f32 1.0, %v2725
        %v2727 = vrcp.pop %v2680
        %v2728 = vmul.f32 1.0, %v2727
        %v2729 = vrcp.pop %v2681
        %v2730 = vmul.f32 1.0, %v2729
        %v2731 = vrcp.pop %v2682
        %v2732 = vmul.f32 1.0, %v2731
        %v2733 = vrcp.pop %v2683
        %v2734 = vmul.f32 1.0, %v2733
        %v2735 = vrcp.pop %v2684
        %v2736 = vmul.f32 1.0, %v2735
        %v2737 = vrcp.pop %v2685
        %v2738 = vmul.f32 1.0, %v2737
        %v2739 = vrcp.pop %v2686
        %v2740 = vmul.f32 1.0, %v2739
        %v2741 = vrcp.pop %v2687
        %v2742 = vmul.f32 1.0, %v2741
        %v2743 = vrcp.pop %v2688
        %v2744 = vmul.f32 1.0, %v2743
        %v2745 = vrcp.pop %v2689
        %v2746 = vmul.f32 1.0, %v2745
        %v2747 = vrcp.pop %v2690
        %v2748 = vmul.f32 1.0, %v2747
        %v2749 = vrcp.pop %v2691
        %v2750 = vmul.f32 1.0, %v2749
        %v2751 = vrcp.pop %v2692
        %v2752 = vmul.f32 1.0, %v2751
        %v2753 = vrcp.pop %v2693
        %v2754 = vmul.f32 1.0, %v2753
        %v2755 = vrcp.pop %v2694
        %v2756 = vmul.f32 1.0, %v2755
        %v2757 = vrcp.pop %v2695
        %v2758 = vmul.f32 1.0, %v2757
        %v2759 = vrcp.pop %v2696
        %v2760 = vmul.f32 1.0, %v2759
        %2793 = vrot.lane.b32.xlu0 %v984, 32
        %v2794 = vpop.permute.xlu0 %2793
        %2795 = vrot.lane.b32.xlu0 %v985, 32
        %v2796 = vpop.permute.xlu0 %2795
        %2797 = vrot.lane.b32.xlu0 %v986, 32
        %v2798 = vpop.permute.xlu0 %2797
        %2799 = vrot.lane.b32.xlu0 %v987, 32
        %v2800 = vpop.permute.xlu0 %2799
        %2801 = vrot.lane.b32.xlu0 %v988, 32
        %v2802 = vpop.permute.xlu0 %2801
        %2803 = vrot.lane.b32.xlu0 %v989, 32
        %v2804 = vpop.permute.xlu0 %2803
        %2805 = vrot.lane.b32.xlu0 %v990, 32
        %v2806 = vpop.permute.xlu0 %2805
        %2807 = vrot.lane.b32.xlu0 %v991, 32
        %v2808 = vpop.permute.xlu0 %2807
        %2809 = vrot.lane.b32.xlu0 %v992, 32
        %v2810 = vpop.permute.xlu0 %2809
        %2811 = vrot.lane.b32.xlu0 %v993, 32
        %v2812 = vpop.permute.xlu0 %2811
        %2813 = vrot.lane.b32.xlu0 %v994, 32
        %v2814 = vpop.permute.xlu0 %2813
        %2815 = vrot.lane.b32.xlu0 %v995, 32
        %v2816 = vpop.permute.xlu0 %2815
        %2817 = vrot.lane.b32.xlu0 %v996, 32
        %v2818 = vpop.permute.xlu0 %2817
        %2819 = vrot.lane.b32.xlu0 %v997, 32
        %v2820 = vpop.permute.xlu0 %2819
        %2821 = vrot.lane.b32.xlu0 %v998, 32
        %v2822 = vpop.permute.xlu0 %2821
        %2823 = vrot.lane.b32.xlu0 %v999, 32
        %v2824 = vpop.permute.xlu0 %2823
        %2825 = vrot.lane.b32.xlu0 %v1000, 32
        %v2826 = vpop.permute.xlu0 %2825
        %2827 = vrot.lane.b32.xlu0 %v1001, 32
        %v2828 = vpop.permute.xlu0 %2827
        %2829 = vrot.lane.b32.xlu0 %v1002, 32
        %v2830 = vpop.permute.xlu0 %2829
        %2831 = vrot.lane.b32.xlu0 %v1003, 32
        %v2832 = vpop.permute.xlu0 %2831
        %2833 = vrot.lane.b32.xlu0 %v1004, 32
        %v2834 = vpop.permute.xlu0 %2833
        %2835 = vrot.lane.b32.xlu0 %v1005, 32
        %v2836 = vpop.permute.xlu0 %2835
        %2837 = vrot.lane.b32.xlu0 %v1006, 32
        %v2838 = vpop.permute.xlu0 %2837
        %2839 = vrot.lane.b32.xlu0 %v1007, 32
        %v2840 = vpop.permute.xlu0 %2839
        %2841 = vrot.lane.b32.xlu0 %v1008, 32
        %v2842 = vpop.permute.xlu0 %2841
        %2843 = vrot.lane.b32.xlu0 %v1009, 32
        %v2844 = vpop.permute.xlu0 %2843
        %2845 = vrot.lane.b32.xlu0 %v1010, 32
        %v2846 = vpop.permute.xlu0 %2845
        %2847 = vrot.lane.b32.xlu0 %v1011, 32
        %v2848 = vpop.permute.xlu0 %2847
        %2849 = vrot.lane.b32.xlu0 %v1012, 32
        %v2850 = vpop.permute.xlu0 %2849
        %2851 = vrot.lane.b32.xlu0 %v1013, 32
        %v2852 = vpop.permute.xlu0 %2851
        %2853 = vrot.lane.b32.xlu0 %v1014, 32
        %v2854 = vpop.permute.xlu0 %2853
        %2855 = vrot.lane.b32.xlu0 %v1015, 32
        %v2856 = vpop.permute.xlu0 %2855
        %v2889 = vmul.f32 %v2698, %v2794
        %v2890 = vmul.f32 %v2700, %v2796
        %v2891 = vmul.f32 %v2702, %v2798
        %v2892 = vmul.f32 %v2704, %v2800
        %v2893 = vmul.f32 %v2706, %v2802
        %v2894 = vmul.f32 %v2708, %v2804
        %v2895 = vmul.f32 %v2710, %v2806
        %v2896 = vmul.f32 %v2712, %v2808
        %v2897 = vmul.f32 %v2714, %v2810
        %v2898 = vmul.f32 %v2716, %v2812
        %v2899 = vmul.f32 %v2718, %v2814
        %v2900 = vmul.f32 %v2720, %v2816
        %v2901 = vmul.f32 %v2722, %v2818
        %v2902 = vmul.f32 %v2724, %v2820
        %v2903 = vmul.f32 %v2726, %v2822
        %v2904 = vmul.f32 %v2728, %v2824
        %v2905 = vmul.f32 %v2730, %v2826
        %v2906 = vmul.f32 %v2732, %v2828
        %v2907 = vmul.f32 %v2734, %v2830
        %v2908 = vmul.f32 %v2736, %v2832
        %v2909 = vmul.f32 %v2738, %v2834
        %v2910 = vmul.f32 %v2740, %v2836
        %v2911 = vmul.f32 %v2742, %v2838
        %v2912 = vmul.f32 %v2744, %v2840
        %v2913 = vmul.f32 %v2746, %v2842
        %v2914 = vmul.f32 %v2748, %v2844
        %v2915 = vmul.f32 %v2750, %v2846
        %v2916 = vmul.f32 %v2752, %v2848
        %v2917 = vmul.f32 %v2754, %v2850
        %v2918 = vmul.f32 %v2756, %v2852
        %v2919 = vmul.f32 %v2758, %v2854
        %v2920 = vmul.f32 %v2760, %v2856
        %v2921 = vpack.c.bf16 %v2890, %v2889
        %v2922 = vpack.c.bf16 %v2892, %v2891
        %v2923 = vpack.c.bf16 %v2894, %v2893
        %v2924 = vpack.c.bf16 %v2896, %v2895
        %v2925 = vpack.c.bf16 %v2898, %v2897
        %v2926 = vpack.c.bf16 %v2900, %v2899
        %v2927 = vpack.c.bf16 %v2902, %v2901
        %v2928 = vpack.c.bf16 %v2904, %v2903
        %v2929 = vpack.c.bf16 %v2906, %v2905
        %v2930 = vpack.c.bf16 %v2908, %v2907
        %v2931 = vpack.c.bf16 %v2910, %v2909
        %v2932 = vpack.c.bf16 %v2912, %v2911
        %v2933 = vpack.c.bf16 %v2914, %v2913
        %v2934 = vpack.c.bf16 %v2916, %v2915
        %v2935 = vpack.c.bf16 %v2918, %v2917
        %v2936 = vpack.c.bf16 %v2920, %v2919
        %v2953 = vunpack.c.l.b16 %v2921
        %v2954 = vunpack.c.h.b16 %v2921
        %v2955 = vunpack.c.l.b16 %v2922
        %v2956 = vunpack.c.h.b16 %v2922
        %v2957 = vunpack.c.l.b16 %v2923
        %v2958 = vunpack.c.h.b16 %v2923
        %v2959 = vunpack.c.l.b16 %v2924
        %v2960 = vunpack.c.h.b16 %v2924
        %v2961 = vunpack.c.l.b16 %v2925
        %v2962 = vunpack.c.h.b16 %v2925
        %v2963 = vunpack.c.l.b16 %v2926
        %v2964 = vunpack.c.h.b16 %v2926
        %v2965 = vunpack.c.l.b16 %v2927
        %v2966 = vunpack.c.h.b16 %v2927
        %v2967 = vunpack.c.l.b16 %v2928
        %v2968 = vunpack.c.h.b16 %v2928
        %v2969 = vunpack.c.l.b16 %v2929
        %v2970 = vunpack.c.h.b16 %v2929
        %v2971 = vunpack.c.l.b16 %v2930
        %v2972 = vunpack.c.h.b16 %v2930
        %v2973 = vunpack.c.l.b16 %v2931
        %v2974 = vunpack.c.h.b16 %v2931
        %v2975 = vunpack.c.l.b16 %v2932
        %v2976 = vunpack.c.h.b16 %v2932
        %v2977 = vunpack.c.l.b16 %v2933
        %v2978 = vunpack.c.h.b16 %v2933
        %v2979 = vunpack.c.l.b16 %v2934
        %v2980 = vunpack.c.h.b16 %v2934
        %v2981 = vunpack.c.l.b16 %v2935
        %v2982 = vunpack.c.h.b16 %v2935
        %v2983 = vunpack.c.l.b16 %v2936
        %v2984 = vunpack.c.h.b16 %v2936
        %v2985 = vpack.c.b16 %v2953, %v2953
        %v2986 = vpack.c.b16 %v2954, %v2954
        %v2987 = vpack.c.b16 %v2955, %v2955
        %v2988 = vpack.c.b16 %v2956, %v2956
        %v2989 = vpack.c.b16 %v2957, %v2957
        %v2990 = vpack.c.b16 %v2958, %v2958
        %v2991 = vpack.c.b16 %v2959, %v2959
        %v2992 = vpack.c.b16 %v2960, %v2960
        %v2993 = vpack.c.b16 %v2961, %v2961
        %v2994 = vpack.c.b16 %v2962, %v2962
        %v2995 = vpack.c.b16 %v2963, %v2963
        %v2996 = vpack.c.b16 %v2964, %v2964
        %v2997 = vpack.c.b16 %v2965, %v2965
        %v2998 = vpack.c.b16 %v2966, %v2966
        %v2999 = vpack.c.b16 %v2967, %v2967
        %v3000 = vpack.c.b16 %v2968, %v2968
        %v3001 = vpack.c.b16 %v2969, %v2969
        %v3002 = vpack.c.b16 %v2970, %v2970
        %v3003 = vpack.c.b16 %v2971, %v2971
        %v3004 = vpack.c.b16 %v2972, %v2972
        %v3005 = vpack.c.b16 %v2973, %v2973
        %v3006 = vpack.c.b16 %v2974, %v2974
        %v3007 = vpack.c.b16 %v2975, %v2975
        %v3008 = vpack.c.b16 %v2976, %v2976
        %v3009 = vpack.c.b16 %v2977, %v2977
        %v3010 = vpack.c.b16 %v2978, %v2978
        %v3011 = vpack.c.b16 %v2979, %v2979
        %v3012 = vpack.c.b16 %v2980, %v2980
        %v3013 = vpack.c.b16 %v2981, %v2981
        %v3014 = vpack.c.b16 %v2982, %v2982
        %v3015 = vpack.c.b16 %v2983, %v2983
        %v3016 = vpack.c.b16 %v2984, %v2984
        %v3018 = vshrl.u32 %v2985, 16
        %v3020 = vrot.slane %v3018, 7
        %v3021 = vshll.u32 %v2985, 16
        %v3023 = vor.u32 %v3020, %v3021
        %v3024 = vrot.slane %v3020, 4
        %v3026 = vshrl.u32 %v2986, 16
        %v3028 = vrot.slane %v3026, 7
        %v3029 = vshll.u32 %v2986, 16
        %v3031 = vor.u32 %v3028, %v3029
        %v3032 = vsel %vm551, %v3024, %v3031
        %v3033 = vrot.slane %v3028, 4
        %v3035 = vshrl.u32 %v2987, 16
        %v3037 = vrot.slane %v3035, 7
        %v3038 = vshll.u32 %v2987, 16
        %v3040 = vor.u32 %v3037, %v3038
        %v3041 = vrot.slane %v3037, 4
        %v3043 = vshrl.u32 %v2988, 16
        %v3045 = vrot.slane %v3043, 7
        %v3046 = vshll.u32 %v2988, 16
        %v3048 = vor.u32 %v3045, %v3046
        %v3049 = vsel %vm551, %v3041, %v3048
        %v3050 = vrot.slane %v3045, 4
        %v3052 = vshrl.u32 %v2989, 16
        %v3054 = vrot.slane %v3052, 7
        %v3055 = vshll.u32 %v2989, 16
        %v3057 = vor.u32 %v3054, %v3055
        %v3058 = vrot.slane %v3054, 4
        %v3060 = vshrl.u32 %v2990, 16
        %v3062 = vrot.slane %v3060, 7
        %v3063 = vshll.u32 %v2990, 16
        %v3065 = vor.u32 %v3062, %v3063
        %v3066 = vsel %vm551, %v3058, %v3065
        %v3067 = vrot.slane %v3062, 4
        %v3069 = vshrl.u32 %v2991, 16
        %v3071 = vrot.slane %v3069, 7
        %v3072 = vshll.u32 %v2991, 16
        %v3074 = vor.u32 %v3071, %v3072
        %v3075 = vrot.slane %v3071, 4
        %v3077 = vshrl.u32 %v2992, 16
        %v3079 = vrot.slane %v3077, 7
        %v3080 = vshll.u32 %v2992, 16
        %v3082 = vor.u32 %v3079, %v3080
        %v3083 = vsel %vm551, %v3075, %v3082
        %v3084 = vrot.slane %v3079, 4
        %v3086 = vshrl.u32 %v2993, 16
        %v3088 = vrot.slane %v3086, 7
        %v3089 = vshll.u32 %v2993, 16
        %v3091 = vor.u32 %v3088, %v3089
        %v3092 = vrot.slane %v3088, 4
        %v3094 = vshrl.u32 %v2994, 16
        %v3096 = vrot.slane %v3094, 7
        %v3097 = vshll.u32 %v2994, 16
        %v3099 = vor.u32 %v3096, %v3097
        %v3100 = vsel %vm551, %v3092, %v3099
        %v3101 = vrot.slane %v3096, 4
        %v3103 = vshrl.u32 %v2995, 16
        %v3105 = vrot.slane %v3103, 7
        %v3106 = vshll.u32 %v2995, 16
        %v3108 = vor.u32 %v3105, %v3106
        %v3109 = vrot.slane %v3105, 4
        %v3111 = vshrl.u32 %v2996, 16
        %v3113 = vrot.slane %v3111, 7
        %v3114 = vshll.u32 %v2996, 16
        %v3116 = vor.u32 %v3113, %v3114
        %v3117 = vsel %vm551, %v3109, %v3116
        %v3118 = vrot.slane %v3113, 4
        %v3120 = vshrl.u32 %v2997, 16
        %v3122 = vrot.slane %v3120, 7
        %v3123 = vshll.u32 %v2997, 16
        %v3125 = vor.u32 %v3122, %v3123
        %v3126 = vrot.slane %v3122, 4
        %v3128 = vshrl.u32 %v2998, 16
        %v3130 = vrot.slane %v3128, 7
        %v3131 = vshll.u32 %v2998, 16
        %v3133 = vor.u32 %v3130, %v3131
        %v3134 = vsel %vm551, %v3126, %v3133
        %v3135 = vrot.slane %v3130, 4
        %v3137 = vshrl.u32 %v2999, 16
        %v3139 = vrot.slane %v3137, 7
        %v3140 = vshll.u32 %v2999, 16
        %v3142 = vor.u32 %v3139, %v3140
        %v3143 = vrot.slane %v3139, 4
        %v3145 = vshrl.u32 %v3000, 16
        %v3147 = vrot.slane %v3145, 7
        %v3148 = vshll.u32 %v3000, 16
        %v3150 = vor.u32 %v3147, %v3148
        %v3151 = vsel %vm551, %v3143, %v3150
        %v3152 = vrot.slane %v3147, 4
        %v3154 = vshrl.u32 %v3001, 16
        %v3156 = vrot.slane %v3154, 7
        %v3157 = vshll.u32 %v3001, 16
        %v3159 = vor.u32 %v3156, %v3157
        %v3160 = vrot.slane %v3156, 4
        %v3162 = vshrl.u32 %v3002, 16
        %v3164 = vrot.slane %v3162, 7
        %v3165 = vshll.u32 %v3002, 16
        %v3167 = vor.u32 %v3164, %v3165
        %v3168 = vsel %vm551, %v3160, %v3167
        %v3169 = vrot.slane %v3164, 4
        %v3171 = vshrl.u32 %v3003, 16
        %v3173 = vrot.slane %v3171, 7
        %v3174 = vshll.u32 %v3003, 16
        %v3176 = vor.u32 %v3173, %v3174
        %v3177 = vrot.slane %v3173, 4
        %v3179 = vshrl.u32 %v3004, 16
        %v3181 = vrot.slane %v3179, 7
        %v3182 = vshll.u32 %v3004, 16
        %v3184 = vor.u32 %v3181, %v3182
        %v3185 = vsel %vm551, %v3177, %v3184
        %v3186 = vrot.slane %v3181, 4
        %v3188 = vshrl.u32 %v3005, 16
        %v3190 = vrot.slane %v3188, 7
        %v3191 = vshll.u32 %v3005, 16
        %v3193 = vor.u32 %v3190, %v3191
        %v3194 = vrot.slane %v3190, 4
        %v3196 = vshrl.u32 %v3006, 16
        %v3198 = vrot.slane %v3196, 7
        %v3199 = vshll.u32 %v3006, 16
        %v3201 = vor.u32 %v3198, %v3199
        %v3202 = vsel %vm551, %v3194, %v3201
        %v3203 = vrot.slane %v3198, 4
        %v3205 = vshrl.u32 %v3007, 16
        %v3207 = vrot.slane %v3205, 7
        %v3208 = vshll.u32 %v3007, 16
        %v3210 = vor.u32 %v3207, %v3208
        %v3211 = vrot.slane %v3207, 4
        %v3213 = vshrl.u32 %v3008, 16
        %v3215 = vrot.slane %v3213, 7
        %v3216 = vshll.u32 %v3008, 16
        %v3218 = vor.u32 %v3215, %v3216
        %v3219 = vsel %vm551, %v3211, %v3218
        %v3220 = vrot.slane %v3215, 4
        %v3222 = vshrl.u32 %v3009, 16
        %v3224 = vrot.slane %v3222, 7
        %v3225 = vshll.u32 %v3009, 16
        %v3227 = vor.u32 %v3224, %v3225
        %v3228 = vrot.slane %v3224, 4
        %v3230 = vshrl.u32 %v3010, 16
        %v3232 = vrot.slane %v3230, 7
        %v3233 = vshll.u32 %v3010, 16
        %v3235 = vor.u32 %v3232, %v3233
        %v3236 = vsel %vm551, %v3228, %v3235
        %v3237 = vrot.slane %v3232, 4
        %v3239 = vshrl.u32 %v3011, 16
        %v3241 = vrot.slane %v3239, 7
        %v3242 = vshll.u32 %v3011, 16
        %v3244 = vor.u32 %v3241, %v3242
        %v3245 = vrot.slane %v3241, 4
        %v3247 = vshrl.u32 %v3012, 16
        %v3249 = vrot.slane %v3247, 7
        %v3250 = vshll.u32 %v3012, 16
        %v3252 = vor.u32 %v3249, %v3250
        %v3253 = vsel %vm551, %v3245, %v3252
        %v3254 = vrot.slane %v3249, 4
        %v3256 = vshrl.u32 %v3013, 16
        %v3258 = vrot.slane %v3256, 7
        %v3259 = vshll.u32 %v3013, 16
        %v3261 = vor.u32 %v3258, %v3259
        %v3262 = vrot.slane %v3258, 4
        %v3264 = vshrl.u32 %v3014, 16
        %v3266 = vrot.slane %v3264, 7
        %v3267 = vshll.u32 %v3014, 16
        %v3269 = vor.u32 %v3266, %v3267
        %v3270 = vsel %vm551, %v3262, %v3269
        %v3271 = vrot.slane %v3266, 4
        %v3273 = vshrl.u32 %v3015, 16
        %v3275 = vrot.slane %v3273, 7
        %v3276 = vshll.u32 %v3015, 16
        %v3278 = vor.u32 %v3275, %v3276
        %v3279 = vrot.slane %v3275, 4
        %v3281 = vshrl.u32 %v3016, 16
        %v3283 = vrot.slane %v3281, 7
        %v3284 = vshll.u32 %v3016, 16
        %v3286 = vor.u32 %v3283, %v3284
        %v3287 = vsel %vm551, %v3279, %v3286
        %v3288 = vrot.slane %v3283, 4
        %3289 = vrot.lane.b32.xlu0 %v3023, 96
        %v3290 = vpop.permute.xlu0 %3289
        %3291 = vrot.lane.b32.xlu0 %v3032, 96
        %v3292 = vpop.permute.xlu0 %3291
        %3293 = vrot.lane.b32.xlu0 %v3033, 96
        %v3294 = vpop.permute.xlu0 %3293
        %3295 = vrot.lane.b32.xlu0 %v3040, 96
        %v3296 = vpop.permute.xlu0 %3295
        %3297 = vrot.lane.b32.xlu0 %v3049, 96
        %v3298 = vpop.permute.xlu0 %3297
        %3299 = vrot.lane.b32.xlu0 %v3050, 96
        %v3300 = vpop.permute.xlu0 %3299
        %3301 = vrot.lane.b32.xlu0 %v3057, 96
        %v3302 = vpop.permute.xlu0 %3301
        %3303 = vrot.lane.b32.xlu0 %v3066, 96
        %v3304 = vpop.permute.xlu0 %3303
        %3305 = vrot.lane.b32.xlu0 %v3067, 96
        %v3306 = vpop.permute.xlu0 %3305
        %3307 = vrot.lane.b32.xlu0 %v3074, 96
        %v3308 = vpop.permute.xlu0 %3307
        %3309 = vrot.lane.b32.xlu0 %v3083, 96
        %v3310 = vpop.permute.xlu0 %3309
        %3311 = vrot.lane.b32.xlu0 %v3084, 96
        %v3312 = vpop.permute.xlu0 %3311
        %3313 = vrot.lane.b32.xlu0 %v3091, 96
        %v3314 = vpop.permute.xlu0 %3313
        %3315 = vrot.lane.b32.xlu0 %v3100, 96
        %v3316 = vpop.permute.xlu0 %3315
        %3317 = vrot.lane.b32.xlu0 %v3101, 96
        %v3318 = vpop.permute.xlu0 %3317
        %3319 = vrot.lane.b32.xlu0 %v3108, 96
        %v3320 = vpop.permute.xlu0 %3319
        %3321 = vrot.lane.b32.xlu0 %v3117, 96
        %v3322 = vpop.permute.xlu0 %3321
        %3323 = vrot.lane.b32.xlu0 %v3118, 96
        %v3324 = vpop.permute.xlu0 %3323
        %3325 = vrot.lane.b32.xlu0 %v3125, 96
        %v3326 = vpop.permute.xlu0 %3325
        %3327 = vrot.lane.b32.xlu0 %v3134, 96
        %v3328 = vpop.permute.xlu0 %3327
        %3329 = vrot.lane.b32.xlu0 %v3135, 96
        %v3330 = vpop.permute.xlu0 %3329
        %3331 = vrot.lane.b32.xlu0 %v3142, 96
        %v3332 = vpop.permute.xlu0 %3331
        %3333 = vrot.lane.b32.xlu0 %v3151, 96
        %v3334 = vpop.permute.xlu0 %3333
        %3335 = vrot.lane.b32.xlu0 %v3152, 96
        %v3336 = vpop.permute.xlu0 %3335
        %3337 = vrot.lane.b32.xlu0 %v3159, 96
        %v3338 = vpop.permute.xlu0 %3337
        %3339 = vrot.lane.b32.xlu0 %v3168, 96
        %v3340 = vpop.permute.xlu0 %3339
        %3341 = vrot.lane.b32.xlu0 %v3169, 96
        %v3342 = vpop.permute.xlu0 %3341
        %3343 = vrot.lane.b32.xlu0 %v3176, 96
        %v3344 = vpop.permute.xlu0 %3343
        %3345 = vrot.lane.b32.xlu0 %v3185, 96
        %v3346 = vpop.permute.xlu0 %3345
        %3347 = vrot.lane.b32.xlu0 %v3186, 96
        %v3348 = vpop.permute.xlu0 %3347
        %3349 = vrot.lane.b32.xlu0 %v3193, 96
        %v3350 = vpop.permute.xlu0 %3349
        %3351 = vrot.lane.b32.xlu0 %v3202, 96
        %v3352 = vpop.permute.xlu0 %3351
        %3353 = vrot.lane.b32.xlu0 %v3203, 96
        %v3354 = vpop.permute.xlu0 %3353
        %3355 = vrot.lane.b32.xlu0 %v3210, 96
        %v3356 = vpop.permute.xlu0 %3355
        %3357 = vrot.lane.b32.xlu0 %v3219, 96
        %v3358 = vpop.permute.xlu0 %3357
        %3359 = vrot.lane.b32.xlu0 %v3220, 96
        %v3360 = vpop.permute.xlu0 %3359
        %3361 = vrot.lane.b32.xlu0 %v3227, 96
        %v3362 = vpop.permute.xlu0 %3361
        %3363 = vrot.lane.b32.xlu0 %v3236, 96
        %v3364 = vpop.permute.xlu0 %3363
        %3365 = vrot.lane.b32.xlu0 %v3237, 96
        %v3366 = vpop.permute.xlu0 %3365
        %3367 = vrot.lane.b32.xlu0 %v3244, 96
        %v3368 = vpop.permute.xlu0 %3367
        %3369 = vrot.lane.b32.xlu0 %v3253, 96
        %v3370 = vpop.permute.xlu0 %3369
        %3371 = vrot.lane.b32.xlu0 %v3254, 96
        %v3372 = vpop.permute.xlu0 %3371
        %3373 = vrot.lane.b32.xlu0 %v3261, 96
        %v3374 = vpop.permute.xlu0 %3373
        %3375 = vrot.lane.b32.xlu0 %v3270, 96
        %v3376 = vpop.permute.xlu0 %3375
        %3377 = vrot.lane.b32.xlu0 %v3271, 96
        %v3378 = vpop.permute.xlu0 %3377
        %3379 = vrot.lane.b32.xlu0 %v3278, 96
        %v3380 = vpop.permute.xlu0 %3379
        %3381 = vrot.lane.b32.xlu0 %v3287, 96
        %v3382 = vpop.permute.xlu0 %3381
        %3383 = vrot.lane.b32.xlu0 %v3288, 96
        %v3384 = vpop.permute.xlu0 %3383
        %v3433 = vld [vmem:[%s417] sm:$0xf]
        %v3434 = vsel %vm469, %v3290, %v3433
        %3435 = vst [vmem:[%s417] sm:$0xf] %v3434
        %3436 = vst.msk [vmem:[%s417 + $0x4] sm:$0xf] %vm409, %v3292
        %v3437 = vld [vmem:[%s417 + $0x8] sm:$0x1]
        %v3438 = vsel %vm419, %v3294, %v3437
        %3439 = vst [vmem:[%s417 + $0x8] sm:$0x1] %v3438
        %v3440 = vld [vmem:[%s417 + $0xc] sm:$0xf]
        %v3441 = vsel %vm469, %v3296, %v3440
        %3442 = vst [vmem:[%s417 + $0xc] sm:$0xf] %v3441
        %3443 = vst.msk [vmem:[%s417 + $0x10] sm:$0xf] %vm409, %v3298
        %v3444 = vld [vmem:[%s417 + $0x14] sm:$0x1]
        %v3445 = vsel %vm419, %v3300, %v3444
        %3446 = vst [vmem:[%s417 + $0x14] sm:$0x1] %v3445
        %v3447 = vld [vmem:[%s417 + $0x18] sm:$0xf]
        %v3448 = vsel %vm469, %v3302, %v3447
        %3449 = vst [vmem:[%s417 + $0x18] sm:$0xf] %v3448
        %3450 = vst.msk [vmem:[%s417 + $0x1c] sm:$0xf] %vm409, %v3304
        %v3451 = vld [vmem:[%s417 + $0x20] sm:$0x1]
        %v3452 = vsel %vm419, %v3306, %v3451
        %3453 = vst [vmem:[%s417 + $0x20] sm:$0x1] %v3452
        %v3454 = vld [vmem:[%s417 + $0x24] sm:$0xf]
        %v3455 = vsel %vm469, %v3308, %v3454
        %3456 = vst [vmem:[%s417 + $0x24] sm:$0xf] %v3455
        %3457 = vst.msk [vmem:[%s417 + $0x28] sm:$0xf] %vm409, %v3310
        %v3458 = vld [vmem:[%s417 + $0x2c] sm:$0x1]
        %v3459 = vsel %vm419, %v3312, %v3458
        %3460 = vst [vmem:[%s417 + $0x2c] sm:$0x1] %v3459
        %v3461 = vld [vmem:[%s417 + $0x30] sm:$0xf]
        %v3462 = vsel %vm469, %v3314, %v3461
        %3463 = vst [vmem:[%s417 + $0x30] sm:$0xf] %v3462
        %3464 = vst.msk [vmem:[%s417 + $0x34] sm:$0xf] %vm409, %v3316
        %v3465 = vld [vmem:[%s417 + $0x38] sm:$0x1]
        %v3466 = vsel %vm419, %v3318, %v3465
        %3467 = vst [vmem:[%s417 + $0x38] sm:$0x1] %v3466
        %v3468 = vld [vmem:[%s417 + $0x3c] sm:$0xf]
        %v3469 = vsel %vm469, %v3320, %v3468
        %3470 = vst [vmem:[%s417 + $0x3c] sm:$0xf] %v3469
        %3471 = vst.msk [vmem:[%s417 + $0x40] sm:$0xf] %vm409, %v3322
        %v3472 = vld [vmem:[%s417 + $0x44] sm:$0x1]
        %v3473 = vsel %vm419, %v3324, %v3472
        %3474 = vst [vmem:[%s417 + $0x44] sm:$0x1] %v3473
        %v3475 = vld [vmem:[%s417 + $0x48] sm:$0xf]
        %v3476 = vsel %vm469, %v3326, %v3475
        %3477 = vst [vmem:[%s417 + $0x48] sm:$0xf] %v3476
        %3478 = vst.msk [vmem:[%s417 + $0x4c] sm:$0xf] %vm409, %v3328
        %v3479 = vld [vmem:[%s417 + $0x50] sm:$0x1]
        %v3480 = vsel %vm419, %v3330, %v3479
        %3481 = vst [vmem:[%s417 + $0x50] sm:$0x1] %v3480
        %v3482 = vld [vmem:[%s417 + $0x54] sm:$0xf]
        %v3483 = vsel %vm469, %v3332, %v3482
        %3484 = vst [vmem:[%s417 + $0x54] sm:$0xf] %v3483
        %3485 = vst.msk [vmem:[%s417 + $0x58] sm:$0xf] %vm409, %v3334
        %v3486 = vld [vmem:[%s417 + $0x5c] sm:$0x1]
        %v3487 = vsel %vm419, %v3336, %v3486
        %3488 = vst [vmem:[%s417 + $0x5c] sm:$0x1] %v3487
        %v3489 = vld [vmem:[%s417 + $0x60] sm:$0xf]
        %v3490 = vsel %vm469, %v3338, %v3489
        %3491 = vst [vmem:[%s417 + $0x60] sm:$0xf] %v3490
        %3492 = vst.msk [vmem:[%s417 + $0x64] sm:$0xf] %vm409, %v3340
        %v3493 = vld [vmem:[%s417 + $0x68] sm:$0x1]
        %v3494 = vsel %vm419, %v3342, %v3493
        %3495 = vst [vmem:[%s417 + $0x68] sm:$0x1] %v3494
        %v3496 = vld [vmem:[%s417 + $0x6c] sm:$0xf]
        %v3497 = vsel %vm469, %v3344, %v3496
        %3498 = vst [vmem:[%s417 + $0x6c] sm:$0xf] %v3497
        %3499 = vst.msk [vmem:[%s417 + $0x70] sm:$0xf] %vm409, %v3346
        %v3500 = vld [vmem:[%s417 + $0x74] sm:$0x1]
        %v3501 = vsel %vm419, %v3348, %v3500
        %3502 = vst [vmem:[%s417 + $0x74] sm:$0x1] %v3501
        %v3503 = vld [vmem:[%s417 + $0x78] sm:$0xf]
        %v3504 = vsel %vm469, %v3350, %v3503
        %3505 = vst [vmem:[%s417 + $0x78] sm:$0xf] %v3504
        %3506 = vst.msk [vmem:[%s417 + $0x7c] sm:$0xf] %vm409, %v3352
        %v3507 = vld [vmem:[%s417 + $0x80] sm:$0x1]
        %v3508 = vsel %vm419, %v3354, %v3507
        %3509 = vst [vmem:[%s417 + $0x80] sm:$0x1] %v3508
        %v3510 = vld [vmem:[%s417 + $0x84] sm:$0xf]
        %v3511 = vsel %vm469, %v3356, %v3510
        %3512 = vst [vmem:[%s417 + $0x84] sm:$0xf] %v3511
        %3513 = vst.msk [vmem:[%s417 + $0x88] sm:$0xf] %vm409, %v3358
        %v3514 = vld [vmem:[%s417 + $0x8c] sm:$0x1]
        %v3515 = vsel %vm419, %v3360, %v3514
        %3516 = vst [vmem:[%s417 + $0x8c] sm:$0x1] %v3515
        %v3517 = vld [vmem:[%s417 + $0x90] sm:$0xf]
        %v3518 = vsel %vm469, %v3362, %v3517
        %3519 = vst [vmem:[%s417 + $0x90] sm:$0xf] %v3518
        %3520 = vst.msk [vmem:[%s417 + $0x94] sm:$0xf] %vm409, %v3364
        %v3521 = vld [vmem:[%s417 + $0x98] sm:$0x1]
        %v3522 = vsel %vm419, %v3366, %v3521
        %3523 = vst [vmem:[%s417 + $0x98] sm:$0x1] %v3522
        %v3524 = vld [vmem:[%s417 + $0x9c] sm:$0xf]
        %v3525 = vsel %vm469, %v3368, %v3524
        %3526 = vst [vmem:[%s417 + $0x9c] sm:$0xf] %v3525
        %3527 = vst.msk [vmem:[%s417 + $0xa0] sm:$0xf] %vm409, %v3370
        %v3528 = vld [vmem:[%s417 + $0xa4] sm:$0x1]
        %v3529 = vsel %vm419, %v3372, %v3528
        %3530 = vst [vmem:[%s417 + $0xa4] sm:$0x1] %v3529
        %v3531 = vld [vmem:[%s417 + $0xa8] sm:$0xf]
        %v3532 = vsel %vm469, %v3374, %v3531
        %3533 = vst [vmem:[%s417 + $0xa8] sm:$0xf] %v3532
        %3534 = vst.msk [vmem:[%s417 + $0xac] sm:$0xf] %vm409, %v3376
        %v3535 = vld [vmem:[%s417 + $0xb0] sm:$0x1]
        %v3536 = vsel %vm419, %v3378, %v3535
        %3537 = vst [vmem:[%s417 + $0xb0] sm:$0x1] %v3536
        %v3538 = vld [vmem:[%s417 + $0xb4] sm:$0xf]
        %v3539 = vsel %vm469, %v3380, %v3538
        %3540 = vst [vmem:[%s417 + $0xb4] sm:$0xf] %v3539
        %3541 = vst.msk [vmem:[%s417 + $0xb8] sm:$0xf] %vm409, %v3382
        %v3542 = vld [vmem:[%s417 + $0xbc] sm:$0x1]
        %v3543 = vsel %vm419, %v3384, %v3542
        %3544 = vst [vmem:[%s417 + $0xbc] sm:$0x1] %v3543
        %v3545 = vld [vmem:[#allocation3] sm:$0xf]
        %v3546 = vld [vmem:[#allocation3 + $0x4] sm:$0xf]
        %v3547 = vld [vmem:[#allocation3 + $0x8] sm:$0xf]
        %v3548 = vld [vmem:[#allocation3 + $0xc] sm:$0xf]
        %v3549 = vld [vmem:[#allocation3 + $0x10] sm:$0xf]
        %v3550 = vld [vmem:[#allocation3 + $0x14] sm:$0xf]
        %v3551 = vld [vmem:[#allocation3 + $0x18] sm:$0xf]
        %v3552 = vld [vmem:[#allocation3 + $0x1c] sm:$0xf]
        %v3553 = vld [vmem:[#allocation3 + $0x20] sm:$0xf]
        %v3554 = vld [vmem:[#allocation3 + $0x24] sm:$0xf]
        %v3555 = vld [vmem:[#allocation3 + $0x28] sm:$0xf]
        %v3556 = vld [vmem:[#allocation3 + $0x2c] sm:$0xf]
        %v3557 = vld [vmem:[#allocation3 + $0x30] sm:$0xf]
        %v3558 = vld [vmem:[#allocation3 + $0x34] sm:$0xf]
        %v3559 = vld [vmem:[#allocation3 + $0x38] sm:$0xf]
        %v3560 = vld [vmem:[#allocation3 + $0x3c] sm:$0xf]
        %v3561 = vld [vmem:[#allocation3 + $0x40] sm:$0xf]
        %v3562 = vld [vmem:[#allocation3 + $0x44] sm:$0xf]
        %v3563 = vld [vmem:[#allocation3 + $0x48] sm:$0xf]
        %v3564 = vld [vmem:[#allocation3 + $0x4c] sm:$0xf]
        %v3565 = vld [vmem:[#allocation3 + $0x50] sm:$0xf]
        %v3566 = vld [vmem:[#allocation3 + $0x54] sm:$0xf]
        %v3567 = vld [vmem:[#allocation3 + $0x58] sm:$0xf]
        %v3568 = vld [vmem:[#allocation3 + $0x5c] sm:$0xf]
        %v3569 = vld [vmem:[#allocation3 + $0x60] sm:$0xf]
        %v3570 = vld [vmem:[#allocation3 + $0x64] sm:$0xf]
        %v3571 = vld [vmem:[#allocation3 + $0x68] sm:$0xf]
        %v3572 = vld [vmem:[#allocation3 + $0x6c] sm:$0xf]
        %v3573 = vld [vmem:[#allocation3 + $0x70] sm:$0xf]
        %v3574 = vld [vmem:[#allocation3 + $0x74] sm:$0xf]
        %v3575 = vld [vmem:[#allocation3 + $0x78] sm:$0xf]
        %v3576 = vld [vmem:[#allocation3 + $0x7c] sm:$0xf]
        %v3577 = vld [vmem:[#allocation3 + $0x80] sm:$0xf]
        %v3578 = vld [vmem:[#allocation3 + $0x84] sm:$0xf]
        %v3579 = vld [vmem:[#allocation3 + $0x88] sm:$0xf]
        %v3580 = vld [vmem:[#allocation3 + $0x8c] sm:$0xf]
        %v3581 = vld [vmem:[#allocation3 + $0x90] sm:$0xf]
        %v3582 = vld [vmem:[#allocation3 + $0x94] sm:$0xf]
        %v3583 = vld [vmem:[#allocation3 + $0x98] sm:$0xf]
        %v3584 = vld [vmem:[#allocation3 + $0x9c] sm:$0xf]
        %v3585 = vld [vmem:[#allocation3 + $0xa0] sm:$0xf]
        %v3586 = vld [vmem:[#allocation3 + $0xa4] sm:$0xf]
        %v3587 = vld [vmem:[#allocation3 + $0xa8] sm:$0xf]
        %v3588 = vld [vmem:[#allocation3 + $0xac] sm:$0xf]
        %v3589 = vld [vmem:[#allocation3 + $0xb0] sm:$0xf]
        %v3590 = vld [vmem:[#allocation3 + $0xb4] sm:$0xf]
        %v3591 = vld [vmem:[#allocation3 + $0xb8] sm:$0xf]
        %v3592 = vld [vmem:[#allocation3 + $0xbc] sm:$0xf]
        %v3593 = vld [vmem:[#allocation3 + $0xc0] sm:$0xf]
        %v3594 = vld [vmem:[#allocation3 + $0xc4] sm:$0xf]
        %v3595 = vld [vmem:[#allocation3 + $0xc8] sm:$0xf]
        %v3596 = vld [vmem:[#allocation3 + $0xcc] sm:$0xf]
        %v3597 = vld [vmem:[#allocation3 + $0xd0] sm:$0xf]
        %v3598 = vld [vmem:[#allocation3 + $0xd4] sm:$0xf]
        %v3599 = vld [vmem:[%s3] sm:$0xf]
        %v3600 = vld [vmem:[%s3 + $0x4] sm:$0xf]
        %v3601 = vld [vmem:[%s3 + $0x8] sm:$0xf]
        %v3602 = vld [vmem:[%s3 + $0xc] sm:$0xf]
        %v3603 = vld [vmem:[%s3 + $0x10] sm:$0xf]
        %v3604 = vld [vmem:[%s3 + $0x14] sm:$0xf]
        %v3605 = vld [vmem:[%s3 + $0x18] sm:$0xf]
        %v3606 = vld [vmem:[%s3 + $0x1c] sm:$0xf]
        %v3607 = vld [vmem:[%s3 + $0x20] sm:$0xf]
        %v3608 = vld [vmem:[%s3 + $0x24] sm:$0xf]
        %v3609 = vld [vmem:[%s3 + $0x28] sm:$0xf]
        %v3610 = vld [vmem:[%s3 + $0x2c] sm:$0xf]
        %v3611 = vld [vmem:[%s3 + $0x30] sm:$0xf]
        %v3612 = vld [vmem:[%s3 + $0x34] sm:$0xf]
        %v3613 = vld [vmem:[%s3 + $0x38] sm:$0xf]
        %v3614 = vld [vmem:[%s3 + $0x3c] sm:$0xf]
        %v3615 = vld [vmem:[%s3 + $0x40] sm:$0xf]
        %v3616 = vld [vmem:[%s3 + $0x44] sm:$0xf]
        %v3617 = vld [vmem:[%s3 + $0x48] sm:$0xf]
        %v3618 = vld [vmem:[%s3 + $0x4c] sm:$0xf]
        %v3619 = vld [vmem:[%s3 + $0x50] sm:$0xf]
        %v3620 = vld [vmem:[%s3 + $0x54] sm:$0xf]
        %v3621 = vld [vmem:[%s3 + $0x58] sm:$0xf]
        %v3622 = vld [vmem:[%s3 + $0x5c] sm:$0xf]
        %v3623 = vld [vmem:[%s3 + $0x60] sm:$0xf]
        %v3624 = vld [vmem:[%s3 + $0x64] sm:$0xf]
        %v3625 = vld [vmem:[%s3 + $0x68] sm:$0xf]
        %v3626 = vld [vmem:[%s3 + $0x6c] sm:$0xf]
        %v3627 = vld [vmem:[%s3 + $0x70] sm:$0xf]
        %v3628 = vld [vmem:[%s3 + $0x74] sm:$0xf]
        %v3629 = vld [vmem:[%s3 + $0x78] sm:$0xf]
        %v3630 = vld [vmem:[%s3 + $0x7c] sm:$0xf]
        %v3631 = vld [vmem:[%s3 + $0x80] sm:$0xf]
        %v3632 = vld [vmem:[%s3 + $0x84] sm:$0xf]
        %v3633 = vld [vmem:[%s3 + $0x88] sm:$0xf]
        %v3634 = vld [vmem:[%s3 + $0x8c] sm:$0xf]
        %v3667 = vunpack.c.l.b16 %v3545
        %v3668 = vunpack.c.l.b16 %v3546
        %v3669 = vunpack.c.l.b16 %v3548
        %v3670 = vunpack.c.l.b16 %v3549
        %v3671 = vunpack.c.l.b16 %v3551
        %v3672 = vunpack.c.l.b16 %v3552
        %v3673 = vunpack.c.l.b16 %v3554
        %v3674 = vunpack.c.l.b16 %v3555
        %v3675 = vunpack.c.l.b16 %v3557
        %v3676 = vunpack.c.l.b16 %v3558
        %v3677 = vunpack.c.l.b16 %v3560
        %v3678 = vunpack.c.l.b16 %v3561
        %v3679 = vunpack.c.l.b16 %v3563
        %v3680 = vunpack.c.l.b16 %v3564
        %v3681 = vunpack.c.l.b16 %v3566
        %v3682 = vunpack.c.l.b16 %v3567
        %v3683 = vunpack.c.l.b16 %v3569
        %v3684 = vunpack.c.l.b16 %v3570
        %v3685 = vunpack.c.l.b16 %v3572
        %v3686 = vunpack.c.l.b16 %v3573
        %v3687 = vunpack.c.l.b16 %v3575
        %v3688 = vunpack.c.l.b16 %v3576
        %v3689 = vunpack.c.l.b16 %v3578
        %v3690 = vunpack.c.l.b16 %v3579
        %v3691 = vunpack.c.l.b16 %v3581
        %v3692 = vunpack.c.l.b16 %v3582
        %v3693 = vunpack.c.l.b16 %v3584
        %v3694 = vunpack.c.l.b16 %v3585
        %v3695 = vunpack.c.l.b16 %v3587
        %v3696 = vunpack.c.l.b16 %v3588
        %v3697 = vunpack.c.l.b16 %v3590
        %v3698 = vunpack.c.l.b16 %v3591
        %v3699 = vpack.c.b16 %v3668, %v3667
        %v3700 = vpack.c.b16 %v3670, %v3669
        %v3701 = vpack.c.b16 %v3672, %v3671
        %v3702 = vpack.c.b16 %v3674, %v3673
        %v3703 = vpack.c.b16 %v3676, %v3675
        %v3704 = vpack.c.b16 %v3678, %v3677
        %v3705 = vpack.c.b16 %v3680, %v3679
        %v3706 = vpack.c.b16 %v3682, %v3681
        %v3707 = vpack.c.b16 %v3684, %v3683
        %v3708 = vpack.c.b16 %v3686, %v3685
        %v3709 = vpack.c.b16 %v3688, %v3687
        %v3710 = vpack.c.b16 %v3690, %v3689
        %v3711 = vpack.c.b16 %v3692, %v3691
        %v3712 = vpack.c.b16 %v3694, %v3693
        %v3713 = vpack.c.b16 %v3696, %v3695
        %v3714 = vpack.c.b16 %v3698, %v3697
        %v3731 = vunpack.c.l.b16 %v3547
        %v3732 = vunpack.c.l.b16 %v3550
        %v3733 = vunpack.c.l.b16 %v3553
        %v3734 = vunpack.c.l.b16 %v3556
        %v3735 = vunpack.c.l.b16 %v3559
        %v3736 = vunpack.c.l.b16 %v3562
        %v3737 = vunpack.c.l.b16 %v3565
        %v3738 = vunpack.c.l.b16 %v3568
        %v3739 = vunpack.c.l.b16 %v3571
        %v3740 = vunpack.c.l.b16 %v3574
        %v3741 = vunpack.c.l.b16 %v3577
        %v3742 = vunpack.c.l.b16 %v3580
        %v3743 = vunpack.c.l.b16 %v3583
        %v3744 = vunpack.c.l.b16 %v3586
        %v3745 = vunpack.c.l.b16 %v3589
        %v3746 = vunpack.c.l.b16 %v3592
        %v3747 = vpack.c.b16 %v3731, %v3731
        %v3748 = vpack.c.b16 %v3732, %v3732
        %v3749 = vpack.c.b16 %v3733, %v3733
        %v3750 = vpack.c.b16 %v3734, %v3734
        %v3751 = vpack.c.b16 %v3735, %v3735
        %v3752 = vpack.c.b16 %v3736, %v3736
        %v3753 = vpack.c.b16 %v3737, %v3737
        %v3754 = vpack.c.b16 %v3738, %v3738
        %v3755 = vpack.c.b16 %v3739, %v3739
        %v3756 = vpack.c.b16 %v3740, %v3740
        %v3757 = vpack.c.b16 %v3741, %v3741
        %v3758 = vpack.c.b16 %v3742, %v3742
        %v3759 = vpack.c.b16 %v3743, %v3743
        %v3760 = vpack.c.b16 %v3744, %v3744
        %v3761 = vpack.c.b16 %v3745, %v3745
        %v3762 = vpack.c.b16 %v3746, %v3746
        %v3764 = vshrl.u32 %v3699, 16
        %v3766 = vshll.u32 %v3699, 16
        %v3768 = vrot.slane %v3766, 1
        %v3769 = vor.u32 %v3764, %v3768
        %v3771 = vshll.u32 %v3747, 16
        %v3773 = vrot.slane %v3771, 1
        %v3774 = vsel %vm1335, %v3769, %v3773
        %v3776 = vshrl.u32 %v3700, 16
        %v3778 = vshll.u32 %v3700, 16
        %v3780 = vrot.slane %v3778, 1
        %v3781 = vor.u32 %v3776, %v3780
        %v3783 = vshll.u32 %v3748, 16
        %v3785 = vrot.slane %v3783, 1
        %v3786 = vsel %vm1335, %v3781, %v3785
        %v3788 = vshrl.u32 %v3701, 16
        %v3790 = vshll.u32 %v3701, 16
        %v3792 = vrot.slane %v3790, 1
        %v3793 = vor.u32 %v3788, %v3792
        %v3795 = vshll.u32 %v3749, 16
        %v3797 = vrot.slane %v3795, 1
        %v3798 = vsel %vm1335, %v3793, %v3797
        %v3800 = vshrl.u32 %v3702, 16
        %v3802 = vshll.u32 %v3702, 16
        %v3804 = vrot.slane %v3802, 1
        %v3805 = vor.u32 %v3800, %v3804
        %v3807 = vshll.u32 %v3750, 16
        %v3809 = vrot.slane %v3807, 1
        %v3810 = vsel %vm1335, %v3805, %v3809
        %v3812 = vshrl.u32 %v3703, 16
        %v3814 = vshll.u32 %v3703, 16
        %v3816 = vrot.slane %v3814, 1
        %v3817 = vor.u32 %v3812, %v3816
        %v3819 = vshll.u32 %v3751, 16
        %v3821 = vrot.slane %v3819, 1
        %v3822 = vsel %vm1335, %v3817, %v3821
        %v3824 = vshrl.u32 %v3704, 16
        %v3826 = vshll.u32 %v3704, 16
        %v3828 = vrot.slane %v3826, 1
        %v3829 = vor.u32 %v3824, %v3828
        %v3831 = vshll.u32 %v3752, 16
        %v3833 = vrot.slane %v3831, 1
        %v3834 = vsel %vm1335, %v3829, %v3833
        %v3836 = vshrl.u32 %v3705, 16
        %v3838 = vshll.u32 %v3705, 16
        %v3840 = vrot.slane %v3838, 1
        %v3841 = vor.u32 %v3836, %v3840
        %v3843 = vshll.u32 %v3753, 16
        %v3845 = vrot.slane %v3843, 1
        %v3846 = vsel %vm1335, %v3841, %v3845
        %v3848 = vshrl.u32 %v3706, 16
        %v3850 = vshll.u32 %v3706, 16
        %v3852 = vrot.slane %v3850, 1
        %v3853 = vor.u32 %v3848, %v3852
        %v3855 = vshll.u32 %v3754, 16
        %v3857 = vrot.slane %v3855, 1
        %v3858 = vsel %vm1335, %v3853, %v3857
        %v3860 = vshrl.u32 %v3707, 16
        %v3862 = vshll.u32 %v3707, 16
        %v3864 = vrot.slane %v3862, 1
        %v3865 = vor.u32 %v3860, %v3864
        %v3867 = vshll.u32 %v3755, 16
        %v3869 = vrot.slane %v3867, 1
        %v3870 = vsel %vm1335, %v3865, %v3869
        %v3872 = vshrl.u32 %v3708, 16
        %v3874 = vshll.u32 %v3708, 16
        %v3876 = vrot.slane %v3874, 1
        %v3877 = vor.u32 %v3872, %v3876
        %v3879 = vshll.u32 %v3756, 16
        %v3881 = vrot.slane %v3879, 1
        %v3882 = vsel %vm1335, %v3877, %v3881
        %v3884 = vshrl.u32 %v3709, 16
        %v3886 = vshll.u32 %v3709, 16
        %v3888 = vrot.slane %v3886, 1
        %v3889 = vor.u32 %v3884, %v3888
        %v3891 = vshll.u32 %v3757, 16
        %v3893 = vrot.slane %v3891, 1
        %v3894 = vsel %vm1335, %v3889, %v3893
        %v3896 = vshrl.u32 %v3710, 16
        %v3898 = vshll.u32 %v3710, 16
        %v3900 = vrot.slane %v3898, 1
        %v3901 = vor.u32 %v3896, %v3900
        %v3903 = vshll.u32 %v3758, 16
        %v3905 = vrot.slane %v3903, 1
        %v3906 = vsel %vm1335, %v3901, %v3905
        %v3908 = vshrl.u32 %v3711, 16
        %v3910 = vshll.u32 %v3711, 16
        %v3912 = vrot.slane %v3910, 1
        %v3913 = vor.u32 %v3908, %v3912
        %v3915 = vshll.u32 %v3759, 16
        %v3917 = vrot.slane %v3915, 1
        %v3918 = vsel %vm1335, %v3913, %v3917
        %v3920 = vshrl.u32 %v3712, 16
        %v3922 = vshll.u32 %v3712, 16
        %v3924 = vrot.slane %v3922, 1
        %v3925 = vor.u32 %v3920, %v3924
        %v3927 = vshll.u32 %v3760, 16
        %v3929 = vrot.slane %v3927, 1
        %v3930 = vsel %vm1335, %v3925, %v3929
        %v3932 = vshrl.u32 %v3713, 16
        %v3934 = vshll.u32 %v3713, 16
        %v3936 = vrot.slane %v3934, 1
        %v3937 = vor.u32 %v3932, %v3936
        %v3939 = vshll.u32 %v3761, 16
        %v3941 = vrot.slane %v3939, 1
        %v3942 = vsel %vm1335, %v3937, %v3941
        %v3944 = vshrl.u32 %v3714, 16
        %v3946 = vshll.u32 %v3714, 16
        %v3948 = vrot.slane %v3946, 1
        %v3949 = vor.u32 %v3944, %v3948
        %v3951 = vshll.u32 %v3762, 16
        %v3953 = vrot.slane %v3951, 1
        %v3954 = vsel %vm1335, %v3949, %v3953
        %3955 = vrot.lane.b32.xlu0 %v3774, 32
        %v3956 = vpop.permute.xlu0 %3955
        %3957 = vrot.lane.b32.xlu0 %v3786, 32
        %v3958 = vpop.permute.xlu0 %3957
        %3959 = vrot.lane.b32.xlu0 %v3798, 32
        %v3960 = vpop.permute.xlu0 %3959
        %3961 = vrot.lane.b32.xlu0 %v3810, 32
        %v3962 = vpop.permute.xlu0 %3961
        %3963 = vrot.lane.b32.xlu0 %v3822, 32
        %v3964 = vpop.permute.xlu0 %3963
        %3965 = vrot.lane.b32.xlu0 %v3834, 32
        %v3966 = vpop.permute.xlu0 %3965
        %3967 = vrot.lane.b32.xlu0 %v3846, 32
        %v3968 = vpop.permute.xlu0 %3967
        %3969 = vrot.lane.b32.xlu0 %v3858, 32
        %v3970 = vpop.permute.xlu0 %3969
        %3971 = vrot.lane.b32.xlu0 %v3870, 32
        %v3972 = vpop.permute.xlu0 %3971
        %3973 = vrot.lane.b32.xlu0 %v3882, 32
        %v3974 = vpop.permute.xlu0 %3973
        %3975 = vrot.lane.b32.xlu0 %v3894, 32
        %v3976 = vpop.permute.xlu0 %3975
        %3977 = vrot.lane.b32.xlu0 %v3906, 32
        %v3978 = vpop.permute.xlu0 %3977
        %3979 = vrot.lane.b32.xlu0 %v3918, 32
        %v3980 = vpop.permute.xlu0 %3979
        %3981 = vrot.lane.b32.xlu0 %v3930, 32
        %v3982 = vpop.permute.xlu0 %3981
        %3983 = vrot.lane.b32.xlu0 %v3942, 32
        %v3984 = vpop.permute.xlu0 %3983
        %3985 = vrot.lane.b32.xlu0 %v3954, 32
        %v3986 = vpop.permute.xlu0 %3985
        %v3987 = vrot.slane %v3699, 1
        %v3988 = vrot.slane %v3747, 1
        %v3989 = vsel %vm1560, %v3987, %v3988
        %v3990 = vrot.slane %v3700, 1
        %v3991 = vrot.slane %v3748, 1
        %v3992 = vsel %vm1560, %v3990, %v3991
        %v3993 = vrot.slane %v3701, 1
        %v3994 = vrot.slane %v3749, 1
        %v3995 = vsel %vm1560, %v3993, %v3994
        %v3996 = vrot.slane %v3702, 1
        %v3997 = vrot.slane %v3750, 1
        %v3998 = vsel %vm1560, %v3996, %v3997
        %v3999 = vrot.slane %v3703, 1
        %v4000 = vrot.slane %v3751, 1
        %v4001 = vsel %vm1560, %v3999, %v4000
        %v4002 = vrot.slane %v3704, 1
        %v4003 = vrot.slane %v3752, 1
        %v4004 = vsel %vm1560, %v4002, %v4003
        %v4005 = vrot.slane %v3705, 1
        %v4006 = vrot.slane %v3753, 1
        %v4007 = vsel %vm1560, %v4005, %v4006
        %v4008 = vrot.slane %v3706, 1
        %v4009 = vrot.slane %v3754, 1
        %v4010 = vsel %vm1560, %v4008, %v4009
        %v4011 = vrot.slane %v3707, 1
        %v4012 = vrot.slane %v3755, 1
        %v4013 = vsel %vm1560, %v4011, %v4012
        %v4014 = vrot.slane %v3708, 1
        %v4015 = vrot.slane %v3756, 1
        %v4016 = vsel %vm1560, %v4014, %v4015
        %v4017 = vrot.slane %v3709, 1
        %v4018 = vrot.slane %v3757, 1
        %v4019 = vsel %vm1560, %v4017, %v4018
        %v4020 = vrot.slane %v3710, 1
        %v4021 = vrot.slane %v3758, 1
        %v4022 = vsel %vm1560, %v4020, %v4021
        %v4023 = vrot.slane %v3711, 1
        %v4024 = vrot.slane %v3759, 1
        %v4025 = vsel %vm1560, %v4023, %v4024
        %v4026 = vrot.slane %v3712, 1
        %v4027 = vrot.slane %v3760, 1
        %v4028 = vsel %vm1560, %v4026, %v4027
        %v4029 = vrot.slane %v3713, 1
        %v4030 = vrot.slane %v3761, 1
        %v4031 = vsel %vm1560, %v4029, %v4030
        %v4032 = vrot.slane %v3714, 1
        %v4033 = vrot.slane %v3762, 1
        %v4034 = vsel %vm1560, %v4032, %v4033
        %4035 = vrot.lane.b32.xlu0 %v3989, 64
        %v4036 = vpop.permute.xlu0 %4035
        %4037 = vrot.lane.b32.xlu0 %v3992, 64
        %v4038 = vpop.permute.xlu0 %4037
        %4039 = vrot.lane.b32.xlu0 %v3995, 64
        %v4040 = vpop.permute.xlu0 %4039
        %4041 = vrot.lane.b32.xlu0 %v3998, 64
        %v4042 = vpop.permute.xlu0 %4041
        %4043 = vrot.lane.b32.xlu0 %v4001, 64
        %v4044 = vpop.permute.xlu0 %4043
        %4045 = vrot.lane.b32.xlu0 %v4004, 64
        %v4046 = vpop.permute.xlu0 %4045
        %4047 = vrot.lane.b32.xlu0 %v4007, 64
        %v4048 = vpop.permute.xlu0 %4047
        %4049 = vrot.lane.b32.xlu0 %v4010, 64
        %v4050 = vpop.permute.xlu0 %4049
        %4051 = vrot.lane.b32.xlu0 %v4013, 64
        %v4052 = vpop.permute.xlu0 %4051
        %4053 = vrot.lane.b32.xlu0 %v4016, 64
        %v4054 = vpop.permute.xlu0 %4053
        %4055 = vrot.lane.b32.xlu0 %v4019, 64
        %v4056 = vpop.permute.xlu0 %4055
        %4057 = vrot.lane.b32.xlu0 %v4022, 64
        %v4058 = vpop.permute.xlu0 %4057
        %4059 = vrot.lane.b32.xlu0 %v4025, 64
        %v4060 = vpop.permute.xlu0 %4059
        %4061 = vrot.lane.b32.xlu0 %v4028, 64
        %v4062 = vpop.permute.xlu0 %4061
        %4063 = vrot.lane.b32.xlu0 %v4031, 64
        %v4064 = vpop.permute.xlu0 %4063
        %4065 = vrot.lane.b32.xlu0 %v4034, 64
        %v4066 = vpop.permute.xlu0 %4065
        %vm4067 = vcmask 261120
        %v4069 = vsel %vm4067, %v3699, %v3956
        %v4071 = vsel %vm4067, %v3700, %v3958
        %v4073 = vsel %vm4067, %v3701, %v3960
        %v4075 = vsel %vm4067, %v3702, %v3962
        %v4077 = vsel %vm4067, %v3703, %v3964
        %v4079 = vsel %vm4067, %v3704, %v3966
        %v4081 = vsel %vm4067, %v3705, %v3968
        %v4083 = vsel %vm4067, %v3706, %v3970
        %v4085 = vsel %vm4067, %v3707, %v3972
        %v4087 = vsel %vm4067, %v3708, %v3974
        %v4089 = vsel %vm4067, %v3709, %v3976
        %v4091 = vsel %vm4067, %v3710, %v3978
        %v4093 = vsel %vm4067, %v3711, %v3980
        %v4095 = vsel %vm4067, %v3712, %v3982
        %v4097 = vsel %vm4067, %v3713, %v3984
        %v4099 = vsel %vm4067, %v3714, %v3986
        %v4101 = vsel %vm1609, %v4069, %v4036
        %v4103 = vsel %vm1609, %v4071, %v4038
        %v4105 = vsel %vm1609, %v4073, %v4040
        %v4107 = vsel %vm1609, %v4075, %v4042
        %v4109 = vsel %vm1609, %v4077, %v4044
        %v4111 = vsel %vm1609, %v4079, %v4046
        %v4113 = vsel %vm1609, %v4081, %v4048
        %v4115 = vsel %vm1609, %v4083, %v4050
        %v4117 = vsel %vm1609, %v4085, %v4052
        %v4119 = vsel %vm1609, %v4087, %v4054
        %v4121 = vsel %vm1609, %v4089, %v4056
        %v4123 = vsel %vm1609, %v4091, %v4058
        %v4125 = vsel %vm1609, %v4093, %v4060
        %v4127 = vsel %vm1609, %v4095, %v4062
        %v4129 = vsel %vm1609, %v4097, %v4064
        %v4131 = vsel %vm1609, %v4099, %v4066
        %v4134 = vunpack.c.l.b16 %v3593
        %v4135 = vunpack.c.l.b16 %v3594
        %v4136 = vpack.c.b16 %v4135, %v4134
        %v4138 = vunpack.c.l.b16 %v3595
        %v4139 = vpack.c.b16 %v4138, %v4138
        %v4141 = vshrl.u32 %v4136, 16
        %v4143 = vshll.u32 %v4136, 16
        %v4145 = vrot.slane %v4143, 1
        %v4146 = vor.u32 %v4141, %v4145
        %v4148 = vshll.u32 %v4139, 16
        %v4150 = vrot.slane %v4148, 1
        %v4151 = vsel %vm1335, %v4146, %v4150
        %4152 = vrot.lane.b32.xlu0 %v4151, 32
        %v4153 = vpop.permute.xlu0 %4152
        %v4154 = vrot.slane %v4136, 1
        %v4155 = vrot.slane %v4139, 1
        %v4156 = vsel %vm1560, %v4154, %v4155
        %4157 = vrot.lane.b32.xlu0 %v4156, 64
        %v4158 = vpop.permute.xlu0 %4157
        %v4160 = vsel %vm4067, %v4136, %v4153
        %v4162 = vsel %vm1609, %v4160, %v4158
        %v4175 = vunpack.c.l.b16 %v3611
        %v4176 = vunpack.c.l.b16 %v3612
        %v4177 = vunpack.c.l.b16 %v3613
        %v4178 = vunpack.c.l.b16 %v3614
        %v4179 = vunpack.c.l.b16 %v3615
        %v4180 = vunpack.c.l.b16 %v3616
        %v4181 = vunpack.c.l.b16 %v3617
        %v4182 = vunpack.c.l.b16 %v3618
        %v4183 = vunpack.c.l.b16 %v3619
        %v4184 = vunpack.c.l.b16 %v3620
        %v4185 = vunpack.c.l.b16 %v3621
        %v4186 = vunpack.c.l.b16 %v3622
        %v4187 = vpack.c.b16 %v4176, %v4175
        %v4188 = vpack.c.b16 %v4178, %v4177
        %v4189 = vpack.c.b16 %v4180, %v4179
        %v4190 = vpack.c.b16 %v4182, %v4181
        %v4191 = vpack.c.b16 %v4184, %v4183
        %v4192 = vpack.c.b16 %v4186, %v4185
        %vm4199 = vcmask 785408
        %v4200 = vsel %vm4199, %v4103, 0
        %v4202 = vsel %vm4199, %v4105, 0
        %v4204 = vsel %vm4199, %v4107, 0
        %v4206 = vsel %vm4199, %v4109, 0
        %v4208 = vsel %vm4199, %v4111, 0
        %v4210 = vsel %vm4199, %v4113, 0
        %v4212 = vsel %vm4199, %v4115, 0
        %v4214 = vsel %vm4199, %v4117, 0
        %v4216 = vsel %vm4199, %v4119, 0
        %v4218 = vsel %vm4199, %v4121, 0
        %v4220 = vsel %vm4199, %v4123, 0
        %v4222 = vsel %vm4199, %v4125, 0
        %v4224 = vsel %vm4199, %v4127, 0
        %v4226 = vsel %vm4199, %v4129, 0
        %v4228 = vsel %vm4199, %v4131, 0
        %v4230 = vsel %vm4199, %v4162, 0
        %4232 = vmatprep.subr.bf16.mxu0 0
        %4233 = vmatpush1.bf16.msra.mxu0 %v4187
        %4234 = vmatprep.subr.bf16.mxu0 0
        %4235 = vmatpush1.bf16.msra.mxu0 %v4188
        %4236 = vmatprep.subr.bf16.mxu0 0
        %4237 = vmatpush1.bf16.msra.mxu0 %v4189
        %4238 = vmatprep.subr.bf16.mxu0 0
        %4239 = vmatpush1.bf16.msra.mxu0 %v4190
        %4240 = vmatprep.subr.bf16.mxu0 0
        %4241 = vmatpush1.bf16.msra.mxu0 %v4191
        %4242 = vmatprep.subr.bf16.mxu0 0
        %4243 = vmatpush1.bf16.msra.mxu0 %v4192
        %4244 = vmatprep.subr.bf16.mxu0 0
        %4245 = vmatpush1.bf16.msra.mxu0 0
        %4246 = vmatprep.subr.bf16.mxu0 0
        %4247 = vmatpush1.bf16.msra.mxu0 0
        %4248 = vmatprep.subr.bf16.mxu0 0
        %4249 = vmatpush1.bf16.msra.mxu0 0
        %4250 = vmatprep.subr.bf16.mxu0 0
        %4251 = vmatpush1.bf16.msra.mxu0 0
        %4252 = vmatprep.subr.bf16.mxu0 0
        %4253 = vmatpush1.bf16.msra.mxu0 0
        %4254 = vmatprep.subr.bf16.mxu0 0
        %4255 = vmatpush1.bf16.msra.mxu0 0
        %4256 = vmatprep.subr.bf16.mxu0 0
        %4257 = vmatpush1.bf16.msra.mxu0 0
        %4258 = vmatprep.subr.bf16.mxu0 0
        %4259 = vmatpush1.bf16.msra.mxu0 0
        %4260 = vmatprep.subr.bf16.mxu0 0
        %4261 = vmatpush1.bf16.msra.mxu0 0
        %4262 = vmatprep.subr.bf16.mxu0 0
        %4263 = vmatpush1.bf16.msra.mxu0 0
        %4264 = vmatprep.mubr.bf16.mxu0 0
        %4265 = vmatmul.mubr.bf16.gmra.mrb[0].mxu0 %v4200
        %v4266 = vpop.f32.mrb[0].mxu0
        %v4267 = vadd.f32 0.0, %v4266
        %v4268 = vpop.f32.mrb[0].mxu0
        %v4269 = vpop.f32.mrb[0].mxu0
        %v4270 = vadd.f32 0.0, %v4269
        %v4271 = vpop.f32.mrb[0].mxu0
        %4272 = vmatprep.mubr.bf16.mxu0 0
        %4273 = vmatmul.mubr.bf16.gmra.mrb[0].mxu0 %v4202
        %v4274 = vpop.f32.mrb[0].mxu0
        %v4275 = vadd.f32 0.0, %v4274
        %v4276 = vpop.f32.mrb[0].mxu0
        %v4277 = vpop.f32.mrb[0].mxu0
        %v4278 = vadd.f32 0.0, %v4277
        %v4279 = vpop.f32.mrb[0].mxu0
        %4280 = vmatprep.mubr.bf16.mxu0 0
        %4281 = vmatmul.mubr.bf16.gmra.mrb[0].mxu0 %v4204
        %v4282 = vpop.f32.mrb[0].mxu0
        %v4283 = vadd.f32 0.0, %v4282
        %v4284 = vpop.f32.mrb[0].mxu0
        %v4285 = vpop.f32.mrb[0].mxu0
        %v4286 = vadd.f32 0.0, %v4285
        %v4287 = vpop.f32.mrb[0].mxu0
        %4288 = vmatprep.mubr.bf16.mxu0 0
        %4289 = vmatmul.mubr.bf16.gmra.mrb[0].mxu0 %v4206
        %v4290 = vpop.f32.mrb[0].mxu0
        %v4291 = vadd.f32 0.0, %v4290
        %v4292 = vpop.f32.mrb[0].mxu0
        %v4293 = vpop.f32.mrb[0].mxu0
        %v4294 = vadd.f32 0.0, %v4293
        %v4295 = vpop.f32.mrb[0].mxu0
        %4296 = vmatprep.mubr.bf16.mxu0 0
        %4297 = vmatmul.mubr.bf16.gmra.mrb[0].mxu0 %v4208
        %v4298 = vpop.f32.mrb[0].mxu0
        %v4299 = vadd.f32 0.0, %v4298
        %v4300 = vpop.f32.mrb[0].mxu0
        %v4301 = vpop.f32.mrb[0].mxu0
        %v4302 = vadd.f32 0.0, %v4301
        %v4303 = vpop.f32.mrb[0].mxu0
        %4304 = vmatprep.mubr.bf16.mxu0 0
        %4305 = vmatmul.mubr.bf16.gmra.mrb[0].mxu0 %v4210
        %v4306 = vpop.f32.mrb[0].mxu0
        %v4307 = vadd.f32 0.0, %v4306
        %v4308 = vpop.f32.mrb[0].mxu0
        %v4309 = vpop.f32.mrb[0].mxu0
        %v4310 = vadd.f32 0.0, %v4309
        %v4311 = vpop.f32.mrb[0].mxu0
        %4312 = vmatprep.mubr.bf16.mxu0 0
        %4313 = vmatmul.mubr.bf16.gmra.mrb[0].mxu0 %v4212
        %v4314 = vpop.f32.mrb[0].mxu0
        %v4315 = vadd.f32 0.0, %v4314
        %v4316 = vpop.f32.mrb[0].mxu0
        %v4317 = vpop.f32.mrb[0].mxu0
        %v4318 = vadd.f32 0.0, %v4317
        %v4319 = vpop.f32.mrb[0].mxu0
        %4320 = vmatprep.mubr.bf16.mxu0 0
        %4321 = vmatmul.mubr.bf16.gmra.mrb[0].mxu0 %v4214
        %v4322 = vpop.f32.mrb[0].mxu0
        %v4323 = vadd.f32 0.0, %v4322
        %v4324 = vpop.f32.mrb[0].mxu0
        %v4325 = vpop.f32.mrb[0].mxu0
        %v4326 = vadd.f32 0.0, %v4325
        %v4327 = vpop.f32.mrb[0].mxu0
        %4328 = vmatprep.mubr.bf16.mxu0 0
        %4329 = vmatmul.mubr.bf16.gmra.mrb[0].mxu0 %v4216
        %v4330 = vpop.f32.mrb[0].mxu0
        %v4331 = vadd.f32 0.0, %v4330
        %v4332 = vpop.f32.mrb[0].mxu0
        %v4333 = vpop.f32.mrb[0].mxu0
        %v4334 = vadd.f32 0.0, %v4333
        %v4335 = vpop.f32.mrb[0].mxu0
        %4336 = vmatprep.mubr.bf16.mxu0 0
        %4337 = vmatmul.mubr.bf16.gmra.mrb[0].mxu0 %v4218
        %v4338 = vpop.f32.mrb[0].mxu0
        %v4339 = vadd.f32 0.0, %v4338
        %v4340 = vpop.f32.mrb[0].mxu0
        %v4341 = vpop.f32.mrb[0].mxu0
        %v4342 = vadd.f32 0.0, %v4341
        %v4343 = vpop.f32.mrb[0].mxu0
        %4344 = vmatprep.mubr.bf16.mxu0 0
        %4345 = vmatmul.mubr.bf16.gmra.mrb[0].mxu0 %v4220
        %v4346 = vpop.f32.mrb[0].mxu0
        %v4347 = vadd.f32 0.0, %v4346
        %v4348 = vpop.f32.mrb[0].mxu0
        %v4349 = vpop.f32.mrb[0].mxu0
        %v4350 = vadd.f32 0.0, %v4349
        %v4351 = vpop.f32.mrb[0].mxu0
        %4352 = vmatprep.mubr.bf16.mxu0 0
        %4353 = vmatmul.mubr.bf16.gmra.mrb[0].mxu0 %v4222
        %v4354 = vpop.f32.mrb[0].mxu0
        %v4355 = vadd.f32 0.0, %v4354
        %v4356 = vpop.f32.mrb[0].mxu0
        %v4357 = vpop.f32.mrb[0].mxu0
        %v4358 = vadd.f32 0.0, %v4357
        %v4359 = vpop.f32.mrb[0].mxu0
        %4360 = vmatprep.mubr.bf16.mxu0 0
        %4361 = vmatmul.mubr.bf16.gmra.mrb[0].mxu0 %v4224
        %v4362 = vpop.f32.mrb[0].mxu0
        %v4363 = vadd.f32 0.0, %v4362
        %v4364 = vpop.f32.mrb[0].mxu0
        %v4365 = vpop.f32.mrb[0].mxu0
        %v4366 = vadd.f32 0.0, %v4365
        %v4367 = vpop.f32.mrb[0].mxu0
        %4368 = vmatprep.mubr.bf16.mxu0 0
        %4369 = vmatmul.mubr.bf16.gmra.mrb[0].mxu0 %v4226
        %v4370 = vpop.f32.mrb[0].mxu0
        %v4371 = vadd.f32 0.0, %v4370
        %v4372 = vpop.f32.mrb[0].mxu0
        %v4373 = vpop.f32.mrb[0].mxu0
        %v4374 = vadd.f32 0.0, %v4373
        %v4375 = vpop.f32.mrb[0].mxu0
        %4376 = vmatprep.mubr.bf16.mxu0 0
        %4377 = vmatmul.mubr.bf16.gmra.mrb[0].mxu0 %v4228
        %v4378 = vpop.f32.mrb[0].mxu0
        %v4379 = vadd.f32 0.0, %v4378
        %v4380 = vpop.f32.mrb[0].mxu0
        %v4381 = vpop.f32.mrb[0].mxu0
        %v4382 = vadd.f32 0.0, %v4381
        %v4383 = vpop.f32.mrb[0].mxu0
        %4384 = vmatprep.mubr.bf16.mxu0 0
        %4385 = vmatmul.mubr.bf16.gmra.mrb[0].mxu0 %v4230
        %v4386 = vpop.f32.mrb[0].mxu0
        %v4387 = vadd.f32 0.0, %v4386
        %v4388 = vpop.f32.mrb[0].mxu0
        %v4389 = vpop.f32.mrb[0].mxu0
        %v4390 = vadd.f32 0.0, %v4389
        %v4391 = vpop.f32.mrb[0].mxu0
        %4392 = vdwg.mxu0
        %v4405 = vunpack.c.l.b16 %v3599
        %v4406 = vunpack.c.l.b16 %v3600
        %v4407 = vunpack.c.l.b16 %v3601
        %v4408 = vunpack.c.l.b16 %v3602
        %v4409 = vunpack.c.l.b16 %v3603
        %v4410 = vunpack.c.l.b16 %v3604
        %v4411 = vunpack.c.l.b16 %v3605
        %v4412 = vunpack.c.l.b16 %v3606
        %v4413 = vunpack.c.l.b16 %v3607
        %v4414 = vunpack.c.l.b16 %v3608
        %v4415 = vunpack.c.l.b16 %v3609
        %v4416 = vunpack.c.l.b16 %v3610
        %v4417 = vpack.c.b16 %v4406, %v4405
        %v4418 = vpack.c.b16 %v4408, %v4407
        %v4419 = vpack.c.b16 %v4410, %v4409
        %v4420 = vpack.c.b16 %v4412, %v4411
        %v4421 = vpack.c.b16 %v4414, %v4413
        %v4422 = vpack.c.b16 %v4416, %v4415
        %v4429 = vsel %vm4199, %v4101, 0
        %4431 = vmatprep.subr.bf16.mxu0 0
        %4432 = vmatpush1.bf16.msra.mxu0 %v4417
        %4433 = vmatprep.subr.bf16.mxu0 0
        %4434 = vmatpush1.bf16.msra.mxu0 %v4418
        %4435 = vmatprep.subr.bf16.mxu0 0
        %4436 = vmatpush1.bf16.msra.mxu0 %v4419
        %4437 = vmatprep.subr.bf16.mxu0 0
        %4438 = vmatpush1.bf16.msra.mxu0 %v4420
        %4439 = vmatprep.subr.bf16.mxu0 0
        %4440 = vmatpush1.bf16.msra.mxu0 %v4421
        %4441 = vmatprep.subr.bf16.mxu0 0
        %4442 = vmatpush1.bf16.msra.mxu0 %v4422
        %4443 = vmatprep.subr.bf16.mxu0 0
        %4444 = vmatpush1.bf16.msra.mxu0 0
        %4445 = vmatprep.subr.bf16.mxu0 0
        %4446 = vmatpush1.bf16.msra.mxu0 0
        %4447 = vmatprep.subr.bf16.mxu0 0
        %4448 = vmatpush1.bf16.msra.mxu0 0
        %4449 = vmatprep.subr.bf16.mxu0 0
        %4450 = vmatpush1.bf16.msra.mxu0 0
        %4451 = vmatprep.subr.bf16.mxu0 0
        %4452 = vmatpush1.bf16.msra.mxu0 0
        %4453 = vmatprep.subr.bf16.mxu0 0
        %4454 = vmatpush1.bf16.msra.mxu0 0
        %4455 = vmatprep.subr.bf16.mxu0 0
        %4456 = vmatpush1.bf16.msra.mxu0 0
        %4457 = vmatprep.subr.bf16.mxu0 0
        %4458 = vmatpush1.bf16.msra.mxu0 0
        %4459 = vmatprep.subr.bf16.mxu0 0
        %4460 = vmatpush1.bf16.msra.mxu0 0
        %4461 = vmatprep.subr.bf16.mxu0 0
        %4462 = vmatpush1.bf16.msra.mxu0 0
        %4463 = vmatprep.mubr.bf16.mxu0 0
        %4464 = vmatmul.mubr.bf16.gmra.mrb[0].mxu0 %v4429
        %v4465 = vpop.f32.mrb[0].mxu0
        %v4466 = vadd.f32 %v4267, %v4465
        %v4467 = vpop.f32.mrb[0].mxu0
        %v4468 = vpop.f32.mrb[0].mxu0
        %v4469 = vadd.f32 %v4270, %v4468
        %v4470 = vpop.f32.mrb[0].mxu0
        %4471 = vmatprep.mubr.bf16.mxu0 0
        %4472 = vmatmul.mubr.bf16.gmra.mrb[0].mxu0 %v4200
        %v4473 = vpop.f32.mrb[0].mxu0
        %v4474 = vadd.f32 %v4275, %v4473
        %v4475 = vpop.f32.mrb[0].mxu0
        %v4476 = vpop.f32.mrb[0].mxu0
        %v4477 = vadd.f32 %v4278, %v4476
        %v4478 = vpop.f32.mrb[0].mxu0
        %4479 = vmatprep.mubr.bf16.mxu0 0
        %4480 = vmatmul.mubr.bf16.gmra.mrb[0].mxu0 %v4202
        %v4481 = vpop.f32.mrb[0].mxu0
        %v4482 = vadd.f32 %v4283, %v4481
        %v4483 = vpop.f32.mrb[0].mxu0
        %v4484 = vpop.f32.mrb[0].mxu0
        %v4485 = vadd.f32 %v4286, %v4484
        %v4486 = vpop.f32.mrb[0].mxu0
        %4487 = vmatprep.mubr.bf16.mxu0 0
        %4488 = vmatmul.mubr.bf16.gmra.mrb[0].mxu0 %v4204
        %v4489 = vpop.f32.mrb[0].mxu0
        %v4490 = vadd.f32 %v4291, %v4489
        %v4491 = vpop.f32.mrb[0].mxu0
        %v4492 = vpop.f32.mrb[0].mxu0
        %v4493 = vadd.f32 %v4294, %v4492
        %v4494 = vpop.f32.mrb[0].mxu0
        %4495 = vmatprep.mubr.bf16.mxu0 0
        %4496 = vmatmul.mubr.bf16.gmra.mrb[0].mxu0 %v4206
        %v4497 = vpop.f32.mrb[0].mxu0
        %v4498 = vadd.f32 %v4299, %v4497
        %v4499 = vpop.f32.mrb[0].mxu0
        %v4500 = vpop.f32.mrb[0].mxu0
        %v4501 = vadd.f32 %v4302, %v4500
        %v4502 = vpop.f32.mrb[0].mxu0
        %4503 = vmatprep.mubr.bf16.mxu0 0
        %4504 = vmatmul.mubr.bf16.gmra.mrb[0].mxu0 %v4208
        %v4505 = vpop.f32.mrb[0].mxu0
        %v4506 = vadd.f32 %v4307, %v4505
        %v4507 = vpop.f32.mrb[0].mxu0
        %v4508 = vpop.f32.mrb[0].mxu0
        %v4509 = vadd.f32 %v4310, %v4508
        %v4510 = vpop.f32.mrb[0].mxu0
        %4511 = vmatprep.mubr.bf16.mxu0 0
        %4512 = vmatmul.mubr.bf16.gmra.mrb[0].mxu0 %v4210
        %v4513 = vpop.f32.mrb[0].mxu0
        %v4514 = vadd.f32 %v4315, %v4513
        %v4515 = vpop.f32.mrb[0].mxu0
        %v4516 = vpop.f32.mrb[0].mxu0
        %v4517 = vadd.f32 %v4318, %v4516
        %v4518 = vpop.f32.mrb[0].mxu0
        %4519 = vmatprep.mubr.bf16.mxu0 0
        %4520 = vmatmul.mubr.bf16.gmra.mrb[0].mxu0 %v4212
        %v4521 = vpop.f32.mrb[0].mxu0
        %v4522 = vadd.f32 %v4323, %v4521
        %v4523 = vpop.f32.mrb[0].mxu0
        %v4524 = vpop.f32.mrb[0].mxu0
        %v4525 = vadd.f32 %v4326, %v4524
        %v4526 = vpop.f32.mrb[0].mxu0
        %4527 = vmatprep.mubr.bf16.mxu0 0
        %4528 = vmatmul.mubr.bf16.gmra.mrb[0].mxu0 %v4214
        %v4529 = vpop.f32.mrb[0].mxu0
        %v4530 = vadd.f32 %v4331, %v4529
        %v4531 = vpop.f32.mrb[0].mxu0
        %v4532 = vpop.f32.mrb[0].mxu0
        %v4533 = vadd.f32 %v4334, %v4532
        %v4534 = vpop.f32.mrb[0].mxu0
        %4535 = vmatprep.mubr.bf16.mxu0 0
        %4536 = vmatmul.mubr.bf16.gmra.mrb[0].mxu0 %v4216
        %v4537 = vpop.f32.mrb[0].mxu0
        %v4538 = vadd.f32 %v4339, %v4537
        %v4539 = vpop.f32.mrb[0].mxu0
        %v4540 = vpop.f32.mrb[0].mxu0
        %v4541 = vadd.f32 %v4342, %v4540
        %v4542 = vpop.f32.mrb[0].mxu0
        %4543 = vmatprep.mubr.bf16.mxu0 0
        %4544 = vmatmul.mubr.bf16.gmra.mrb[0].mxu0 %v4218
        %v4545 = vpop.f32.mrb[0].mxu0
        %v4546 = vadd.f32 %v4347, %v4545
        %v4547 = vpop.f32.mrb[0].mxu0
        %v4548 = vpop.f32.mrb[0].mxu0
        %v4549 = vadd.f32 %v4350, %v4548
        %v4550 = vpop.f32.mrb[0].mxu0
        %4551 = vmatprep.mubr.bf16.mxu0 0
        %4552 = vmatmul.mubr.bf16.gmra.mrb[0].mxu0 %v4220
        %v4553 = vpop.f32.mrb[0].mxu0
        %v4554 = vadd.f32 %v4355, %v4553
        %v4555 = vpop.f32.mrb[0].mxu0
        %v4556 = vpop.f32.mrb[0].mxu0
        %v4557 = vadd.f32 %v4358, %v4556
        %v4558 = vpop.f32.mrb[0].mxu0
        %4559 = vmatprep.mubr.bf16.mxu0 0
        %4560 = vmatmul.mubr.bf16.gmra.mrb[0].mxu0 %v4222
        %v4561 = vpop.f32.mrb[0].mxu0
        %v4562 = vadd.f32 %v4363, %v4561
        %v4563 = vpop.f32.mrb[0].mxu0
        %v4564 = vpop.f32.mrb[0].mxu0
        %v4565 = vadd.f32 %v4366, %v4564
        %v4566 = vpop.f32.mrb[0].mxu0
        %4567 = vmatprep.mubr.bf16.mxu0 0
        %4568 = vmatmul.mubr.bf16.gmra.mrb[0].mxu0 %v4224
        %v4569 = vpop.f32.mrb[0].mxu0
        %v4570 = vadd.f32 %v4371, %v4569
        %v4571 = vpop.f32.mrb[0].mxu0
        %v4572 = vpop.f32.mrb[0].mxu0
        %v4573 = vadd.f32 %v4374, %v4572
        %v4574 = vpop.f32.mrb[0].mxu0
        %4575 = vmatprep.mubr.bf16.mxu0 0
        %4576 = vmatmul.mubr.bf16.gmra.mrb[0].mxu0 %v4226
        %v4577 = vpop.f32.mrb[0].mxu0
        %v4578 = vadd.f32 %v4379, %v4577
        %v4579 = vpop.f32.mrb[0].mxu0
        %v4580 = vpop.f32.mrb[0].mxu0
        %v4581 = vadd.f32 %v4382, %v4580
        %v4582 = vpop.f32.mrb[0].mxu0
        %4583 = vmatprep.mubr.bf16.mxu0 0
        %4584 = vmatmul.mubr.bf16.gmra.mrb[0].mxu0 %v4228
        %v4585 = vpop.f32.mrb[0].mxu0
        %v4586 = vadd.f32 %v4387, %v4585
        %v4587 = vpop.f32.mrb[0].mxu0
        %v4588 = vpop.f32.mrb[0].mxu0
        %v4589 = vadd.f32 %v4390, %v4588
        %v4590 = vpop.f32.mrb[0].mxu0
        %4591 = vdwg.mxu0
        %v4594 = vunpack.c.l.b16 %v3596
        %v4595 = vunpack.c.l.b16 %v3597
        %v4596 = vpack.c.b16 %v4595, %v4594
        %v4598 = vunpack.c.l.b16 %v3598
        %v4599 = vpack.c.b16 %v4598, %v4598
        %v4601 = vshrl.u32 %v4596, 16
        %v4603 = vshll.u32 %v4596, 16
        %v4605 = vrot.slane %v4603, 1
        %v4606 = vor.u32 %v4601, %v4605
        %v4608 = vshll.u32 %v4599, 16
        %v4610 = vrot.slane %v4608, 1
        %v4611 = vsel %vm1335, %v4606, %v4610
        %4612 = vrot.lane.b32.xlu0 %v4611, 32
        %v4613 = vpop.permute.xlu0 %4612
        %v4614 = vrot.slane %v4596, 1
        %v4615 = vrot.slane %v4599, 1
        %v4616 = vsel %vm1560, %v4614, %v4615
        %4617 = vrot.lane.b32.xlu0 %v4616, 64
        %v4618 = vpop.permute.xlu0 %4617
        %v4620 = vsel %vm4067, %v4596, %v4613
        %v4622 = vsel %vm1609, %v4620, %v4618
        %v4635 = vunpack.c.l.b16 %v3623
        %v4636 = vunpack.c.l.b16 %v3624
        %v4637 = vunpack.c.l.b16 %v3625
        %v4638 = vunpack.c.l.b16 %v3626
        %v4639 = vunpack.c.l.b16 %v3627
        %v4640 = vunpack.c.l.b16 %v3628
        %v4641 = vunpack.c.l.b16 %v3629
        %v4642 = vunpack.c.l.b16 %v3630
        %v4643 = vunpack.c.l.b16 %v3631
        %v4644 = vunpack.c.l.b16 %v3632
        %v4645 = vunpack.c.l.b16 %v3633
        %v4646 = vunpack.c.l.b16 %v3634
        %v4647 = vpack.c.b16 %v4636, %v4635
        %v4648 = vpack.c.b16 %v4638, %v4637
        %v4649 = vpack.c.b16 %v4640, %v4639
        %v4650 = vpack.c.b16 %v4642, %v4641
        %v4651 = vpack.c.b16 %v4644, %v4643
        %v4652 = vpack.c.b16 %v4646, %v4645
        %v4659 = vsel %vm4199, %v4622, 0
        %4661 = vmatprep.subr.bf16.mxu0 0
        %4662 = vmatpush1.bf16.msra.mxu0 %v4647
        %4663 = vmatprep.subr.bf16.mxu0 0
        %4664 = vmatpush1.bf16.msra.mxu0 %v4648
        %4665 = vmatprep.subr.bf16.mxu0 0
        %4666 = vmatpush1.bf16.msra.mxu0 %v4649
        %4667 = vmatprep.subr.bf16.mxu0 0
        %4668 = vmatpush1.bf16.msra.mxu0 %v4650
        %4669 = vmatprep.subr.bf16.mxu0 0
        %4670 = vmatpush1.bf16.msra.mxu0 %v4651
        %4671 = vmatprep.subr.bf16.mxu0 0
        %4672 = vmatpush1.bf16.msra.mxu0 %v4652
        %4673 = vmatprep.subr.bf16.mxu0 0
        %4674 = vmatpush1.bf16.msra.mxu0 0
        %4675 = vmatprep.subr.bf16.mxu0 0
        %4676 = vmatpush1.bf16.msra.mxu0 0
        %4677 = vmatprep.subr.bf16.mxu0 0
        %4678 = vmatpush1.bf16.msra.mxu0 0
        %4679 = vmatprep.subr.bf16.mxu0 0
        %4680 = vmatpush1.bf16.msra.mxu0 0
        %4681 = vmatprep.subr.bf16.mxu0 0
        %4682 = vmatpush1.bf16.msra.mxu0 0
        %4683 = vmatprep.subr.bf16.mxu0 0
        %4684 = vmatpush1.bf16.msra.mxu0 0
        %4685 = vmatprep.subr.bf16.mxu0 0
        %4686 = vmatpush1.bf16.msra.mxu0 0
        %4687 = vmatprep.subr.bf16.mxu0 0
        %4688 = vmatpush1.bf16.msra.mxu0 0
        %4689 = vmatprep.subr.bf16.mxu0 0
        %4690 = vmatpush1.bf16.msra.mxu0 0
        %4691 = vmatprep.subr.bf16.mxu0 0
        %4692 = vmatpush1.bf16.msra.mxu0 0
        %4693 = vmatprep.mubr.bf16.mxu0 0
        %4694 = vmatmul.mubr.bf16.gmra.mrb[0].mxu0 %v4202
        %v4695 = vpop.f32.mrb[0].mxu0
        %v4696 = vadd.f32 0.0, %v4695
        %v4697 = vpop.f32.mrb[0].mxu0
        %v4698 = vpop.f32.mrb[0].mxu0
        %v4699 = vadd.f32 0.0, %v4698
        %v4700 = vpop.f32.mrb[0].mxu0
        %4701 = vmatprep.mubr.bf16.mxu0 0
        %4702 = vmatmul.mubr.bf16.gmra.mrb[0].mxu0 %v4204
        %v4703 = vpop.f32.mrb[0].mxu0
        %v4704 = vadd.f32 0.0, %v4703
        %v4705 = vpop.f32.mrb[0].mxu0
        %v4706 = vpop.f32.mrb[0].mxu0
        %v4707 = vadd.f32 0.0, %v4706
        %v4708 = vpop.f32.mrb[0].mxu0
        %4709 = vmatprep.mubr.bf16.mxu0 0
        %4710 = vmatmul.mubr.bf16.gmra.mrb[0].mxu0 %v4206
        %v4711 = vpop.f32.mrb[0].mxu0
        %v4712 = vadd.f32 0.0, %v4711
        %v4713 = vpop.f32.mrb[0].mxu0
        %v4714 = vpop.f32.mrb[0].mxu0
        %v4715 = vadd.f32 0.0, %v4714
        %v4716 = vpop.f32.mrb[0].mxu0
        %4717 = vmatprep.mubr.bf16.mxu0 0
        %4718 = vmatmul.mubr.bf16.gmra.mrb[0].mxu0 %v4208
        %v4719 = vpop.f32.mrb[0].mxu0
        %v4720 = vadd.f32 0.0, %v4719
        %v4721 = vpop.f32.mrb[0].mxu0
        %v4722 = vpop.f32.mrb[0].mxu0
        %v4723 = vadd.f32 0.0, %v4722
        %v4724 = vpop.f32.mrb[0].mxu0
        %4725 = vmatprep.mubr.bf16.mxu0 0
        %4726 = vmatmul.mubr.bf16.gmra.mrb[0].mxu0 %v4210
        %v4727 = vpop.f32.mrb[0].mxu0
        %v4728 = vadd.f32 0.0, %v4727
        %v4729 = vpop.f32.mrb[0].mxu0
        %v4730 = vpop.f32.mrb[0].mxu0
        %v4731 = vadd.f32 0.0, %v4730
        %v4732 = vpop.f32.mrb[0].mxu0
        %4733 = vmatprep.mubr.bf16.mxu0 0
        %4734 = vmatmul.mubr.bf16.gmra.mrb[0].mxu0 %v4212
        %v4735 = vpop.f32.mrb[0].mxu0
        %v4736 = vadd.f32 0.0, %v4735
        %v4737 = vpop.f32.mrb[0].mxu0
        %v4738 = vpop.f32.mrb[0].mxu0
        %v4739 = vadd.f32 0.0, %v4738
        %v4740 = vpop.f32.mrb[0].mxu0
        %4741 = vmatprep.mubr.bf16.mxu0 0
        %4742 = vmatmul.mubr.bf16.gmra.mrb[0].mxu0 %v4214
        %v4743 = vpop.f32.mrb[0].mxu0
        %v4744 = vadd.f32 0.0, %v4743
        %v4745 = vpop.f32.mrb[0].mxu0
        %v4746 = vpop.f32.mrb[0].mxu0
        %v4747 = vadd.f32 0.0, %v4746
        %v4748 = vpop.f32.mrb[0].mxu0
        %4749 = vmatprep.mubr.bf16.mxu0 0
        %4750 = vmatmul.mubr.bf16.gmra.mrb[0].mxu0 %v4216
        %v4751 = vpop.f32.mrb[0].mxu0
        %v4752 = vadd.f32 0.0, %v4751
        %v4753 = vpop.f32.mrb[0].mxu0
        %v4754 = vpop.f32.mrb[0].mxu0
        %v4755 = vadd.f32 0.0, %v4754
        %v4756 = vpop.f32.mrb[0].mxu0
        %4757 = vmatprep.mubr.bf16.mxu0 0
        %4758 = vmatmul.mubr.bf16.gmra.mrb[0].mxu0 %v4218
        %v4759 = vpop.f32.mrb[0].mxu0
        %v4760 = vadd.f32 0.0, %v4759
        %v4761 = vpop.f32.mrb[0].mxu0
        %v4762 = vpop.f32.mrb[0].mxu0
        %v4763 = vadd.f32 0.0, %v4762
        %v4764 = vpop.f32.mrb[0].mxu0
        %4765 = vmatprep.mubr.bf16.mxu0 0
        %4766 = vmatmul.mubr.bf16.gmra.mrb[0].mxu0 %v4220
        %v4767 = vpop.f32.mrb[0].mxu0
        %v4768 = vadd.f32 0.0, %v4767
        %v4769 = vpop.f32.mrb[0].mxu0
        %v4770 = vpop.f32.mrb[0].mxu0
        %v4771 = vadd.f32 0.0, %v4770
        %v4772 = vpop.f32.mrb[0].mxu0
        %4773 = vmatprep.mubr.bf16.mxu0 0
        %4774 = vmatmul.mubr.bf16.gmra.mrb[0].mxu0 %v4222
        %v4775 = vpop.f32.mrb[0].mxu0
        %v4776 = vadd.f32 0.0, %v4775
        %v4777 = vpop.f32.mrb[0].mxu0
        %v4778 = vpop.f32.mrb[0].mxu0
        %v4779 = vadd.f32 0.0, %v4778
        %v4780 = vpop.f32.mrb[0].mxu0
        %4781 = vmatprep.mubr.bf16.mxu0 0
        %4782 = vmatmul.mubr.bf16.gmra.mrb[0].mxu0 %v4224
        %v4783 = vpop.f32.mrb[0].mxu0
        %v4784 = vadd.f32 0.0, %v4783
        %v4785 = vpop.f32.mrb[0].mxu0
        %v4786 = vpop.f32.mrb[0].mxu0
        %v4787 = vadd.f32 0.0, %v4786
        %v4788 = vpop.f32.mrb[0].mxu0
        %4789 = vmatprep.mubr.bf16.mxu0 0
        %4790 = vmatmul.mubr.bf16.gmra.mrb[0].mxu0 %v4226
        %v4791 = vpop.f32.mrb[0].mxu0
        %v4792 = vadd.f32 0.0, %v4791
        %v4793 = vpop.f32.mrb[0].mxu0
        %v4794 = vpop.f32.mrb[0].mxu0
        %v4795 = vadd.f32 0.0, %v4794
        %v4796 = vpop.f32.mrb[0].mxu0
        %4797 = vmatprep.mubr.bf16.mxu0 0
        %4798 = vmatmul.mubr.bf16.gmra.mrb[0].mxu0 %v4228
        %v4799 = vpop.f32.mrb[0].mxu0
        %v4800 = vadd.f32 0.0, %v4799
        %v4801 = vpop.f32.mrb[0].mxu0
        %v4802 = vpop.f32.mrb[0].mxu0
        %v4803 = vadd.f32 0.0, %v4802
        %v4804 = vpop.f32.mrb[0].mxu0
        %4805 = vmatprep.mubr.bf16.mxu0 0
        %4806 = vmatmul.mubr.bf16.gmra.mrb[0].mxu0 %v4230
        %v4807 = vpop.f32.mrb[0].mxu0
        %v4808 = vadd.f32 0.0, %v4807
        %v4809 = vpop.f32.mrb[0].mxu0
        %v4810 = vpop.f32.mrb[0].mxu0
        %v4811 = vadd.f32 0.0, %v4810
        %v4812 = vpop.f32.mrb[0].mxu0
        %4813 = vmatprep.mubr.bf16.mxu0 0
        %4814 = vmatmul.mubr.bf16.gmra.mrb[0].mxu0 %v4659
        %v4815 = vpop.f32.mrb[0].mxu0
        %v4816 = vadd.f32 0.0, %v4815
        %v4817 = vpop.f32.mrb[0].mxu0
        %v4818 = vpop.f32.mrb[0].mxu0
        %v4819 = vadd.f32 0.0, %v4818
        %v4820 = vpop.f32.mrb[0].mxu0
        %4821 = vdwg.mxu0
        %v4822 = vadd.f32 %v4466, %v4696
        %v4823 = vadd.f32 %v4469, %v4699
        %v4824 = vadd.f32 %v4474, %v4704
        %v4825 = vadd.f32 %v4477, %v4707
        %v4826 = vadd.f32 %v4482, %v4712
        %v4827 = vadd.f32 %v4485, %v4715
        %v4828 = vadd.f32 %v4490, %v4720
        %v4829 = vadd.f32 %v4493, %v4723
        %v4830 = vadd.f32 %v4498, %v4728
        %v4831 = vadd.f32 %v4501, %v4731
        %v4832 = vadd.f32 %v4506, %v4736
        %v4833 = vadd.f32 %v4509, %v4739
        %v4834 = vadd.f32 %v4514, %v4744
        %v4835 = vadd.f32 %v4517, %v4747
        %v4836 = vadd.f32 %v4522, %v4752
        %v4837 = vadd.f32 %v4525, %v4755
        %v4838 = vadd.f32 %v4530, %v4760
        %v4839 = vadd.f32 %v4533, %v4763
        %v4840 = vadd.f32 %v4538, %v4768
        %v4841 = vadd.f32 %v4541, %v4771
        %v4842 = vadd.f32 %v4546, %v4776
        %v4843 = vadd.f32 %v4549, %v4779
        %v4844 = vadd.f32 %v4554, %v4784
        %v4845 = vadd.f32 %v4557, %v4787
        %v4846 = vadd.f32 %v4562, %v4792
        %v4847 = vadd.f32 %v4565, %v4795
        %v4848 = vadd.f32 %v4570, %v4800
        %v4849 = vadd.f32 %v4573, %v4803
        %v4850 = vadd.f32 %v4578, %v4808
        %v4851 = vadd.f32 %v4581, %v4811
        %v4852 = vadd.f32 %v4586, %v4816
        %v4853 = vadd.f32 %v4589, %v4819
        %4886 = vrot.lane.b32.xlu0 %v4822, 64
        %v4887 = vpop.permute.xlu0 %4886
        %4888 = vrot.lane.b32.xlu0 %v4823, 64
        %v4889 = vpop.permute.xlu0 %4888
        %4890 = vrot.lane.b32.xlu0 %v4824, 64
        %v4891 = vpop.permute.xlu0 %4890
        %4892 = vrot.lane.b32.xlu0 %v4825, 64
        %v4893 = vpop.permute.xlu0 %4892
        %4894 = vrot.lane.b32.xlu0 %v4826, 64
        %v4895 = vpop.permute.xlu0 %4894
        %4896 = vrot.lane.b32.xlu0 %v4827, 64
        %v4897 = vpop.permute.xlu0 %4896
        %4898 = vrot.lane.b32.xlu0 %v4828, 64
        %v4899 = vpop.permute.xlu0 %4898
        %4900 = vrot.lane.b32.xlu0 %v4829, 64
        %v4901 = vpop.permute.xlu0 %4900
        %4902 = vrot.lane.b32.xlu0 %v4830, 64
        %v4903 = vpop.permute.xlu0 %4902
        %4904 = vrot.lane.b32.xlu0 %v4831, 64
        %v4905 = vpop.permute.xlu0 %4904
        %4906 = vrot.lane.b32.xlu0 %v4832, 64
        %v4907 = vpop.permute.xlu0 %4906
        %4908 = vrot.lane.b32.xlu0 %v4833, 64
        %v4909 = vpop.permute.xlu0 %4908
        %4910 = vrot.lane.b32.xlu0 %v4834, 64
        %v4911 = vpop.permute.xlu0 %4910
        %4912 = vrot.lane.b32.xlu0 %v4835, 64
        %v4913 = vpop.permute.xlu0 %4912
        %4914 = vrot.lane.b32.xlu0 %v4836, 64
        %v4915 = vpop.permute.xlu0 %4914
        %4916 = vrot.lane.b32.xlu0 %v4837, 64
        %v4917 = vpop.permute.xlu0 %4916
        %4918 = vrot.lane.b32.xlu0 %v4838, 64
        %v4919 = vpop.permute.xlu0 %4918
        %4920 = vrot.lane.b32.xlu0 %v4839, 64
        %v4921 = vpop.permute.xlu0 %4920
        %4922 = vrot.lane.b32.xlu0 %v4840, 64
        %v4923 = vpop.permute.xlu0 %4922
        %4924 = vrot.lane.b32.xlu0 %v4841, 64
        %v4925 = vpop.permute.xlu0 %4924
        %4926 = vrot.lane.b32.xlu0 %v4842, 64
        %v4927 = vpop.permute.xlu0 %4926
        %4928 = vrot.lane.b32.xlu0 %v4843, 64
        %v4929 = vpop.permute.xlu0 %4928
        %4930 = vrot.lane.b32.xlu0 %v4844, 64
        %v4931 = vpop.permute.xlu0 %4930
        %4932 = vrot.lane.b32.xlu0 %v4845, 64
        %v4933 = vpop.permute.xlu0 %4932
        %4934 = vrot.lane.b32.xlu0 %v4846, 64
        %v4935 = vpop.permute.xlu0 %4934
        %4936 = vrot.lane.b32.xlu0 %v4847, 64
        %v4937 = vpop.permute.xlu0 %4936
        %4938 = vrot.lane.b32.xlu0 %v4848, 64
        %v4939 = vpop.permute.xlu0 %4938
        %4940 = vrot.lane.b32.xlu0 %v4849, 64
        %v4941 = vpop.permute.xlu0 %4940
        %4942 = vrot.lane.b32.xlu0 %v4850, 64
        %v4943 = vpop.permute.xlu0 %4942
        %4944 = vrot.lane.b32.xlu0 %v4851, 64
        %v4945 = vpop.permute.xlu0 %4944
        %4946 = vrot.lane.b32.xlu0 %v4852, 64
        %v4947 = vpop.permute.xlu0 %4946
        %4948 = vrot.lane.b32.xlu0 %v4853, 64
        %v4949 = vpop.permute.xlu0 %4948
        %v4982 = vadd.f32 %v2537, %v4887
        %v4983 = vadd.f32 %v2538, %v4889
        %v4984 = vadd.f32 %v2539, %v4891
        %v4985 = vadd.f32 %v2540, %v4893
        %v4986 = vadd.f32 %v2541, %v4895
        %v4987 = vadd.f32 %v2542, %v4897
        %v4988 = vadd.f32 %v2543, %v4899
        %v4989 = vadd.f32 %v2544, %v4901
        %v4990 = vadd.f32 %v2545, %v4903
        %v4991 = vadd.f32 %v2546, %v4905
        %v4992 = vadd.f32 %v2547, %v4907
        %v4993 = vadd.f32 %v2548, %v4909
        %v4994 = vadd.f32 %v2549, %v4911
        %v4995 = vadd.f32 %v2550, %v4913
        %v4996 = vadd.f32 %v2551, %v4915
        %v4997 = vadd.f32 %v2552, %v4917
        %v4998 = vadd.f32 %v2553, %v4919
        %v4999 = vadd.f32 %v2554, %v4921
        %v5000 = vadd.f32 %v2555, %v4923
        %v5001 = vadd.f32 %v2556, %v4925
        %v5002 = vadd.f32 %v2557, %v4927
        %v5003 = vadd.f32 %v2558, %v4929
        %v5004 = vadd.f32 %v2559, %v4931
        %v5005 = vadd.f32 %v2560, %v4933
        %v5006 = vadd.f32 %v2561, %v4935
        %v5007 = vadd.f32 %v2562, %v4937
        %v5008 = vadd.f32 %v2563, %v4939
        %v5009 = vadd.f32 %v2564, %v4941
        %v5010 = vadd.f32 %v2565, %v4943
        %v5011 = vadd.f32 %v2566, %v4945
        %v5012 = vadd.f32 %v2567, %v4947
        %v5013 = vadd.f32 %v2568, %v4949
        %v5014 = vtanh.pop %v4982
        %v5015 = vtanh.pop %v4983
        %v5016 = vtanh.pop %v4984
        %v5017 = vtanh.pop %v4985
        %v5018 = vtanh.pop %v4986
        %v5019 = vtanh.pop %v4987
        %v5020 = vtanh.pop %v4988
        %v5021 = vtanh.pop %v4989
        %v5022 = vtanh.pop %v4990
        %v5023 = vtanh.pop %v4991
        %v5024 = vtanh.pop %v4992
        %v5025 = vtanh.pop %v4993
        %v5026 = vtanh.pop %v4994
        %v5027 = vtanh.pop %v4995
        %v5028 = vtanh.pop %v4996
        %v5029 = vtanh.pop %v4997
        %v5030 = vtanh.pop %v4998
        %v5031 = vtanh.pop %v4999
        %v5032 = vtanh.pop %v5000
        %v5033 = vtanh.pop %v5001
        %v5034 = vtanh.pop %v5002
        %v5035 = vtanh.pop %v5003
        %v5036 = vtanh.pop %v5004
        %v5037 = vtanh.pop %v5005
        %v5038 = vtanh.pop %v5006
        %v5039 = vtanh.pop %v5007
        %v5040 = vtanh.pop %v5008
        %v5041 = vtanh.pop %v5009
        %v5042 = vtanh.pop %v5010
        %v5043 = vtanh.pop %v5011
        %v5044 = vtanh.pop %v5012
        %v5045 = vtanh.pop %v5013
        %v5046 = vsub.f32 1.0, %v2698
        %v5047 = vsub.f32 1.0, %v2700
        %v5048 = vsub.f32 1.0, %v2702
        %v5049 = vsub.f32 1.0, %v2704
        %v5050 = vsub.f32 1.0, %v2706
        %v5051 = vsub.f32 1.0, %v2708
        %v5052 = vsub.f32 1.0, %v2710
        %v5053 = vsub.f32 1.0, %v2712
        %v5054 = vsub.f32 1.0, %v2714
        %v5055 = vsub.f32 1.0, %v2716
        %v5056 = vsub.f32 1.0, %v2718
        %v5057 = vsub.f32 1.0, %v2720
        %v5058 = vsub.f32 1.0, %v2722
        %v5059 = vsub.f32 1.0, %v2724
        %v5060 = vsub.f32 1.0, %v2726
        %v5061 = vsub.f32 1.0, %v2728
        %v5062 = vsub.f32 1.0, %v2730
        %v5063 = vsub.f32 1.0, %v2732
        %v5064 = vsub.f32 1.0, %v2734
        %v5065 = vsub.f32 1.0, %v2736
        %v5066 = vsub.f32 1.0, %v2738
        %v5067 = vsub.f32 1.0, %v2740
        %v5068 = vsub.f32 1.0, %v2742
        %v5069 = vsub.f32 1.0, %v2744
        %v5070 = vsub.f32 1.0, %v2746
        %v5071 = vsub.f32 1.0, %v2748
        %v5072 = vsub.f32 1.0, %v2750
        %v5073 = vsub.f32 1.0, %v2752
        %v5074 = vsub.f32 1.0, %v2754
        %v5075 = vsub.f32 1.0, %v2756
        %v5076 = vsub.f32 1.0, %v2758
        %v5077 = vsub.f32 1.0, %v2760
        %v5078 = vmul.f32 %v5046, %v984
        %v5079 = vmul.f32 %v5047, %v985
        %v5080 = vmul.f32 %v5048, %v986
        %v5081 = vmul.f32 %v5049, %v987
        %v5082 = vmul.f32 %v5050, %v988
        %v5083 = vmul.f32 %v5051, %v989
        %v5084 = vmul.f32 %v5052, %v990
        %v5085 = vmul.f32 %v5053, %v991
        %v5086 = vmul.f32 %v5054, %v992
        %v5087 = vmul.f32 %v5055, %v993
        %v5088 = vmul.f32 %v5056, %v994
        %v5089 = vmul.f32 %v5057, %v995
        %v5090 = vmul.f32 %v5058, %v996
        %v5091 = vmul.f32 %v5059, %v997
        %v5092 = vmul.f32 %v5060, %v998
        %v5093 = vmul.f32 %v5061, %v999
        %v5094 = vmul.f32 %v5062, %v1000
        %v5095 = vmul.f32 %v5063, %v1001
        %v5096 = vmul.f32 %v5064, %v1002
        %v5097 = vmul.f32 %v5065, %v1003
        %v5098 = vmul.f32 %v5066, %v1004
        %v5099 = vmul.f32 %v5067, %v1005
        %v5100 = vmul.f32 %v5068, %v1006
        %v5101 = vmul.f32 %v5069, %v1007
        %v5102 = vmul.f32 %v5070, %v1008
        %v5103 = vmul.f32 %v5071, %v1009
        %v5104 = vmul.f32 %v5072, %v1010
        %v5105 = vmul.f32 %v5073, %v1011
        %v5106 = vmul.f32 %v5074, %v1012
        %v5107 = vmul.f32 %v5075, %v1013
        %v5108 = vmul.f32 %v5076, %v1014
        %v5109 = vmul.f32 %v5077, %v1015
        %5142 = vrot.lane.b32.xlu0 %v5014, 64
        %v5143 = vpop.permute.xlu0 %5142
        %5144 = vrot.lane.b32.xlu0 %v5015, 64
        %v5145 = vpop.permute.xlu0 %5144
        %5146 = vrot.lane.b32.xlu0 %v5016, 64
        %v5147 = vpop.permute.xlu0 %5146
        %5148 = vrot.lane.b32.xlu0 %v5017, 64
        %v5149 = vpop.permute.xlu0 %5148
        %5150 = vrot.lane.b32.xlu0 %v5018, 64
        %v5151 = vpop.permute.xlu0 %5150
        %5152 = vrot.lane.b32.xlu0 %v5019, 64
        %v5153 = vpop.permute.xlu0 %5152
        %5154 = vrot.lane.b32.xlu0 %v5020, 64
        %v5155 = vpop.permute.xlu0 %5154
        %5156 = vrot.lane.b32.xlu0 %v5021, 64
        %v5157 = vpop.permute.xlu0 %5156
        %5158 = vrot.lane.b32.xlu0 %v5022, 64
        %v5159 = vpop.permute.xlu0 %5158
        %5160 = vrot.lane.b32.xlu0 %v5023, 64
        %v5161 = vpop.permute.xlu0 %5160
        %5162 = vrot.lane.b32.xlu0 %v5024, 64
        %v5163 = vpop.permute.xlu0 %5162
        %5164 = vrot.lane.b32.xlu0 %v5025, 64
        %v5165 = vpop.permute.xlu0 %5164
        %5166 = vrot.lane.b32.xlu0 %v5026, 64
        %v5167 = vpop.permute.xlu0 %5166
        %5168 = vrot.lane.b32.xlu0 %v5027, 64
        %v5169 = vpop.permute.xlu0 %5168
        %5170 = vrot.lane.b32.xlu0 %v5028, 64
        %v5171 = vpop.permute.xlu0 %5170
        %5172 = vrot.lane.b32.xlu0 %v5029, 64
        %v5173 = vpop.permute.xlu0 %5172
        %5174 = vrot.lane.b32.xlu0 %v5030, 64
        %v5175 = vpop.permute.xlu0 %5174
        %5176 = vrot.lane.b32.xlu0 %v5031, 64
        %v5177 = vpop.permute.xlu0 %5176
        %5178 = vrot.lane.b32.xlu0 %v5032, 64
        %v5179 = vpop.permute.xlu0 %5178
        %5180 = vrot.lane.b32.xlu0 %v5033, 64
        %v5181 = vpop.permute.xlu0 %5180
        %5182 = vrot.lane.b32.xlu0 %v5034, 64
        %v5183 = vpop.permute.xlu0 %5182
        %5184 = vrot.lane.b32.xlu0 %v5035, 64
        %v5185 = vpop.permute.xlu0 %5184
        %5186 = vrot.lane.b32.xlu0 %v5036, 64
        %v5187 = vpop.permute.xlu0 %5186
        %5188 = vrot.lane.b32.xlu0 %v5037, 64
        %v5189 = vpop.permute.xlu0 %5188
        %5190 = vrot.lane.b32.xlu0 %v5038, 64
        %v5191 = vpop.permute.xlu0 %5190
        %5192 = vrot.lane.b32.xlu0 %v5039, 64
        %v5193 = vpop.permute.xlu0 %5192
        %5194 = vrot.lane.b32.xlu0 %v5040, 64
        %v5195 = vpop.permute.xlu0 %5194
        %5196 = vrot.lane.b32.xlu0 %v5041, 64
        %v5197 = vpop.permute.xlu0 %5196
        %5198 = vrot.lane.b32.xlu0 %v5042, 64
        %v5199 = vpop.permute.xlu0 %5198
        %5200 = vrot.lane.b32.xlu0 %v5043, 64
        %v5201 = vpop.permute.xlu0 %5200
        %5202 = vrot.lane.b32.xlu0 %v5044, 64
        %v5203 = vpop.permute.xlu0 %5202
        %5204 = vrot.lane.b32.xlu0 %v5045, 64
        %v5205 = vpop.permute.xlu0 %5204
        %v5238 = vmul.f32 %v2698, %v5143
        %v5239 = vmul.f32 %v2700, %v5145
        %v5240 = vmul.f32 %v2702, %v5147
        %v5241 = vmul.f32 %v2704, %v5149
        %v5242 = vmul.f32 %v2706, %v5151
        %v5243 = vmul.f32 %v2708, %v5153
        %v5244 = vmul.f32 %v2710, %v5155
        %v5245 = vmul.f32 %v2712, %v5157
        %v5246 = vmul.f32 %v2714, %v5159
        %v5247 = vmul.f32 %v2716, %v5161
        %v5248 = vmul.f32 %v2718, %v5163
        %v5249 = vmul.f32 %v2720, %v5165
        %v5250 = vmul.f32 %v2722, %v5167
        %v5251 = vmul.f32 %v2724, %v5169
        %v5252 = vmul.f32 %v2726, %v5171
        %v5253 = vmul.f32 %v2728, %v5173
        %v5254 = vmul.f32 %v2730, %v5175
        %v5255 = vmul.f32 %v2732, %v5177
        %v5256 = vmul.f32 %v2734, %v5179
        %v5257 = vmul.f32 %v2736, %v5181
        %v5258 = vmul.f32 %v2738, %v5183
        %v5259 = vmul.f32 %v2740, %v5185
        %v5260 = vmul.f32 %v2742, %v5187
        %v5261 = vmul.f32 %v2744, %v5189
        %v5262 = vmul.f32 %v2746, %v5191
        %v5263 = vmul.f32 %v2748, %v5193
        %v5264 = vmul.f32 %v2750, %v5195
        %v5265 = vmul.f32 %v2752, %v5197
        %v5266 = vmul.f32 %v2754, %v5199
        %v5267 = vmul.f32 %v2756, %v5201
        %v5268 = vmul.f32 %v2758, %v5203
        %v5269 = vmul.f32 %v2760, %v5205
        %v5270 = vadd.f32 %v5078, %v5238
        %v5271 = vadd.f32 %v5079, %v5239
        %v5272 = vadd.f32 %v5080, %v5240
        %v5273 = vadd.f32 %v5081, %v5241
        %v5274 = vadd.f32 %v5082, %v5242
        %v5275 = vadd.f32 %v5083, %v5243
        %v5276 = vadd.f32 %v5084, %v5244
        %v5277 = vadd.f32 %v5085, %v5245
        %v5278 = vadd.f32 %v5086, %v5246
        %v5279 = vadd.f32 %v5087, %v5247
        %v5280 = vadd.f32 %v5088, %v5248
        %v5281 = vadd.f32 %v5089, %v5249
        %v5282 = vadd.f32 %v5090, %v5250
        %v5283 = vadd.f32 %v5091, %v5251
        %v5284 = vadd.f32 %v5092, %v5252
        %v5285 = vadd.f32 %v5093, %v5253
        %v5286 = vadd.f32 %v5094, %v5254
        %v5287 = vadd.f32 %v5095, %v5255
        %v5288 = vadd.f32 %v5096, %v5256
        %v5289 = vadd.f32 %v5097, %v5257
        %v5290 = vadd.f32 %v5098, %v5258
        %v5291 = vadd.f32 %v5099, %v5259
        %v5292 = vadd.f32 %v5100, %v5260
        %v5293 = vadd.f32 %v5101, %v5261
        %v5294 = vadd.f32 %v5102, %v5262
        %v5295 = vadd.f32 %v5103, %v5263
        %v5296 = vadd.f32 %v5104, %v5264
        %v5297 = vadd.f32 %v5105, %v5265
        %v5298 = vadd.f32 %v5106, %v5266
        %v5299 = vadd.f32 %v5107, %v5267
        %v5300 = vadd.f32 %v5108, %v5268
        %v5301 = vadd.f32 %v5109, %v5269
        %5302 = vst.msk [vmem:[%s296] sm:$0xff] %vm4067, %v5270
        %5303 = vst.msk [vmem:[%s296 + $0x8] sm:$0xff] %vm4067, %v5271
        %5304 = vst.msk [vmem:[%s296 + $0x10] sm:$0xff] %vm4067, %v5272
        %5305 = vst.msk [vmem:[%s296 + $0x18] sm:$0xff] %vm4067, %v5273
        %5306 = vst.msk [vmem:[%s296 + $0x20] sm:$0xff] %vm4067, %v5274
        %5307 = vst.msk [vmem:[%s296 + $0x28] sm:$0xff] %vm4067, %v5275
        %5308 = vst.msk [vmem:[%s296 + $0x30] sm:$0xff] %vm4067, %v5276
        %5309 = vst.msk [vmem:[%s296 + $0x38] sm:$0xff] %vm4067, %v5277
        %5310 = vst.msk [vmem:[%s296 + $0x40] sm:$0xff] %vm4067, %v5278
        %5311 = vst.msk [vmem:[%s296 + $0x48] sm:$0xff] %vm4067, %v5279
        %5312 = vst.msk [vmem:[%s296 + $0x50] sm:$0xff] %vm4067, %v5280
        %5313 = vst.msk [vmem:[%s296 + $0x58] sm:$0xff] %vm4067, %v5281
        %5314 = vst.msk [vmem:[%s296 + $0x60] sm:$0xff] %vm4067, %v5282
        %5315 = vst.msk [vmem:[%s296 + $0x68] sm:$0xff] %vm4067, %v5283
        %5316 = vst.msk [vmem:[%s296 + $0x70] sm:$0xff] %vm4067, %v5284
        %5317 = vst.msk [vmem:[%s296 + $0x78] sm:$0xff] %vm4067, %v5285
        %5318 = vst.msk [vmem:[%s296 + $0x80] sm:$0xff] %vm4067, %v5286
        %5319 = vst.msk [vmem:[%s296 + $0x88] sm:$0xff] %vm4067, %v5287
        %5320 = vst.msk [vmem:[%s296 + $0x90] sm:$0xff] %vm4067, %v5288
        %5321 = vst.msk [vmem:[%s296 + $0x98] sm:$0xff] %vm4067, %v5289
        %5322 = vst.msk [vmem:[%s296 + $0xa0] sm:$0xff] %vm4067, %v5290
        %5323 = vst.msk [vmem:[%s296 + $0xa8] sm:$0xff] %vm4067, %v5291
        %5324 = vst.msk [vmem:[%s296 + $0xb0] sm:$0xff] %vm4067, %v5292
        %5325 = vst.msk [vmem:[%s296 + $0xb8] sm:$0xff] %vm4067, %v5293
        %5326 = vst.msk [vmem:[%s296 + $0xc0] sm:$0xff] %vm4067, %v5294
        %5327 = vst.msk [vmem:[%s296 + $0xc8] sm:$0xff] %vm4067, %v5295
        %5328 = vst.msk [vmem:[%s296 + $0xd0] sm:$0xff] %vm4067, %v5296
        %5329 = vst.msk [vmem:[%s296 + $0xd8] sm:$0xff] %vm4067, %v5297
        %5330 = vst.msk [vmem:[%s296 + $0xe0] sm:$0xff] %vm4067, %v5298
        %5331 = vst.msk [vmem:[%s296 + $0xe8] sm:$0xff] %vm4067, %v5299
        %5332 = vst.msk [vmem:[%s296 + $0xf0] sm:$0xff] %vm4067, %v5300
        %5333 = vst.msk [vmem:[%s296 + $0xf8] sm:$0xff] %vm4067, %v5301
        %s5334 = sand.u32 %s148, 1
        %s5335 = scalar_lea.sflag [#allocation6], %s5334
        %s5336 = sand.u32 %s148, 1
        %s5337 = smul.addr %s5336, 256
        %s5338 = scalar_lea.vmem [#allocation10], %s5337
        // Predicated region
        $region53: #{tpu_custom_call.1} parent=39 // pred_check
          %p5339 = pneg %p158
        $region54: #{tpu_custom_call.1} parent=39 // pred_check_branch
          %5341 = sbr.rel (%p5339) target = $region56
        $region55: #{tpu_custom_call.1} parent=39 // pred_region
          %s5343 = ssub.s32 4096, 4096
          %5344 = vsyncadd %s5335, %s5343
          %s5345 = smul.addr %s25, 32
          %s5346 = smul.addr %s5345, 128
          %s5347 = scalar_lea.hbm %s5, %s5346
          %s5348 = sshll.u32 %s5338, 4
          %s5349 = int_to_ptr.vmem [resolvable:$true] %s5348
          %5354 = dma.vmem_to_hbm [thread:$0]  %s5349, 4096, %s5347, %s5335, 128, 128, 8
        $region56: #{tpu_custom_call.1} parent=39 // pred_fallthru
          _
      $region40: #{tpu_custom_call.1} parent=5 // pred_fallthru
        _
      %p5355 = scmp.le.s32.totalorder 2, %s20
      // Predicated region
      $region57: #{tpu_custom_call.1} parent=5 // pred_check
        %p5356 = pneg %p5355
      $region58: #{tpu_custom_call.1} parent=5 // pred_check_branch
        %5358 = sbr.rel (%p5356) target = $region60
      $region59: #{tpu_custom_call.1} parent=5 // pred_region
        %s5359 = ssub.s32 %s20, 2
        // Predicated region
        $region61: #{tpu_custom_call.1} parent=59 // pred_check
          %p5360 = pneg %p164
        $region62: #{tpu_custom_call.1} parent=59 // pred_check_branch
          %5362 = sbr.rel (%p5360) target = $region64
        $region63: #{tpu_custom_call.1} parent=59 // pred_region
          %s5363 = sand.u32 %s149, 1
          %s5364 = scalar_lea.sflag [#allocation6], %s5363
          %s5365 = sand.u32 %s149, 1
          %s5366 = smul.addr %s5365, 256
          %s5367 = scalar_lea.vmem [#allocation10], %s5366
          %5368 = dma.done %s5364, 4096
        $region64: #{tpu_custom_call.1} parent=59 // pred_fallthru
          _
      $region60: #{tpu_custom_call.1} parent=5 // pred_fallthru
        _
    $region6: #{tpu_custom_call.1} parent=1 // loop_footer
      %s24 = sadd.s32 1, %s20
    $region7: #{tpu_custom_call.1} parent=1 // loop_footer_branch
      %19 = sbr.rel target = $region3
    $region8: #{tpu_custom_call.1} parent=1 // loop_exit
      _
    %5369 = vsyncpa [#allocation5], 1
    %s5370 = scalar_lea.sflag [#allocation5], 1
    %5371 = vsyncpa %s5370, 1
    %5372 = vsyncpa [#allocation8], 1
    %s5373 = scalar_lea.sflag [#allocation8], 1
    %5374 = vsyncpa %s5373, 1
    %5375 = vsyncpa [#allocation6], 1
    %s5376 = scalar_lea.sflag [#allocation6], 1
    %5377 = vsyncpa %s5376, 1

</llo_original>
